<compile_context>
chip_gen: v7x
topology: tpu7x:2x2x1
jax: 0.10.0
libtpu: 0.0.40
codegen_flags: <defaults>
</compile_context>

<pallas_src>
import math

import jax
import jax.numpy as jnp
from jax.experimental import pallas as pl
from jax.experimental.pallas import tpu as pltpu

# ----------------------------- configuration -----------------------------
B = 2              # batch size
P = 4              # max_n_pars
S = 8              # seq_len (tokens per paragraph)
H = 32             # hidden_dim
NH = 4             # n_heads
HD = H // NH       # per-head dim
FF = 2048          # nn.TransformerEncoderLayer default dim_feedforward
NL = 10            # num_labels
V = 128            # synthetic vocab size for the BERT substitute
LANES = 128        # lane-dense width for packed weights / outputs
QOFF = 64          # lane offset of the fused fc_Q columns inside w_qk
GUMBEL_TAU = 1.0   # hard-argmax forward is invariant to tau > 0 (not used)
LN_EPS = 1e-5
BN_EPS = 1e-5


# ----------------------------- fused forward kernel -----------------------------
def fused_kernel(ids_ref, attn_ref, empty_ref, emb_ref, wpool_ref, bpool_ref,
                 wqkv_ref, bqkv_ref, hsel_ref, hexp_ref, wo_ref, bo_ref,
                 ln1g_ref, ln1b_ref, w1_hbm, b1_ref, w2_hbm, b2_ref,
                 ln2g_ref, ln2b_ref, gum_ref, wqk_ref, bqk_ref,
                 wout_ref, bout_ref,
                 probs_ref, mask_ref,
                 w1_vmem, w2_vmem, dma_sem):
    f32 = jnp.float32
    bf16 = jnp.bfloat16

    # ---- kick off the dominant HBM traffic (FF weights) so the DMA overlaps
    #      the VPU/XLU-heavy pooler + attention front half -------------------
    cp_w1 = pltpu.make_async_copy(w1_hbm, w1_vmem, dma_sem.at[0])
    cp_w2 = pltpu.make_async_copy(w2_hbm, w2_vmem, dma_sem.at[1])
    cp_w1.start()
    cp_w2.start()

    # -------- stage 1: synthetic BERT pooler (embedding via one-hot matmul) --
    ids = ids_ref[...]                                         # (B, P, S) int32
    attn = attn_ref[...]                                       # (B, P, S) f32
    iota_v = jax.lax.broadcasted_iota(jnp.int32, (B, P, S, V), 3)
    onehot = (ids[:, :, :, None] == iota_v).astype(f32)        # (B, P, S, V)
    # fold the attention-masked token pooling into the one-hot weights
    pooled_oh = jnp.sum(onehot * attn[:, :, :, None], axis=2)  # (B, P, V)
    pooled_oh = pooled_oh.reshape(B * P, V)                    # (B*P, V)
    denom = jnp.maximum(jnp.sum(pooled_oh, axis=-1, keepdims=True), 1.0)
    summed = jnp.dot(pooled_oh.astype(bf16), emb_ref[...],
                     preferred_element_type=f32)               # (B*P, H)
    mean = summed * pl.reciprocal(denom, approx=True)
    pooled = jnp.tanh(jnp.dot(mean.astype(bf16), wpool_ref[...],
                              preferred_element_type=f32) + bpool_ref[...])

    # empty-paragraph detection -> additive key-padding mask (src_key_padding_mask)
    eq = (ids == empty_ref[...][None, :, :]).astype(f32)       # (B, P, S)
    empty_bp = jnp.min(eq, axis=-1, keepdims=True)             # (B, P, 1) 1.0 iff empty
    neg = empty_bp[:, None, :, :] * f32(-1e9)                  # (B, 1, Pk, 1)

    # -------- stage 2: nn.TransformerEncoderLayer (post-norm, eval mode) -----
    x2 = pooled                                                # (B*P, H)
    # fused Q|K|V projection, one lane-dense matmul (weights packed host-side)
    y = jnp.dot(x2.astype(bf16), wqkv_ref[...],
                preferred_element_type=f32) + bqkv_ref[...]    # (B*P, 128)
    q = y[:, 0 * H:1 * H].reshape(B, P, H)
    k = y[:, 1 * H:2 * H].reshape(B, P, H)
    v = y[:, 2 * H:3 * H].reshape(B, P, H)
    scale = f32(1.0 / math.sqrt(HD))

    # all-head scores at once: broadcast product reduced per 8-lane head group
    # via a block-diagonal (H, NH) 0/1 matmul (no per-head lane slicing).
    prod = q[:, :, None, :] * k[:, None, :, :]                 # (B, Pq, Pk, H)
    s = jnp.dot(prod.reshape(B * P * P, H).astype(bf16), hsel_ref[...],
                preferred_element_type=f32).reshape(B, P, P, NH)
    s = s * scale + neg                                        # key-padding mask
    s = s - jnp.max(s, axis=2, keepdims=True)
    e = jnp.exp(s)
    p_attn = e * pl.reciprocal(jnp.sum(e, axis=2, keepdims=True), approx=True)
    # expand per-head weights back to per-feature lanes, contract over keys
    pe = jnp.dot(p_attn.reshape(B * P * P, NH).astype(bf16), hexp_ref[...],
                 preferred_element_type=f32).reshape(B, P, P, H)
    attn_out = jnp.sum(pe * v[:, None, :, :], axis=2).reshape(B * P, H)
    attn_out = jnp.dot(attn_out.astype(bf16), wo_ref[...],
                       preferred_element_type=f32) + bo_ref[...]

    def layer_norm(val, g_ref, b_ref):
        mu = jnp.mean(val, axis=-1, keepdims=True)
        var = jnp.mean((val - mu) ** 2, axis=-1, keepdims=True)
        return (val - mu) * jax.lax.rsqrt(var + LN_EPS) * g_ref[...] + b_ref[...]

    src = layer_norm(x2 + attn_out, ln1g_ref, ln1b_ref)        # (B*P, H)

    # feed-forward: bf16 weights/activations on the MXU, f32 accumulation.
    # Wait on the overlapped weight DMAs only now, right before first use.
    cp_w1.wait()
    h1 = jnp.maximum(jnp.dot(src.astype(bf16), w1_vmem[...],
                             preferred_element_type=f32) + b1_ref[...], 0.0)
    cp_w2.wait()
    h2 = jnp.dot(h1.astype(bf16), w2_vmem[...],
                 preferred_element_type=f32) + b2_ref[...]
    xt = layer_norm(src + h2, ln2g_ref, ln2b_ref)              # (B*P, H)

    # -------- stage 3: rationale head (fc_K|fc_Q fused, eval BNs pre-folded) --
    yqk = jnp.dot(xt.astype(bf16), wqk_ref[...],
                  preferred_element_type=f32) + bqk_ref[...]   # (B*P, 128)
    xk = jnp.maximum(yqk[:, 0:H], 0.0)                         # fc_K ∘ bn_K ∘ relu
    xq = jnp.maximum(yqk[:, QOFF:QOFF + 2], 0.0)               # fc_Q ∘ bn_Q ∘ relu
    z = xq + gum_ref[...]                                      # hard argmax is tau-invariant
    m = jnp.where(z[:, 0:1] >= z[:, 1:2], f32(1.0), f32(0.0))  # (B*P, 1) gumbel ch-0

    # logits via P lane-dense (B,H)@(H,128) matmuls against the per-paragraph
    # blocks of the (bn_out-folded, zero-padded) fc_out weight -> no lane
    # relayout / concat of the masked features.
    xm3 = (xk * m).reshape(B, P, H)                            # (B, P, H)
    acc = None
    for p_ in range(P):
        contrib = jnp.dot(xm3[:, p_, :].astype(bf16), wout_ref[p_],
                          preferred_element_type=f32)          # (B, 128)
        acc = contrib if acc is None else acc + contrib
    logits = acc + bout_ref[...]
    probs = jax.nn.sigmoid(logits)                             # (B, 128); lanes 0..NL-1 valid

    # -------- epilogue: two full lane-dense unmasked stores -------------------
    probs_ref[...] = probs
    mask_ref[...] = jnp.broadcast_to(m, (B * P, LANES))


# ----------------------------- parameters -----------------------------
def init_params(key):
    keys = iter(jax.random.split(key, 64))

    def nrm(shape, scale=0.05):
        return jax.random.normal(next(keys), shape, jnp.float32) * scale

    return dict(
        emb_table=nrm((V, H), 0.1),
        w_pool=nrm((H, H)), b_pool=nrm((1, H)),
        # transformer encoder layer
        wq=nrm((H, H)), bq=nrm((1, H)),
        wk=nrm((H, H)), bk=nrm((1, H)),
        wv=nrm((H, H)), bv=nrm((1, H)),
        wo=nrm((H, H)), bo=nrm((1, H)),
        ln1_g=1.0 + nrm((1, H)), ln1_b=nrm((1, H)),
        w1=nrm((H, FF)), b1=nrm((1, FF)),
        w2=nrm((FF, H), 0.02), b2=nrm((1, H)),
        ln2_g=1.0 + nrm((1, H)), ln2_b=nrm((1, H)),
        # fc_Q + bn_Q
        fcQ_w=nrm((H, 2)), fcQ_b=nrm((1, 2)),
        bnQ_g=1.0 + nrm((1, 2)), bnQ_b=nrm((1, 2)),
        bnQ_m=nrm((1, 2)), bnQ_v=1.0 + jnp.abs(nrm((1, 2))),
        # fc_K + bn_K
        fcK_w=nrm((H, H)), fcK_b=nrm((1, H)),
        bnK_g=1.0 + nrm((1, H)), bnK_b=nrm((1, H)),
        bnK_m=nrm((1, H)), bnK_v=1.0 + jnp.abs(nrm((1, H))),
        # bn_out + fc_out
        bnO_g=1.0 + nrm((1, P * H)), bnO_b=nrm((1, P * H)),
        bnO_m=nrm((1, P * H)), bnO_v=1.0 + jnp.abs(nrm((1, P * H))),
        fcO_w=nrm((P * H, NL)), fcO_b=nrm((1, NL)),
    )


def pack_params(p):
    """One-time host-side packing: fused weights, folded eval BNs, bf16 matmul weights."""
    bf16 = jnp.bfloat16

    def bn_fold(g, b, m, v):
        a = g * jax.lax.rsqrt(v + BN_EPS)
        return a, b - m * a

    bnq_a, bnq_c = bn_fold(p['bnQ_g'], p['bnQ_b'], p['bnQ_m'], p['bnQ_v'])
    bnk_a, bnk_c = bn_fold(p['bnK_g'], p['bnK_b'], p['bnK_m'], p['bnK_v'])
    bno_a, bno_c = bn_fold(p['bnO_g'], p['bnO_b'], p['bnO_m'], p['bnO_v'])

    # fused Q|K|V projection (lane-dense 128-wide output)
    w_qkv = jnp.zeros((H, 4 * H), jnp.float32)
    w_qkv = (w_qkv.at[:, 0:H].set(p['wq'])
                   .at[:, H:2 * H].set(p['wk'])
                   .at[:, 2 * H:3 * H].set(p['wv']))
    b_qkv = jnp.zeros((1, 4 * H), jnp.float32)
    b_qkv = (b_qkv.at[:, 0:H].set(p['bq'])
                   .at[:, H:2 * H].set(p['bk'])
                   .at[:, 2 * H:3 * H].set(p['bv']))

    # fc_K | fc_Q fused into one (H, 128) weight with eval-mode BN folded in
    w_qk = jnp.zeros((H, LANES), jnp.float32)
    w_qk = w_qk.at[:, 0:H].set(p['fcK_w'] * bnk_a)
    w_qk = w_qk.at[:, QOFF:QOFF + 2].set(p['fcQ_w'] * bnq_a)
    b_qk = jnp.zeros((1, LANES), jnp.float32)
    b_qk = b_qk.at[:, 0:H].set(p['fcK_b'] * bnk_a + bnk_c)
    b_qk = b_qk.at[:, QOFF:QOFF + 2].set(p['fcQ_b'] * bnq_a + bnq_c)

    # bn_out folded into fc_out; pad to 128 output lanes; per-paragraph blocks
    w_out = p['fcO_w'] * bno_a.reshape(P * H, 1)
    b_out = p['fcO_b'] + bno_c @ p['fcO_w']
    w_out_pad = jnp.zeros((P * H, LANES), jnp.float32).at[:, 0:NL].set(w_out)
    b_out_pad = jnp.zeros((1, LANES), jnp.float32).at[:, 0:NL].set(b_out)

    # block-diagonal head select (H, NH) and its expand transpose (NH, H)
    d_idx = jnp.arange(H) // HD
    head_sel = (d_idx[:, None] == jnp.arange(NH)[None, :]).astype(bf16)

    return dict(
        emb_table=p['emb_table'].astype(bf16),
        w_pool=p['w_pool'].astype(bf16), b_pool=p['b_pool'],
        w_qkv=w_qkv.astype(bf16), b_qkv=b_qkv,
        head_sel=head_sel, head_exp=head_sel.T,
        wo=p['wo'].astype(bf16), bo=p['bo'],
        ln1_g=p['ln1_g'], ln1_b=p['ln1_b'],
        w1=p['w1'].astype(bf16), b1=p['b1'],
        w2=p['w2'].astype(bf16), b2=p['b2'],
        ln2_g=p['ln2_g'], ln2_b=p['ln2_b'],
        w_qk=w_qk.astype(bf16), b_qk=b_qk,
        fcO_w=w_out_pad.reshape(P, H, LANES).astype(bf16),
        fcO_b=b_out_pad)


# ----------------------------- forward (thin wrapper) -----------------------------
def echr2_forward(packed, X_facts_ids, X_facts_token_types, X_facts_attn_masks,
                  gumbel_noise, mode="eval"):
    del X_facts_token_types, mode   # unused by the reference forward as well

    ids3 = X_facts_ids.reshape(B, P, S).astype(jnp.int32)
    attn3 = X_facts_attn_masks.reshape(B, P, S).astype(jnp.float32)
    gum = gumbel_noise.reshape(B * P, 2).astype(jnp.float32)
    empty_ids = jnp.concatenate(
        [jnp.array([101, 102], jnp.int32), jnp.zeros((S - 2,), jnp.int32)]).reshape(1, S)

    vmem = pl.BlockSpec(memory_space=pltpu.MemorySpace.VMEM)
    hbm = pl.BlockSpec(memory_space=pl.ANY)   # FF weights: manual overlapped DMA

    args = (ids3, attn3, empty_ids,
            packed['emb_table'], packed['w_pool'], packed['b_pool'],
            packed['w_qkv'], packed['b_qkv'],
            packed['head_sel'], packed['head_exp'],
            packed['wo'], packed['bo'],
            packed['ln1_g'], packed['ln1_b'],
            packed['w1'], packed['b1'], packed['w2'], packed['b2'],
            packed['ln2_g'], packed['ln2_b'],
            gum, packed['w_qk'], packed['b_qk'],
            packed['fcO_w'], packed['fcO_b'])
    in_specs = [vmem] * len(args)
    in_specs[14] = hbm   # w1
    in_specs[16] = hbm   # w2

    probs_slab, mask_slab = pl.pallas_call(
        fused_kernel,
        out_shape=(jax.ShapeDtypeStruct((B, LANES), jnp.float32),
                   jax.ShapeDtypeStruct((B * P, LANES), jnp.float32)),
        in_specs=in_specs,
        out_specs=(vmem, vmem),
        scratch_shapes=[pltpu.VMEM((H, FF), jnp.bfloat16),
                        pltpu.VMEM((FF, H), jnp.bfloat16),
                        pltpu.SemaphoreType.DMA((2,))],
    )(*args)

    probs = probs_slab[:, :NL]
    mask = mask_slab[:, 0].reshape(B, P)
    return probs, mask


# ----------------------------- main -----------------------------
if __name__ == "__main__":
    root = jax.random.PRNGKey(0)
    k_par, k_ids, k_gum = jax.random.split(root, 3)

    params = init_params(k_par)
    packed = pack_params(params)

    # inputs: (B, max_n_pars * seq_len)
    ids = jax.random.randint(k_ids, (B, P * S), 3, V, dtype=jnp.int32)
    ids_np = ids.reshape(B, P, S)
    empty_par = jnp.concatenate(
        [jnp.array([101, 102], jnp.int32), jnp.zeros((S - 2,), jnp.int32)])
    # make batch 0, paragraph 3 an "empty" paragraph to exercise the padding mask
    ids_np = ids_np.at[0, P - 1, :].set(empty_par)
    X_facts_ids = ids_np.reshape(B, P * S)
    X_facts_token_types = jnp.zeros((B, P * S), jnp.int32)
    X_facts_attn_masks = (X_facts_ids != 0).astype(jnp.int32)

    # deterministic gumbel noise for the hard gumbel-softmax
    u = jax.random.uniform(k_gum, (B, P, 2), minval=1e-6, maxval=1.0 - 1e-6)
    gumbel_noise = -jnp.log(-jnp.log(u))

    probs, mask = echr2_forward(packed, X_facts_ids, X_facts_token_types,
                                X_facts_attn_masks, gumbel_noise, mode="eval")
    jax.block_until_ready((probs, mask))

    assert probs.shape == (B, NL) and mask.shape == (B, P)
    assert bool(jnp.all(jnp.isfinite(probs))) and bool(jnp.all(jnp.isfinite(mask)))
    assert bool(jnp.all((probs >= 0.0) & (probs <= 1.0)))
    assert bool(jnp.all((mask == 0.0) | (mask == 1.0)))
    print("KERNEL_OK")
</pallas_src>

<mosaic_0001>
module attributes {stable_mosaic.version = 11 : i64} {
  func.func @fused_kernel(%arg0: memref<2x4x8xi32, #tpu.memory_space<vmem>>, %arg1: memref<2x4x8xf32, #tpu.memory_space<vmem>>, %arg2: memref<1x8xi32, #tpu.memory_space<vmem>>, %arg3: memref<128x32xbf16, #tpu.memory_space<vmem>>, %arg4: memref<32x32xbf16, #tpu.memory_space<vmem>>, %arg5: memref<1x32xf32, #tpu.memory_space<vmem>>, %arg6: memref<32x128xbf16, #tpu.memory_space<vmem>>, %arg7: memref<1x128xf32, #tpu.memory_space<vmem>>, %arg8: memref<32x4xbf16, #tpu.memory_space<vmem>>, %arg9: memref<4x32xbf16, #tpu.memory_space<vmem>>, %arg10: memref<32x32xbf16, #tpu.memory_space<vmem>>, %arg11: memref<1x32xf32, #tpu.memory_space<vmem>>, %arg12: memref<1x32xf32, #tpu.memory_space<vmem>>, %arg13: memref<1x32xf32, #tpu.memory_space<vmem>>, %arg14: memref<32x2048xbf16, #tpu.memory_space<any>>, %arg15: memref<1x2048xf32, #tpu.memory_space<vmem>>, %arg16: memref<2048x32xbf16, #tpu.memory_space<any>>, %arg17: memref<1x32xf32, #tpu.memory_space<vmem>>, %arg18: memref<1x32xf32, #tpu.memory_space<vmem>>, %arg19: memref<1x32xf32, #tpu.memory_space<vmem>>, %arg20: memref<8x2xf32, #tpu.memory_space<vmem>>, %arg21: memref<32x128xbf16, #tpu.memory_space<vmem>>, %arg22: memref<1x128xf32, #tpu.memory_space<vmem>>, %arg23: memref<4x32x128xbf16, #tpu.memory_space<vmem>>, %arg24: memref<1x128xf32, #tpu.memory_space<vmem>>, %arg25: memref<2x128xf32, #tpu.memory_space<vmem>>, %arg26: memref<8x128xf32, #tpu.memory_space<vmem>>, %arg27: memref<32x2048xbf16, #tpu.memory_space<vmem>>, %arg28: memref<2048x32xbf16, #tpu.memory_space<vmem>>, %arg29: memref<2x!tpu.dma_semaphore, #tpu.memory_space<semaphore_mem>>) attributes {dimension_semantics = [], scalar_prefetch = 0 : i64, scratch_operands = 3 : i64, tpu.core_type = #tpu.core_type<tc>} {
    %c0_i32 = arith.constant 0 : i32
    %0 = tpu.memref_slice %arg29[%c0_i32] : memref<2x!tpu.dma_semaphore, #tpu.memory_space<semaphore_mem>> -> memref<1x!tpu.dma_semaphore, #tpu.memory_space<semaphore_mem>>
    %1 = tpu.memref_squeeze %0 : memref<1x!tpu.dma_semaphore, #tpu.memory_space<semaphore_mem>> -> memref<!tpu.dma_semaphore, #tpu.memory_space<semaphore_mem>>
    tpu.enqueue_dma source(%arg14 : memref<32x2048xbf16, #tpu.memory_space<any>>) target(%arg27 : memref<32x2048xbf16, #tpu.memory_space<vmem>>) target_semaphore(%1 : memref<!tpu.dma_semaphore, #tpu.memory_space<semaphore_mem>>)
    %c1_i32 = arith.constant 1 : i32
    %2 = tpu.memref_slice %arg29[%c1_i32] : memref<2x!tpu.dma_semaphore, #tpu.memory_space<semaphore_mem>> -> memref<1x!tpu.dma_semaphore, #tpu.memory_space<semaphore_mem>>
    %3 = tpu.memref_squeeze %2 : memref<1x!tpu.dma_semaphore, #tpu.memory_space<semaphore_mem>> -> memref<!tpu.dma_semaphore, #tpu.memory_space<semaphore_mem>>
    tpu.enqueue_dma source(%arg16 : memref<2048x32xbf16, #tpu.memory_space<any>>) target(%arg28 : memref<2048x32xbf16, #tpu.memory_space<vmem>>) target_semaphore(%3 : memref<!tpu.dma_semaphore, #tpu.memory_space<semaphore_mem>>)
    %c0 = arith.constant 0 : index
    %c0_0 = arith.constant 0 : index
    %c0_1 = arith.constant 0 : index
    %4 = vector.load %arg0[%c0, %c0_0, %c0_1] : memref<2x4x8xi32, #tpu.memory_space<vmem>>, vector<2x4x8xi32>
    %c0_2 = arith.constant 0 : index
    %c0_3 = arith.constant 0 : index
    %c0_4 = arith.constant 0 : index
    %5 = vector.load %arg1[%c0_2, %c0_3, %c0_4] : memref<2x4x8xf32, #tpu.memory_space<vmem>>, vector<2x4x8xf32>
    %6 = tpu.iota {dimensions = array<i32: 3>} : vector<2x4x8x128xi32>
    %7 = vector.shape_cast %4 : vector<2x4x8xi32> to vector<2x4x8x1xi32>
    %8 = vector.broadcast %7 : vector<2x4x8x1xi32> to vector<2x4x8x128xi32>
    %9 = arith.cmpi eq, %8, %6 : vector<2x4x8x128xi32>
    %10 = arith.extui %9 : vector<2x4x8x128xi1> to vector<2x4x8x128xi32>
    %11 = arith.sitofp %10 : vector<2x4x8x128xi32> to vector<2x4x8x128xf32>
    %12 = vector.shape_cast %5 : vector<2x4x8xf32> to vector<2x4x8x1xf32>
    %13 = vector.broadcast %12 : vector<2x4x8x1xf32> to vector<2x4x8x128xf32>
    %14 = arith.mulf %11, %13 : vector<2x4x8x128xf32>
    %cst = arith.constant dense<0.000000e+00> : vector<2x4x128xf32>
    %15 = vector.multi_reduction <add>, %14, %cst [2] : vector<2x4x8x128xf32> to vector<2x4x128xf32>
    %16 = vector.shape_cast %15 : vector<2x4x128xf32> to vector<8x128xf32>
    %cst_5 = arith.constant dense<0.000000e+00> : vector<8xf32>
    %17 = vector.multi_reduction <add>, %16, %cst_5 [1] : vector<8x128xf32> to vector<8xf32>
    %18 = vector.shape_cast %17 : vector<8xf32> to vector<8x1xf32>
    %cst_6 = arith.constant 1.000000e+00 : f32
    %19 = vector.broadcast %cst_6 : f32 to vector<8x1xf32>
    %20 = arith.maximumf %18, %19 : vector<8x1xf32>
    %21 = arith.truncf %16 : vector<8x128xf32> to vector<8x128xbf16>
    %c0_7 = arith.constant 0 : index
    %c0_8 = arith.constant 0 : index
    %22 = vector.load %arg3[%c0_7, %c0_8] : memref<128x32xbf16, #tpu.memory_space<vmem>>, vector<128x32xbf16>
    %cst_9 = arith.constant dense<0.000000e+00> : vector<8x32xf32>
    %23 = tpu.matmul %21, %22, %cst_9 {dimension_numbers = #tpu.dot_dimension_numbers<[1], [0], [0], [1], [0, 0, 1, 1], [], []>} : vector<8x128xbf16>, vector<128x32xbf16>, vector<8x32xf32> -> vector<8x32xf32>
    %24 = tpu.reciprocal %20 {approx = true} : vector<8x1xf32> -> vector<8x1xf32>
    %25 = vector.broadcast %24 : vector<8x1xf32> to vector<8x32xf32>
    %26 = arith.mulf %23, %25 : vector<8x32xf32>
    %27 = arith.truncf %26 : vector<8x32xf32> to vector<8x32xbf16>
    %c0_10 = arith.constant 0 : index
    %c0_11 = arith.constant 0 : index
    %28 = vector.load %arg4[%c0_10, %c0_11] : memref<32x32xbf16, #tpu.memory_space<vmem>>, vector<32x32xbf16>
    %cst_12 = arith.constant dense<0.000000e+00> : vector<8x32xf32>
    %29 = tpu.matmul %27, %28, %cst_12 {dimension_numbers = #tpu.dot_dimension_numbers<[1], [0], [0], [1], [0, 0, 1, 1], [], []>} : vector<8x32xbf16>, vector<32x32xbf16>, vector<8x32xf32> -> vector<8x32xf32>
    %c0_13 = arith.constant 0 : index
    %c0_14 = arith.constant 0 : index
    %30 = vector.load %arg5[%c0_13, %c0_14] : memref<1x32xf32, #tpu.memory_space<vmem>>, vector<1x32xf32>
    %31 = vector.broadcast %30 : vector<1x32xf32> to vector<8x32xf32>
    %32 = arith.addf %29, %31 : vector<8x32xf32>
    %33 = math.tanh %32 : vector<8x32xf32>
    %c0_15 = arith.constant 0 : index
    %c0_16 = arith.constant 0 : index
    %34 = vector.load %arg2[%c0_15, %c0_16] : memref<1x8xi32, #tpu.memory_space<vmem>>, vector<1x8xi32>
    %35 = vector.shape_cast %34 : vector<1x8xi32> to vector<1x1x8xi32>
    %36 = vector.broadcast %35 : vector<1x1x8xi32> to vector<2x4x8xi32>
    %37 = arith.cmpi eq, %4, %36 : vector<2x4x8xi32>
    %38 = arith.extui %37 : vector<2x4x8xi1> to vector<2x4x8xi32>
    %39 = arith.sitofp %38 : vector<2x4x8xi32> to vector<2x4x8xf32>
    %cst_17 = arith.constant dense<0x7F800000> : vector<2x4xf32>
    %40 = vector.multi_reduction <minimumf>, %39, %cst_17 [2] : vector<2x4x8xf32> to vector<2x4xf32>
    %41 = vector.shape_cast %40 : vector<2x4xf32> to vector<2x4x1xf32>
    %42 = vector.shape_cast %41 : vector<2x4x1xf32> to vector<2x1x4x1xf32>
    %cst_18 = arith.constant -1.000000e+09 : f32
    %43 = vector.broadcast %cst_18 : f32 to vector<2x1x4x1xf32>
    %44 = arith.mulf %42, %43 : vector<2x1x4x1xf32>
    %45 = arith.truncf %33 : vector<8x32xf32> to vector<8x32xbf16>
    %c0_19 = arith.constant 0 : index
    %c0_20 = arith.constant 0 : index
    %46 = vector.load %arg6[%c0_19, %c0_20] : memref<32x128xbf16, #tpu.memory_space<vmem>>, vector<32x128xbf16>
    %cst_21 = arith.constant dense<0.000000e+00> : vector<8x128xf32>
    %47 = tpu.matmul %45, %46, %cst_21 {dimension_numbers = #tpu.dot_dimension_numbers<[1], [0], [0], [1], [0, 0, 1, 1], [], []>} : vector<8x32xbf16>, vector<32x128xbf16>, vector<8x128xf32> -> vector<8x128xf32>
    %c0_22 = arith.constant 0 : index
    %c0_23 = arith.constant 0 : index
    %48 = vector.load %arg7[%c0_22, %c0_23] : memref<1x128xf32, #tpu.memory_space<vmem>>, vector<1x128xf32>
    %49 = vector.broadcast %48 : vector<1x128xf32> to vector<8x128xf32>
    %50 = arith.addf %47, %49 : vector<8x128xf32>
    %51 = vector.extract_strided_slice %50 {offsets = [0, 0], sizes = [8, 32], strides = [1, 1]} : vector<8x128xf32> to vector<8x32xf32>
    %52 = vector.shape_cast %51 : vector<8x32xf32> to vector<2x4x32xf32>
    %53 = vector.extract_strided_slice %50 {offsets = [0, 32], sizes = [8, 32], strides = [1, 1]} : vector<8x128xf32> to vector<8x32xf32>
    %54 = vector.shape_cast %53 : vector<8x32xf32> to vector<2x4x32xf32>
    %55 = vector.extract_strided_slice %50 {offsets = [0, 64], sizes = [8, 32], strides = [1, 1]} : vector<8x128xf32> to vector<8x32xf32>
    %56 = vector.shape_cast %55 : vector<8x32xf32> to vector<2x4x32xf32>
    %57 = vector.shape_cast %52 : vector<2x4x32xf32> to vector<2x4x1x32xf32>
    %58 = vector.shape_cast %54 : vector<2x4x32xf32> to vector<2x1x4x32xf32>
    %59 = vector.broadcast %57 : vector<2x4x1x32xf32> to vector<2x4x4x32xf32>
    %60 = vector.broadcast %58 : vector<2x1x4x32xf32> to vector<2x4x4x32xf32>
    %61 = arith.mulf %59, %60 : vector<2x4x4x32xf32>
    %62 = vector.shape_cast %61 : vector<2x4x4x32xf32> to vector<32x32xf32>
    %63 = arith.truncf %62 : vector<32x32xf32> to vector<32x32xbf16>
    %c0_24 = arith.constant 0 : index
    %c0_25 = arith.constant 0 : index
    %64 = vector.load %arg8[%c0_24, %c0_25] : memref<32x4xbf16, #tpu.memory_space<vmem>>, vector<32x4xbf16>
    %cst_26 = arith.constant dense<0.000000e+00> : vector<32x4xf32>
    %65 = tpu.matmul %63, %64, %cst_26 {dimension_numbers = #tpu.dot_dimension_numbers<[1], [0], [0], [1], [0, 0, 1, 1], [], []>} : vector<32x32xbf16>, vector<32x4xbf16>, vector<32x4xf32> -> vector<32x4xf32>
    %66 = vector.shape_cast %65 : vector<32x4xf32> to vector<2x4x4x4xf32>
    %cst_27 = arith.constant 0.353553385 : f32
    %67 = vector.broadcast %cst_27 : f32 to vector<2x4x4x4xf32>
    %68 = arith.mulf %66, %67 : vector<2x4x4x4xf32>
    %69 = vector.broadcast %44 : vector<2x1x4x1xf32> to vector<2x4x4x4xf32>
    %70 = arith.addf %68, %69 : vector<2x4x4x4xf32>
    %cst_28 = arith.constant dense<0xFF800000> : vector<2x4x4xf32>
    %71 = vector.multi_reduction <maximumf>, %70, %cst_28 [2] : vector<2x4x4x4xf32> to vector<2x4x4xf32>
    %72 = vector.shape_cast %71 : vector<2x4x4xf32> to vector<2x4x1x4xf32>
    %73 = vector.broadcast %72 : vector<2x4x1x4xf32> to vector<2x4x4x4xf32>
    %74 = arith.subf %70, %73 : vector<2x4x4x4xf32>
    %75 = math.exp %74 : vector<2x4x4x4xf32>
    %cst_29 = arith.constant dense<0.000000e+00> : vector<2x4x4xf32>
    %76 = vector.multi_reduction <add>, %75, %cst_29 [2] : vector<2x4x4x4xf32> to vector<2x4x4xf32>
    %77 = vector.shape_cast %76 : vector<2x4x4xf32> to vector<2x4x1x4xf32>
    %78 = tpu.reciprocal %77 {approx = true} : vector<2x4x1x4xf32> -> vector<2x4x1x4xf32>
    %79 = vector.broadcast %78 : vector<2x4x1x4xf32> to vector<2x4x4x4xf32>
    %80 = arith.mulf %75, %79 : vector<2x4x4x4xf32>
    %81 = vector.shape_cast %80 : vector<2x4x4x4xf32> to vector<32x4xf32>
    %82 = arith.truncf %81 : vector<32x4xf32> to vector<32x4xbf16>
    %c0_30 = arith.constant 0 : index
    %c0_31 = arith.constant 0 : index
    %83 = vector.load %arg9[%c0_30, %c0_31] : memref<4x32xbf16, #tpu.memory_space<vmem>>, vector<4x32xbf16>
    %cst_32 = arith.constant dense<0.000000e+00> : vector<32x32xf32>
    %84 = tpu.matmul %82, %83, %cst_32 {dimension_numbers = #tpu.dot_dimension_numbers<[1], [0], [0], [1], [0, 0, 1, 1], [], []>} : vector<32x4xbf16>, vector<4x32xbf16>, vector<32x32xf32> -> vector<32x32xf32>
    %85 = vector.shape_cast %84 : vector<32x32xf32> to vector<2x4x4x32xf32>
    %86 = vector.shape_cast %56 : vector<2x4x32xf32> to vector<2x1x4x32xf32>
    %87 = vector.broadcast %86 : vector<2x1x4x32xf32> to vector<2x4x4x32xf32>
    %88 = arith.mulf %85, %87 : vector<2x4x4x32xf32>
    %cst_33 = arith.constant dense<0.000000e+00> : vector<2x4x32xf32>
    %89 = vector.multi_reduction <add>, %88, %cst_33 [2] : vector<2x4x4x32xf32> to vector<2x4x32xf32>
    %90 = vector.shape_cast %89 : vector<2x4x32xf32> to vector<8x32xf32>
    %91 = arith.truncf %90 : vector<8x32xf32> to vector<8x32xbf16>
    %c0_34 = arith.constant 0 : index
    %c0_35 = arith.constant 0 : index
    %92 = vector.load %arg10[%c0_34, %c0_35] : memref<32x32xbf16, #tpu.memory_space<vmem>>, vector<32x32xbf16>
    %cst_36 = arith.constant dense<0.000000e+00> : vector<8x32xf32>
    %93 = tpu.matmul %91, %92, %cst_36 {dimension_numbers = #tpu.dot_dimension_numbers<[1], [0], [0], [1], [0, 0, 1, 1], [], []>} : vector<8x32xbf16>, vector<32x32xbf16>, vector<8x32xf32> -> vector<8x32xf32>
    %c0_37 = arith.constant 0 : index
    %c0_38 = arith.constant 0 : index
    %94 = vector.load %arg11[%c0_37, %c0_38] : memref<1x32xf32, #tpu.memory_space<vmem>>, vector<1x32xf32>
    %95 = vector.broadcast %94 : vector<1x32xf32> to vector<8x32xf32>
    %96 = arith.addf %93, %95 : vector<8x32xf32>
    %97 = arith.addf %33, %96 : vector<8x32xf32>
    %cst_39 = arith.constant dense<0.000000e+00> : vector<8xf32>
    %98 = vector.multi_reduction <add>, %97, %cst_39 [1] : vector<8x32xf32> to vector<8xf32>
    %99 = vector.shape_cast %98 : vector<8xf32> to vector<8x1xf32>
    %cst_40 = arith.constant 3.200000e+01 : f32
    %100 = vector.broadcast %cst_40 : f32 to vector<8x1xf32>
    %101 = arith.divf %99, %100 : vector<8x1xf32>
    %102 = vector.broadcast %101 : vector<8x1xf32> to vector<8x32xf32>
    %103 = arith.subf %97, %102 : vector<8x32xf32>
    %104 = arith.mulf %103, %103 : vector<8x32xf32>
    %cst_41 = arith.constant dense<0.000000e+00> : vector<8xf32>
    %105 = vector.multi_reduction <add>, %104, %cst_41 [1] : vector<8x32xf32> to vector<8xf32>
    %106 = vector.shape_cast %105 : vector<8xf32> to vector<8x1xf32>
    %cst_42 = arith.constant 3.200000e+01 : f32
    %107 = vector.broadcast %cst_42 : f32 to vector<8x1xf32>
    %108 = arith.divf %106, %107 : vector<8x1xf32>
    %109 = vector.broadcast %101 : vector<8x1xf32> to vector<8x32xf32>
    %110 = arith.subf %97, %109 : vector<8x32xf32>
    %cst_43 = arith.constant 9.99999974E-6 : f32
    %111 = vector.broadcast %cst_43 : f32 to vector<8x1xf32>
    %112 = arith.addf %108, %111 : vector<8x1xf32>
    %113 = math.rsqrt %112 : vector<8x1xf32>
    %114 = vector.broadcast %113 : vector<8x1xf32> to vector<8x32xf32>
    %115 = arith.mulf %110, %114 : vector<8x32xf32>
    %c0_44 = arith.constant 0 : index
    %c0_45 = arith.constant 0 : index
    %116 = vector.load %arg12[%c0_44, %c0_45] : memref<1x32xf32, #tpu.memory_space<vmem>>, vector<1x32xf32>
    %117 = vector.broadcast %116 : vector<1x32xf32> to vector<8x32xf32>
    %118 = arith.mulf %115, %117 : vector<8x32xf32>
    %c0_46 = arith.constant 0 : index
    %c0_47 = arith.constant 0 : index
    %119 = vector.load %arg13[%c0_46, %c0_47] : memref<1x32xf32, #tpu.memory_space<vmem>>, vector<1x32xf32>
    %120 = vector.broadcast %119 : vector<1x32xf32> to vector<8x32xf32>
    %121 = arith.addf %118, %120 : vector<8x32xf32>
    %c0_i32_48 = arith.constant 0 : i32
    %122 = tpu.memref_slice %arg29[%c0_i32_48] : memref<2x!tpu.dma_semaphore, #tpu.memory_space<semaphore_mem>> -> memref<1x!tpu.dma_semaphore, #tpu.memory_space<semaphore_mem>>
    %123 = tpu.memref_squeeze %122 : memref<1x!tpu.dma_semaphore, #tpu.memory_space<semaphore_mem>> -> memref<!tpu.dma_semaphore, #tpu.memory_space<semaphore_mem>>
    tpu.wait_dma2 semaphore(%123 : memref<!tpu.dma_semaphore, #tpu.memory_space<semaphore_mem>>) src(%arg14 : memref<32x2048xbf16, #tpu.memory_space<any>>) dst(%arg27 : memref<32x2048xbf16, #tpu.memory_space<vmem>>)
    %124 = arith.truncf %121 : vector<8x32xf32> to vector<8x32xbf16>
    %c0_49 = arith.constant 0 : index
    %c0_50 = arith.constant 0 : index
    %125 = vector.load %arg27[%c0_49, %c0_50] : memref<32x2048xbf16, #tpu.memory_space<vmem>>, vector<32x2048xbf16>
    %cst_51 = arith.constant dense<0.000000e+00> : vector<8x2048xf32>
    %126 = tpu.matmul %124, %125, %cst_51 {dimension_numbers = #tpu.dot_dimension_numbers<[1], [0], [0], [1], [0, 0, 1, 1], [], []>} : vector<8x32xbf16>, vector<32x2048xbf16>, vector<8x2048xf32> -> vector<8x2048xf32>
    %c0_52 = arith.constant 0 : index
    %c0_53 = arith.constant 0 : index
    %127 = vector.load %arg15[%c0_52, %c0_53] : memref<1x2048xf32, #tpu.memory_space<vmem>>, vector<1x2048xf32>
    %128 = vector.broadcast %127 : vector<1x2048xf32> to vector<8x2048xf32>
    %129 = arith.addf %126, %128 : vector<8x2048xf32>
    %cst_54 = arith.constant 0.000000e+00 : f32
    %130 = vector.broadcast %cst_54 : f32 to vector<8x2048xf32>
    %131 = arith.maximumf %129, %130 : vector<8x2048xf32>
    %c1_i32_55 = arith.constant 1 : i32
    %132 = tpu.memref_slice %arg29[%c1_i32_55] : memref<2x!tpu.dma_semaphore, #tpu.memory_space<semaphore_mem>> -> memref<1x!tpu.dma_semaphore, #tpu.memory_space<semaphore_mem>>
    %133 = tpu.memref_squeeze %132 : memref<1x!tpu.dma_semaphore, #tpu.memory_space<semaphore_mem>> -> memref<!tpu.dma_semaphore, #tpu.memory_space<semaphore_mem>>
    tpu.wait_dma2 semaphore(%133 : memref<!tpu.dma_semaphore, #tpu.memory_space<semaphore_mem>>) src(%arg16 : memref<2048x32xbf16, #tpu.memory_space<any>>) dst(%arg28 : memref<2048x32xbf16, #tpu.memory_space<vmem>>)
    %134 = arith.truncf %131 : vector<8x2048xf32> to vector<8x2048xbf16>
    %c0_56 = arith.constant 0 : index
    %c0_57 = arith.constant 0 : index
    %135 = vector.load %arg28[%c0_56, %c0_57] : memref<2048x32xbf16, #tpu.memory_space<vmem>>, vector<2048x32xbf16>
    %cst_58 = arith.constant dense<0.000000e+00> : vector<8x32xf32>
    %136 = tpu.matmul %134, %135, %cst_58 {dimension_numbers = #tpu.dot_dimension_numbers<[1], [0], [0], [1], [0, 0, 1, 1], [], []>} : vector<8x2048xbf16>, vector<2048x32xbf16>, vector<8x32xf32> -> vector<8x32xf32>
    %c0_59 = arith.constant 0 : index
    %c0_60 = arith.constant 0 : index
    %137 = vector.load %arg17[%c0_59, %c0_60] : memref<1x32xf32, #tpu.memory_space<vmem>>, vector<1x32xf32>
    %138 = vector.broadcast %137 : vector<1x32xf32> to vector<8x32xf32>
    %139 = arith.addf %136, %138 : vector<8x32xf32>
    %140 = arith.addf %121, %139 : vector<8x32xf32>
    %cst_61 = arith.constant dense<0.000000e+00> : vector<8xf32>
    %141 = vector.multi_reduction <add>, %140, %cst_61 [1] : vector<8x32xf32> to vector<8xf32>
    %142 = vector.shape_cast %141 : vector<8xf32> to vector<8x1xf32>
    %cst_62 = arith.constant 3.200000e+01 : f32
    %143 = vector.broadcast %cst_62 : f32 to vector<8x1xf32>
    %144 = arith.divf %142, %143 : vector<8x1xf32>
    %145 = vector.broadcast %144 : vector<8x1xf32> to vector<8x32xf32>
    %146 = arith.subf %140, %145 : vector<8x32xf32>
    %147 = arith.mulf %146, %146 : vector<8x32xf32>
    %cst_63 = arith.constant dense<0.000000e+00> : vector<8xf32>
    %148 = vector.multi_reduction <add>, %147, %cst_63 [1] : vector<8x32xf32> to vector<8xf32>
    %149 = vector.shape_cast %148 : vector<8xf32> to vector<8x1xf32>
    %cst_64 = arith.constant 3.200000e+01 : f32
    %150 = vector.broadcast %cst_64 : f32 to vector<8x1xf32>
    %151 = arith.divf %149, %150 : vector<8x1xf32>
    %152 = vector.broadcast %144 : vector<8x1xf32> to vector<8x32xf32>
    %153 = arith.subf %140, %152 : vector<8x32xf32>
    %cst_65 = arith.constant 9.99999974E-6 : f32
    %154 = vector.broadcast %cst_65 : f32 to vector<8x1xf32>
    %155 = arith.addf %151, %154 : vector<8x1xf32>
    %156 = math.rsqrt %155 : vector<8x1xf32>
    %157 = vector.broadcast %156 : vector<8x1xf32> to vector<8x32xf32>
    %158 = arith.mulf %153, %157 : vector<8x32xf32>
    %c0_66 = arith.constant 0 : index
    %c0_67 = arith.constant 0 : index
    %159 = vector.load %arg18[%c0_66, %c0_67] : memref<1x32xf32, #tpu.memory_space<vmem>>, vector<1x32xf32>
    %160 = vector.broadcast %159 : vector<1x32xf32> to vector<8x32xf32>
    %161 = arith.mulf %158, %160 : vector<8x32xf32>
    %c0_68 = arith.constant 0 : index
    %c0_69 = arith.constant 0 : index
    %162 = vector.load %arg19[%c0_68, %c0_69] : memref<1x32xf32, #tpu.memory_space<vmem>>, vector<1x32xf32>
    %163 = vector.broadcast %162 : vector<1x32xf32> to vector<8x32xf32>
    %164 = arith.addf %161, %163 : vector<8x32xf32>
    %165 = arith.truncf %164 : vector<8x32xf32> to vector<8x32xbf16>
    %c0_70 = arith.constant 0 : index
    %c0_71 = arith.constant 0 : index
    %166 = vector.load %arg21[%c0_70, %c0_71] : memref<32x128xbf16, #tpu.memory_space<vmem>>, vector<32x128xbf16>
    %cst_72 = arith.constant dense<0.000000e+00> : vector<8x128xf32>
    %167 = tpu.matmul %165, %166, %cst_72 {dimension_numbers = #tpu.dot_dimension_numbers<[1], [0], [0], [1], [0, 0, 1, 1], [], []>} : vector<8x32xbf16>, vector<32x128xbf16>, vector<8x128xf32> -> vector<8x128xf32>
    %c0_73 = arith.constant 0 : index
    %c0_74 = arith.constant 0 : index
    %168 = vector.load %arg22[%c0_73, %c0_74] : memref<1x128xf32, #tpu.memory_space<vmem>>, vector<1x128xf32>
    %169 = vector.broadcast %168 : vector<1x128xf32> to vector<8x128xf32>
    %170 = arith.addf %167, %169 : vector<8x128xf32>
    %171 = vector.extract_strided_slice %170 {offsets = [0, 0], sizes = [8, 32], strides = [1, 1]} : vector<8x128xf32> to vector<8x32xf32>
    %cst_75 = arith.constant 0.000000e+00 : f32
    %172 = vector.broadcast %cst_75 : f32 to vector<8x32xf32>
    %173 = arith.maximumf %171, %172 : vector<8x32xf32>
    %174 = vector.extract_strided_slice %170 {offsets = [0, 64], sizes = [8, 2], strides = [1, 1]} : vector<8x128xf32> to vector<8x2xf32>
    %cst_76 = arith.constant 0.000000e+00 : f32
    %175 = vector.broadcast %cst_76 : f32 to vector<8x2xf32>
    %176 = arith.maximumf %174, %175 : vector<8x2xf32>
    %c0_77 = arith.constant 0 : index
    %c0_78 = arith.constant 0 : index
    %177 = vector.load %arg20[%c0_77, %c0_78] : memref<8x2xf32, #tpu.memory_space<vmem>>, vector<8x2xf32>
    %178 = arith.addf %176, %177 : vector<8x2xf32>
    %179 = vector.extract_strided_slice %178 {offsets = [0, 0], sizes = [8, 1], strides = [1, 1]} : vector<8x2xf32> to vector<8x1xf32>
    %180 = vector.extract_strided_slice %178 {offsets = [0, 1], sizes = [8, 1], strides = [1, 1]} : vector<8x2xf32> to vector<8x1xf32>
    %181 = arith.cmpf oge, %179, %180 : vector<8x1xf32>
    %cst_79 = arith.constant 1.000000e+00 : f32
    %cst_80 = arith.constant 0.000000e+00 : f32
    %182 = vector.broadcast %cst_79 : f32 to vector<8x1xf32>
    %183 = vector.broadcast %cst_80 : f32 to vector<8x1xf32>
    %184 = arith.select %181, %182, %183 : vector<8x1xi1>, vector<8x1xf32>
    %185 = vector.broadcast %184 : vector<8x1xf32> to vector<8x32xf32>
    %186 = arith.mulf %173, %185 : vector<8x32xf32>
    %187 = vector.shape_cast %186 : vector<8x32xf32> to vector<2x4x32xf32>
    %188 = vector.extract_strided_slice %187 {offsets = [0, 0, 0], sizes = [2, 1, 32], strides = [1, 1, 1]} : vector<2x4x32xf32> to vector<2x1x32xf32>
    %189 = vector.shape_cast %188 : vector<2x1x32xf32> to vector<2x32xf32>
    %190 = arith.truncf %189 : vector<2x32xf32> to vector<2x32xbf16>
    %c0_81 = arith.constant 0 : index
    %c0_82 = arith.constant 0 : index
    %c0_83 = arith.constant 0 : index
    %191 = vector.load %arg23[%c0_81, %c0_82, %c0_83] : memref<4x32x128xbf16, #tpu.memory_space<vmem>>, vector<1x32x128xbf16>
    %192 = vector.shape_cast %191 : vector<1x32x128xbf16> to vector<32x128xbf16>
    %cst_84 = arith.constant dense<0.000000e+00> : vector<2x128xf32>
    %193 = tpu.matmul %190, %192, %cst_84 {dimension_numbers = #tpu.dot_dimension_numbers<[1], [0], [0], [1], [0, 0, 1, 1], [], []>} : vector<2x32xbf16>, vector<32x128xbf16>, vector<2x128xf32> -> vector<2x128xf32>
    %194 = vector.extract_strided_slice %187 {offsets = [0, 1, 0], sizes = [2, 1, 32], strides = [1, 1, 1]} : vector<2x4x32xf32> to vector<2x1x32xf32>
    %195 = vector.shape_cast %194 : vector<2x1x32xf32> to vector<2x32xf32>
    %196 = arith.truncf %195 : vector<2x32xf32> to vector<2x32xbf16>
    %c1 = arith.constant 1 : index
    %c0_85 = arith.constant 0 : index
    %c0_86 = arith.constant 0 : index
    %197 = vector.load %arg23[%c1, %c0_85, %c0_86] : memref<4x32x128xbf16, #tpu.memory_space<vmem>>, vector<1x32x128xbf16>
    %198 = vector.shape_cast %197 : vector<1x32x128xbf16> to vector<32x128xbf16>
    %cst_87 = arith.constant dense<0.000000e+00> : vector<2x128xf32>
    %199 = tpu.matmul %196, %198, %cst_87 {dimension_numbers = #tpu.dot_dimension_numbers<[1], [0], [0], [1], [0, 0, 1, 1], [], []>} : vector<2x32xbf16>, vector<32x128xbf16>, vector<2x128xf32> -> vector<2x128xf32>
    %200 = arith.addf %193, %199 : vector<2x128xf32>
    %201 = vector.extract_strided_slice %187 {offsets = [0, 2, 0], sizes = [2, 1, 32], strides = [1, 1, 1]} : vector<2x4x32xf32> to vector<2x1x32xf32>
    %202 = vector.shape_cast %201 : vector<2x1x32xf32> to vector<2x32xf32>
    %203 = arith.truncf %202 : vector<2x32xf32> to vector<2x32xbf16>
    %c2 = arith.constant 2 : index
    %c0_88 = arith.constant 0 : index
    %c0_89 = arith.constant 0 : index
    %204 = vector.load %arg23[%c2, %c0_88, %c0_89] : memref<4x32x128xbf16, #tpu.memory_space<vmem>>, vector<1x32x128xbf16>
    %205 = vector.shape_cast %204 : vector<1x32x128xbf16> to vector<32x128xbf16>
    %cst_90 = arith.constant dense<0.000000e+00> : vector<2x128xf32>
    %206 = tpu.matmul %203, %205, %cst_90 {dimension_numbers = #tpu.dot_dimension_numbers<[1], [0], [0], [1], [0, 0, 1, 1], [], []>} : vector<2x32xbf16>, vector<32x128xbf16>, vector<2x128xf32> -> vector<2x128xf32>
    %207 = arith.addf %200, %206 : vector<2x128xf32>
    %208 = vector.extract_strided_slice %187 {offsets = [0, 3, 0], sizes = [2, 1, 32], strides = [1, 1, 1]} : vector<2x4x32xf32> to vector<2x1x32xf32>
    %209 = vector.shape_cast %208 : vector<2x1x32xf32> to vector<2x32xf32>
    %210 = arith.truncf %209 : vector<2x32xf32> to vector<2x32xbf16>
    %c3 = arith.constant 3 : index
    %c0_91 = arith.constant 0 : index
    %c0_92 = arith.constant 0 : index
    %211 = vector.load %arg23[%c3, %c0_91, %c0_92] : memref<4x32x128xbf16, #tpu.memory_space<vmem>>, vector<1x32x128xbf16>
    %212 = vector.shape_cast %211 : vector<1x32x128xbf16> to vector<32x128xbf16>
    %cst_93 = arith.constant dense<0.000000e+00> : vector<2x128xf32>
    %213 = tpu.matmul %210, %212, %cst_93 {dimension_numbers = #tpu.dot_dimension_numbers<[1], [0], [0], [1], [0, 0, 1, 1], [], []>} : vector<2x32xbf16>, vector<32x128xbf16>, vector<2x128xf32> -> vector<2x128xf32>
    %214 = arith.addf %207, %213 : vector<2x128xf32>
    %c0_94 = arith.constant 0 : index
    %c0_95 = arith.constant 0 : index
    %215 = vector.load %arg24[%c0_94, %c0_95] : memref<1x128xf32, #tpu.memory_space<vmem>>, vector<1x128xf32>
    %216 = vector.broadcast %215 : vector<1x128xf32> to vector<2x128xf32>
    %217 = arith.addf %214, %216 : vector<2x128xf32>
    %218 = arith.negf %217 : vector<2x128xf32>
    %219 = math.exp %218 : vector<2x128xf32>
    %cst_96 = arith.constant 1.000000e+00 : f32
    %220 = vector.broadcast %cst_96 : f32 to vector<2x128xf32>
    %221 = arith.addf %220, %219 : vector<2x128xf32>
    %222 = arith.divf %220, %221 : vector<2x128xf32>
    %c0_97 = arith.constant 0 : index
    %c0_98 = arith.constant 0 : index
    %223 = vector.load %arg25[%c0_97, %c0_98] : memref<2x128xf32, #tpu.memory_space<vmem>>, vector<2x128xf32>
    tpu.vector_store %arg25[%c0_97, %c0_98], %222 {strides = array<i32>} : memref<2x128xf32, #tpu.memory_space<vmem>>, vector<2x128xf32>,
    %224 = vector.shape_cast %184 : vector<8x1xf32> to vector<8x1xf32>
    %225 = vector.broadcast %224 : vector<8x1xf32> to vector<8x128xf32>
    %c0_99 = arith.constant 0 : index
    %c0_100 = arith.constant 0 : index
    %226 = vector.load %arg26[%c0_99, %c0_100] : memref<8x128xf32, #tpu.memory_space<vmem>>, vector<8x128xf32>
    tpu.vector_store %arg26[%c0_99, %c0_100], %225 {strides = array<i32>} : memref<8x128xf32, #tpu.memory_space<vmem>>, vector<8x128xf32>,
    return
  }
}

</mosaic_0001>

<llo_original>
// kernel: tpu_custom_call.1
$region0: #{tpu_custom_call.1}
  #allocation0 [shape = 'u32[]', space=smem, size = 0x4, offset = 0x4, fixed_abs, tag = 'smem constant byte address 0x4 - core index']
  #allocation1 [shape = 'u32[144,128]{1,0:T(1,128)}', space=vmem, size = 0x12000, scoped, tag = 'internal scratch']
  #allocation2 [shape = 'bf16[32,2048]{1,0:T(16,128)(2,1)}', space=vmem, size = 0x20000, scoped, tag = 'scratch operand']
  #allocation3 [shape = 'bf16[2048,32]{1,0:T(16,128)(2,1)}', space=vmem, size = 0x80000, scoped, tag = 'scratch operand']
  #allocation4 [shape = 's32[2]{0}', space=sflag, size = 0x8, scoped, tag = 'scratch operand']
  #allocation9 [shape = 's32[]', space=sflag, size = 0x4, offset = 0, fixed_abs, tag = 'sflag constant byte address 0x0 - dummy sync flag']
  #allocation10 [shape = 's32[]', space=sflag, size = 0x4, offset = 0, fixed_abs, tag = 'sflag constant byte address 0x0 - dummy sync flag']
  %s0 = inlined_call_operand.vmem [shape: s32[2,4,8], index: 0, kind: input, shape index: {}]
  %s1 = inlined_call_operand.vmem [shape: f32[2,4,8], index: 1, kind: input, shape index: {}]
  %s2 = inlined_call_operand.vmem [shape: s32[1,8], index: 2, kind: input, shape index: {}]
  %s3 = inlined_call_operand.vmem [shape: bf16[128,32], index: 3, kind: input, shape index: {}]
  %s4 = inlined_call_operand.vmem [shape: bf16[32,32], index: 4, kind: input, shape index: {}]
  %s5 = inlined_call_operand.vmem [shape: f32[1,32], index: 5, kind: input, shape index: {}]
  %s6 = inlined_call_operand.vmem [shape: bf16[32,128], index: 6, kind: input, shape index: {}]
  %s7 = inlined_call_operand.vmem [shape: f32[1,128], index: 7, kind: input, shape index: {}]
  %s8 = inlined_call_operand.vmem [shape: bf16[32,4], index: 8, kind: input, shape index: {}]
  %s9 = inlined_call_operand.vmem [shape: bf16[4,32], index: 9, kind: input, shape index: {}]
  %s10 = inlined_call_operand.vmem [shape: bf16[32,32], index: 10, kind: input, shape index: {}]
  %s11 = inlined_call_operand.vmem [shape: f32[1,32], index: 11, kind: input, shape index: {}]
  %s12 = inlined_call_operand.vmem [shape: f32[1,32], index: 12, kind: input, shape index: {}]
  %s13 = inlined_call_operand.vmem [shape: f32[1,32], index: 13, kind: input, shape index: {}]
  %s14 = inlined_call_operand.vmem [shape: bf16[32,2048], index: 14, kind: input, shape index: {}]
  %s15 = inlined_call_operand.vmem [shape: f32[1,2048], index: 15, kind: input, shape index: {}]
  %s16 = inlined_call_operand.vmem [shape: bf16[2048,32], index: 16, kind: input, shape index: {}]
  %s17 = inlined_call_operand.vmem [shape: f32[1,32], index: 17, kind: input, shape index: {}]
  %s18 = inlined_call_operand.vmem [shape: f32[1,32], index: 18, kind: input, shape index: {}]
  %s19 = inlined_call_operand.vmem [shape: f32[1,32], index: 19, kind: input, shape index: {}]
  %s20 = inlined_call_operand.vmem [shape: f32[8,2], index: 20, kind: input, shape index: {}]
  %s21 = inlined_call_operand.vmem [shape: bf16[32,128], index: 21, kind: input, shape index: {}]
  %s22 = inlined_call_operand.vmem [shape: f32[1,128], index: 22, kind: input, shape index: {}]
  %s23 = inlined_call_operand.vmem [shape: bf16[4,32,128], index: 23, kind: input, shape index: {}]
  %s24 = inlined_call_operand.vmem [shape: f32[1,128], index: 24, kind: input, shape index: {}]
  %s25 = inlined_call_operand.hbm [shape: f32[2,128], index: 25, kind: output, shape index: {0}]
  %s26 = inlined_call_operand.hbm [shape: f32[8,128], index: 26, kind: output, shape index: {1}]
  %27 = xla_tuple %s25, %s26
  %s28 = sld [smem:[#allocation0]]
  $region181: #{tpu_custom_call.1} parent=0
    _
  %s30 = ssub.s32 1, %s28
  %s31 = scalar_select 0, %s30, %s28
  $region1: #{tpu_custom_call.1} parent=0
    #allocation5 [shape = 'u8[1024]{0}', space=vmem, size = 0x400, scoped, tag = 'output window, operand 0, single buffered']
    #allocation6 [shape = 's32[1]{0}', space=sflag, size = 0x4, scoped, tag = 'scoped memory for tpu_custom_call.1']
    #allocation7 [shape = 'u8[4096]{0}', space=vmem, size = 0x1000, scoped, tag = 'output window, operand 1, single buffered']
    #allocation8 [shape = 's32[1]{0}', space=sflag, size = 0x4, scoped, tag = 'scoped memory for tpu_custom_call.1']
    %32 = vsyncpa [#allocation6], 0
    %33 = vsyncpa [#allocation8], 0
    // Predicated region
    $region2: #{tpu_custom_call.1} parent=1 // pred_check
      _
    $region3: #{tpu_custom_call.1} parent=1 // pred_check_branch
      %35 = sbr.rel (0) target = $region5
    $region4: #{tpu_custom_call.1} parent=1 // pred_region
      _
    $region5: #{tpu_custom_call.1} parent=1 // pred_fallthru
      _
    // Predicated region
    $region6: #{tpu_custom_call.1} parent=1 // pred_check
      _
    $region7: #{tpu_custom_call.1} parent=1 // pred_check_branch
      %37 = sbr.rel (0) target = $region9
    $region8: #{tpu_custom_call.1} parent=1 // pred_region
      _
    $region9: #{tpu_custom_call.1} parent=1 // pred_fallthru
      _
    // Predicated region
    $region10: #{tpu_custom_call.1} parent=1 // pred_check
      _
    $region11: #{tpu_custom_call.1} parent=1 // pred_check_branch
      %39 = sbr.rel (0) target = $region13
    $region12: #{tpu_custom_call.1} parent=1 // pred_region
      _
    $region13: #{tpu_custom_call.1} parent=1 // pred_fallthru
      _
    // Predicated region
    $region14: #{tpu_custom_call.1} parent=1 // pred_check
      _
    $region15: #{tpu_custom_call.1} parent=1 // pred_check_branch
      %41 = sbr.rel (0) target = $region17
    $region16: #{tpu_custom_call.1} parent=1 // pred_region
      _
    $region17: #{tpu_custom_call.1} parent=1 // pred_fallthru
      _
    // Predicated region
    $region18: #{tpu_custom_call.1} parent=1 // pred_check
      _
    $region19: #{tpu_custom_call.1} parent=1 // pred_check_branch
      %43 = sbr.rel (0) target = $region21
    $region20: #{tpu_custom_call.1} parent=1 // pred_region
      _
    $region21: #{tpu_custom_call.1} parent=1 // pred_fallthru
      _
    // Predicated region
    $region22: #{tpu_custom_call.1} parent=1 // pred_check
      _
    $region23: #{tpu_custom_call.1} parent=1 // pred_check_branch
      %45 = sbr.rel (0) target = $region25
    $region24: #{tpu_custom_call.1} parent=1 // pred_region
      _
    $region25: #{tpu_custom_call.1} parent=1 // pred_fallthru
      _
    // Predicated region
    $region26: #{tpu_custom_call.1} parent=1 // pred_check
      _
    $region27: #{tpu_custom_call.1} parent=1 // pred_check_branch
      %47 = sbr.rel (0) target = $region29
    $region28: #{tpu_custom_call.1} parent=1 // pred_region
      _
    $region29: #{tpu_custom_call.1} parent=1 // pred_fallthru
      _
    // Predicated region
    $region30: #{tpu_custom_call.1} parent=1 // pred_check
      _
    $region31: #{tpu_custom_call.1} parent=1 // pred_check_branch
      %49 = sbr.rel (0) target = $region33
    $region32: #{tpu_custom_call.1} parent=1 // pred_region
      _
    $region33: #{tpu_custom_call.1} parent=1 // pred_fallthru
      _
    // Predicated region
    $region34: #{tpu_custom_call.1} parent=1 // pred_check
      _
    $region35: #{tpu_custom_call.1} parent=1 // pred_check_branch
      %51 = sbr.rel (0) target = $region37
    $region36: #{tpu_custom_call.1} parent=1 // pred_region
      _
    $region37: #{tpu_custom_call.1} parent=1 // pred_fallthru
      _
    // Predicated region
    $region38: #{tpu_custom_call.1} parent=1 // pred_check
      _
    $region39: #{tpu_custom_call.1} parent=1 // pred_check_branch
      %53 = sbr.rel (0) target = $region41
    $region40: #{tpu_custom_call.1} parent=1 // pred_region
      _
    $region41: #{tpu_custom_call.1} parent=1 // pred_fallthru
      _
    // Predicated region
    $region42: #{tpu_custom_call.1} parent=1 // pred_check
      _
    $region43: #{tpu_custom_call.1} parent=1 // pred_check_branch
      %55 = sbr.rel (0) target = $region45
    $region44: #{tpu_custom_call.1} parent=1 // pred_region
      _
    $region45: #{tpu_custom_call.1} parent=1 // pred_fallthru
      _
    // Predicated region
    $region46: #{tpu_custom_call.1} parent=1 // pred_check
      _
    $region47: #{tpu_custom_call.1} parent=1 // pred_check_branch
      %57 = sbr.rel (0) target = $region49
    $region48: #{tpu_custom_call.1} parent=1 // pred_region
      _
    $region49: #{tpu_custom_call.1} parent=1 // pred_fallthru
      _
    // Predicated region
    $region50: #{tpu_custom_call.1} parent=1 // pred_check
      _
    $region51: #{tpu_custom_call.1} parent=1 // pred_check_branch
      %59 = sbr.rel (0) target = $region53
    $region52: #{tpu_custom_call.1} parent=1 // pred_region
      _
    $region53: #{tpu_custom_call.1} parent=1 // pred_fallthru
      _
    // Predicated region
    $region54: #{tpu_custom_call.1} parent=1 // pred_check
      _
    $region55: #{tpu_custom_call.1} parent=1 // pred_check_branch
      %61 = sbr.rel (0) target = $region57
    $region56: #{tpu_custom_call.1} parent=1 // pred_region
      _
    $region57: #{tpu_custom_call.1} parent=1 // pred_fallthru
      _
    // Predicated region
    $region58: #{tpu_custom_call.1} parent=1 // pred_check
      _
    $region59: #{tpu_custom_call.1} parent=1 // pred_check_branch
      %63 = sbr.rel (0) target = $region61
    $region60: #{tpu_custom_call.1} parent=1 // pred_region
      _
    $region61: #{tpu_custom_call.1} parent=1 // pred_fallthru
      _
    // Predicated region
    $region62: #{tpu_custom_call.1} parent=1 // pred_check
      _
    $region63: #{tpu_custom_call.1} parent=1 // pred_check_branch
      %65 = sbr.rel (0) target = $region65
    $region64: #{tpu_custom_call.1} parent=1 // pred_region
      _
    $region65: #{tpu_custom_call.1} parent=1 // pred_fallthru
      _
    // Predicated region
    $region66: #{tpu_custom_call.1} parent=1 // pred_check
      _
    $region67: #{tpu_custom_call.1} parent=1 // pred_check_branch
      %67 = sbr.rel (0) target = $region69
    $region68: #{tpu_custom_call.1} parent=1 // pred_region
      _
    $region69: #{tpu_custom_call.1} parent=1 // pred_fallthru
      _
    // Predicated region
    $region70: #{tpu_custom_call.1} parent=1 // pred_check
      _
    $region71: #{tpu_custom_call.1} parent=1 // pred_check_branch
      %69 = sbr.rel (0) target = $region73
    $region72: #{tpu_custom_call.1} parent=1 // pred_region
      _
    $region73: #{tpu_custom_call.1} parent=1 // pred_fallthru
      _
    // Predicated region
    $region74: #{tpu_custom_call.1} parent=1 // pred_check
      _
    $region75: #{tpu_custom_call.1} parent=1 // pred_check_branch
      %71 = sbr.rel (0) target = $region77
    $region76: #{tpu_custom_call.1} parent=1 // pred_region
      _
    $region77: #{tpu_custom_call.1} parent=1 // pred_fallthru
      _
    // Predicated region
    $region78: #{tpu_custom_call.1} parent=1 // pred_check
      _
    $region79: #{tpu_custom_call.1} parent=1 // pred_check_branch
      %73 = sbr.rel (0) target = $region81
    $region80: #{tpu_custom_call.1} parent=1 // pred_region
      _
    $region81: #{tpu_custom_call.1} parent=1 // pred_fallthru
      _
    // Predicated region
    $region82: #{tpu_custom_call.1} parent=1 // pred_check
      _
    $region83: #{tpu_custom_call.1} parent=1 // pred_check_branch
      %75 = sbr.rel (0) target = $region85
    $region84: #{tpu_custom_call.1} parent=1 // pred_region
      _
    $region85: #{tpu_custom_call.1} parent=1 // pred_fallthru
      _
    // Predicated region
    $region86: #{tpu_custom_call.1} parent=1 // pred_check
      _
    $region87: #{tpu_custom_call.1} parent=1 // pred_check_branch
      %77 = sbr.rel (0) target = $region89
    $region88: #{tpu_custom_call.1} parent=1 // pred_region
      _
    $region89: #{tpu_custom_call.1} parent=1 // pred_fallthru
      _
    // Predicated region
    $region90: #{tpu_custom_call.1} parent=1 // pred_check
      _
    $region91: #{tpu_custom_call.1} parent=1 // pred_check_branch
      %79 = sbr.rel (0) target = $region93
    $region92: #{tpu_custom_call.1} parent=1 // pred_region
      _
    $region93: #{tpu_custom_call.1} parent=1 // pred_fallthru
      _
    %p82 = scmp.lt.u32.totalorder 4, 8
    %p83 = pneg %p82
    // Predicated region
    $region94: #{tpu_custom_call.1} parent=1 // pred_check
      _
    $region95: #{tpu_custom_call.1} parent=1 // pred_check_branch
      %85 = sbr.rel (%p82) target = $region97
    $region96: #{tpu_custom_call.1} parent=1 // pred_region
      %s226 = sand.u32 4, 7
      %p227 = scmp.eq.s32.totalorder %s226, 0
      %p228 = pneg %p227
      // Predicated region
      $region109: #{tpu_custom_call.1} parent=96 // pred_check
        _
      $region110: #{tpu_custom_call.1} parent=96 // pred_check_branch
        %230 = sbr.rel (%p227) target = $region112
      $region111: #{tpu_custom_call.1} parent=96 // pred_region
        %s231 = sand.u32 4, 7
        %s232 = ssub.s32 4, %s231
        %s233 = scalar_lea.vmem %s14, %s232
        %s234 = ssub.s32 4, %s231
        %s235 = scalar_lea.vmem [#allocation2], %s234
        loop: start=0, step=1, limit=1
        $region113: #{tpu_custom_call.1} parent=111 // loop_pre_header
          _
        $region114: #{tpu_custom_call.1} parent=111 // loop_header
          %s237 = sphi 0, %s241
          %p238 = scmp.ge.s32.totalorder %s237, 1
          %s242 = sphi %s14, %s14
          %s243 = sphi [#allocation2], [#allocation2]
        $region115: #{tpu_custom_call.1} parent=111 // loop_header_branch
          %240 = sbr.rel (%p238) target = $region119
        $region116: #{tpu_custom_call.1} parent=111 // loop_body
          _
        $region117: #{tpu_custom_call.1} parent=111 // loop_footer
          %s241 = sadd.s32 1, %s237
        $region118: #{tpu_custom_call.1} parent=111 // loop_footer_branch
          %236 = sbr.rel target = $region114
        $region119: #{tpu_custom_call.1} parent=111 // loop_exit
          _
        %s244 = sshllo.u32 0, %s231
        loop: start=0, step=1, limit=1
        $region120: #{tpu_custom_call.1} parent=111 // loop_pre_header
          _
        $region121: #{tpu_custom_call.1} parent=111 // loop_header
          %s246 = sphi 0, %s250
          %p247 = scmp.ge.s32.totalorder %s246, 1
          %s251 = sphi %s233, %s233
          %s252 = sphi %s235, %s235
        $region122: #{tpu_custom_call.1} parent=111 // loop_header_branch
          %249 = sbr.rel (%p247) target = $region126
        $region123: #{tpu_custom_call.1} parent=111 // loop_body
          %v253 = vld [vmem:[%s251] sm:%s244]
          %254 = vst [vmem:[%s252] sm:%s244] %v253
          %v255 = vld [vmem:[%s251 + $0x40] sm:%s244]
          %256 = vst [vmem:[%s252 + $0x4] sm:%s244] %v255
          %v257 = vld [vmem:[%s251 + $0x4] sm:%s244]
          %258 = vst [vmem:[%s252 + $0x8] sm:%s244] %v257
          %v259 = vld [vmem:[%s251 + $0x44] sm:%s244]
          %260 = vst [vmem:[%s252 + $0xc] sm:%s244] %v259
          %v261 = vld [vmem:[%s251 + $0x8] sm:%s244]
          %262 = vst [vmem:[%s252 + $0x10] sm:%s244] %v261
          %v263 = vld [vmem:[%s251 + $0x48] sm:%s244]
          %264 = vst [vmem:[%s252 + $0x14] sm:%s244] %v263
          %v265 = vld [vmem:[%s251 + $0xc] sm:%s244]
          %266 = vst [vmem:[%s252 + $0x18] sm:%s244] %v265
          %v267 = vld [vmem:[%s251 + $0x4c] sm:%s244]
          %268 = vst [vmem:[%s252 + $0x1c] sm:%s244] %v267
          %v269 = vld [vmem:[%s251 + $0x10] sm:%s244]
          %270 = vst [vmem:[%s252 + $0x20] sm:%s244] %v269
          %v271 = vld [vmem:[%s251 + $0x50] sm:%s244]
          %272 = vst [vmem:[%s252 + $0x24] sm:%s244] %v271
          %v273 = vld [vmem:[%s251 + $0x14] sm:%s244]
          %274 = vst [vmem:[%s252 + $0x28] sm:%s244] %v273
          %v275 = vld [vmem:[%s251 + $0x54] sm:%s244]
          %276 = vst [vmem:[%s252 + $0x2c] sm:%s244] %v275
          %v277 = vld [vmem:[%s251 + $0x18] sm:%s244]
          %278 = vst [vmem:[%s252 + $0x30] sm:%s244] %v277
          %v279 = vld [vmem:[%s251 + $0x58] sm:%s244]
          %280 = vst [vmem:[%s252 + $0x34] sm:%s244] %v279
          %v281 = vld [vmem:[%s251 + $0x1c] sm:%s244]
          %282 = vst [vmem:[%s252 + $0x38] sm:%s244] %v281
          %v283 = vld [vmem:[%s251 + $0x5c] sm:%s244]
          %284 = vst [vmem:[%s252 + $0x3c] sm:%s244] %v283
          %v285 = vld [vmem:[%s251 + $0x20] sm:%s244]
          %286 = vst [vmem:[%s252 + $0x40] sm:%s244] %v285
          %v287 = vld [vmem:[%s251 + $0x60] sm:%s244]
          %288 = vst [vmem:[%s252 + $0x44] sm:%s244] %v287
          %v289 = vld [vmem:[%s251 + $0x24] sm:%s244]
          %290 = vst [vmem:[%s252 + $0x48] sm:%s244] %v289
          %v291 = vld [vmem:[%s251 + $0x64] sm:%s244]
          %292 = vst [vmem:[%s252 + $0x4c] sm:%s244] %v291
          %v293 = vld [vmem:[%s251 + $0x28] sm:%s244]
          %294 = vst [vmem:[%s252 + $0x50] sm:%s244] %v293
          %v295 = vld [vmem:[%s251 + $0x68] sm:%s244]
          %296 = vst [vmem:[%s252 + $0x54] sm:%s244] %v295
          %v297 = vld [vmem:[%s251 + $0x2c] sm:%s244]
          %298 = vst [vmem:[%s252 + $0x58] sm:%s244] %v297
          %v299 = vld [vmem:[%s251 + $0x6c] sm:%s244]
          %300 = vst [vmem:[%s252 + $0x5c] sm:%s244] %v299
          %v301 = vld [vmem:[%s251 + $0x30] sm:%s244]
          %302 = vst [vmem:[%s252 + $0x60] sm:%s244] %v301
          %v303 = vld [vmem:[%s251 + $0x70] sm:%s244]
          %304 = vst [vmem:[%s252 + $0x64] sm:%s244] %v303
          %v305 = vld [vmem:[%s251 + $0x34] sm:%s244]
          %306 = vst [vmem:[%s252 + $0x68] sm:%s244] %v305
          %v307 = vld [vmem:[%s251 + $0x74] sm:%s244]
          %308 = vst [vmem:[%s252 + $0x6c] sm:%s244] %v307
          %v309 = vld [vmem:[%s251 + $0x38] sm:%s244]
          %310 = vst [vmem:[%s252 + $0x70] sm:%s244] %v309
          %v311 = vld [vmem:[%s251 + $0x78] sm:%s244]
          %312 = vst [vmem:[%s252 + $0x74] sm:%s244] %v311
          %v313 = vld [vmem:[%s251 + $0x3c] sm:%s244]
          %314 = vst [vmem:[%s252 + $0x78] sm:%s244] %v313
          %v315 = vld [vmem:[%s251 + $0x7c] sm:%s244]
          %316 = vst [vmem:[%s252 + $0x7c] sm:%s244] %v315
          %v317 = vld [vmem:[%s251 + $0x80] sm:%s244]
          %318 = vst [vmem:[%s252 + $0x80] sm:%s244] %v317
          %v319 = vld [vmem:[%s251 + $0xc0] sm:%s244]
          %320 = vst [vmem:[%s252 + $0x84] sm:%s244] %v319
          %v321 = vld [vmem:[%s251 + $0x84] sm:%s244]
          %322 = vst [vmem:[%s252 + $0x88] sm:%s244] %v321
          %v323 = vld [vmem:[%s251 + $0xc4] sm:%s244]
          %324 = vst [vmem:[%s252 + $0x8c] sm:%s244] %v323
          %v325 = vld [vmem:[%s251 + $0x88] sm:%s244]
          %326 = vst [vmem:[%s252 + $0x90] sm:%s244] %v325
          %v327 = vld [vmem:[%s251 + $0xc8] sm:%s244]
          %328 = vst [vmem:[%s252 + $0x94] sm:%s244] %v327
          %v329 = vld [vmem:[%s251 + $0x8c] sm:%s244]
          %330 = vst [vmem:[%s252 + $0x98] sm:%s244] %v329
          %v331 = vld [vmem:[%s251 + $0xcc] sm:%s244]
          %332 = vst [vmem:[%s252 + $0x9c] sm:%s244] %v331
          %v333 = vld [vmem:[%s251 + $0x90] sm:%s244]
          %334 = vst [vmem:[%s252 + $0xa0] sm:%s244] %v333
          %v335 = vld [vmem:[%s251 + $0xd0] sm:%s244]
          %336 = vst [vmem:[%s252 + $0xa4] sm:%s244] %v335
          %v337 = vld [vmem:[%s251 + $0x94] sm:%s244]
          %338 = vst [vmem:[%s252 + $0xa8] sm:%s244] %v337
          %v339 = vld [vmem:[%s251 + $0xd4] sm:%s244]
          %340 = vst [vmem:[%s252 + $0xac] sm:%s244] %v339
          %v341 = vld [vmem:[%s251 + $0x98] sm:%s244]
          %342 = vst [vmem:[%s252 + $0xb0] sm:%s244] %v341
          %v343 = vld [vmem:[%s251 + $0xd8] sm:%s244]
          %344 = vst [vmem:[%s252 + $0xb4] sm:%s244] %v343
          %v345 = vld [vmem:[%s251 + $0x9c] sm:%s244]
          %346 = vst [vmem:[%s252 + $0xb8] sm:%s244] %v345
          %v347 = vld [vmem:[%s251 + $0xdc] sm:%s244]
          %348 = vst [vmem:[%s252 + $0xbc] sm:%s244] %v347
          %v349 = vld [vmem:[%s251 + $0xa0] sm:%s244]
          %350 = vst [vmem:[%s252 + $0xc0] sm:%s244] %v349
          %v351 = vld [vmem:[%s251 + $0xe0] sm:%s244]
          %352 = vst [vmem:[%s252 + $0xc4] sm:%s244] %v351
          %v353 = vld [vmem:[%s251 + $0xa4] sm:%s244]
          %354 = vst [vmem:[%s252 + $0xc8] sm:%s244] %v353
          %v355 = vld [vmem:[%s251 + $0xe4] sm:%s244]
          %356 = vst [vmem:[%s252 + $0xcc] sm:%s244] %v355
          %v357 = vld [vmem:[%s251 + $0xa8] sm:%s244]
          %358 = vst [vmem:[%s252 + $0xd0] sm:%s244] %v357
          %v359 = vld [vmem:[%s251 + $0xe8] sm:%s244]
          %360 = vst [vmem:[%s252 + $0xd4] sm:%s244] %v359
          %v361 = vld [vmem:[%s251 + $0xac] sm:%s244]
          %362 = vst [vmem:[%s252 + $0xd8] sm:%s244] %v361
          %v363 = vld [vmem:[%s251 + $0xec] sm:%s244]
          %364 = vst [vmem:[%s252 + $0xdc] sm:%s244] %v363
          %v365 = vld [vmem:[%s251 + $0xb0] sm:%s244]
          %366 = vst [vmem:[%s252 + $0xe0] sm:%s244] %v365
          %v367 = vld [vmem:[%s251 + $0xf0] sm:%s244]
          %368 = vst [vmem:[%s252 + $0xe4] sm:%s244] %v367
          %v369 = vld [vmem:[%s251 + $0xb4] sm:%s244]
          %370 = vst [vmem:[%s252 + $0xe8] sm:%s244] %v369
          %v371 = vld [vmem:[%s251 + $0xf4] sm:%s244]
          %372 = vst [vmem:[%s252 + $0xec] sm:%s244] %v371
          %v373 = vld [vmem:[%s251 + $0xb8] sm:%s244]
          %374 = vst [vmem:[%s252 + $0xf0] sm:%s244] %v373
          %v375 = vld [vmem:[%s251 + $0xf8] sm:%s244]
          %376 = vst [vmem:[%s252 + $0xf4] sm:%s244] %v375
          %v377 = vld [vmem:[%s251 + $0xbc] sm:%s244]
          %378 = vst [vmem:[%s252 + $0xf8] sm:%s244] %v377
          %v379 = vld [vmem:[%s251 + $0xfc] sm:%s244]
          %380 = vst [vmem:[%s252 + $0xfc] sm:%s244] %v379
        $region124: #{tpu_custom_call.1} parent=111 // loop_footer
          %s250 = sadd.s32 1, %s246
        $region125: #{tpu_custom_call.1} parent=111 // loop_footer_branch
          %245 = sbr.rel target = $region121
        $region126: #{tpu_custom_call.1} parent=111 // loop_exit
          _
      $region112: #{tpu_custom_call.1} parent=96 // pred_fallthru
        _
    $region97: #{tpu_custom_call.1} parent=1 // pred_fallthru
      _
    // Predicated region
    $region98: #{tpu_custom_call.1} parent=1 // pred_check
      %p86 = pneg %p82
    $region99: #{tpu_custom_call.1} parent=1 // pred_check_branch
      %88 = sbr.rel (%p86) target = $region101
    $region100: #{tpu_custom_call.1} parent=1 // pred_region
      %s89 = sshllo.u32 0, 4
      loop: start=0, step=1, limit=1
      $region102: #{tpu_custom_call.1} parent=100 // loop_pre_header
        _
      $region103: #{tpu_custom_call.1} parent=100 // loop_header
        %s91 = sphi 0, %s95
        %p92 = scmp.ge.s32.totalorder %s91, 1
        %s96 = sphi %s14, %s14
        %s97 = sphi [#allocation2], [#allocation2]
      $region104: #{tpu_custom_call.1} parent=100 // loop_header_branch
        %94 = sbr.rel (%p92) target = $region108
      $region105: #{tpu_custom_call.1} parent=100 // loop_body
        %v98 = vld [vmem:[%s96] sm:%s89]
        %99 = vst [vmem:[%s97] sm:%s89] %v98
        %v100 = vld [vmem:[%s96 + $0x40] sm:%s89]
        %101 = vst [vmem:[%s97 + $0x4] sm:%s89] %v100
        %v102 = vld [vmem:[%s96 + $0x4] sm:%s89]
        %103 = vst [vmem:[%s97 + $0x8] sm:%s89] %v102
        %v104 = vld [vmem:[%s96 + $0x44] sm:%s89]
        %105 = vst [vmem:[%s97 + $0xc] sm:%s89] %v104
        %v106 = vld [vmem:[%s96 + $0x8] sm:%s89]
        %107 = vst [vmem:[%s97 + $0x10] sm:%s89] %v106
        %v108 = vld [vmem:[%s96 + $0x48] sm:%s89]
        %109 = vst [vmem:[%s97 + $0x14] sm:%s89] %v108
        %v110 = vld [vmem:[%s96 + $0xc] sm:%s89]
        %111 = vst [vmem:[%s97 + $0x18] sm:%s89] %v110
        %v112 = vld [vmem:[%s96 + $0x4c] sm:%s89]
        %113 = vst [vmem:[%s97 + $0x1c] sm:%s89] %v112
        %v114 = vld [vmem:[%s96 + $0x10] sm:%s89]
        %115 = vst [vmem:[%s97 + $0x20] sm:%s89] %v114
        %v116 = vld [vmem:[%s96 + $0x50] sm:%s89]
        %117 = vst [vmem:[%s97 + $0x24] sm:%s89] %v116
        %v118 = vld [vmem:[%s96 + $0x14] sm:%s89]
        %119 = vst [vmem:[%s97 + $0x28] sm:%s89] %v118
        %v120 = vld [vmem:[%s96 + $0x54] sm:%s89]
        %121 = vst [vmem:[%s97 + $0x2c] sm:%s89] %v120
        %v122 = vld [vmem:[%s96 + $0x18] sm:%s89]
        %123 = vst [vmem:[%s97 + $0x30] sm:%s89] %v122
        %v124 = vld [vmem:[%s96 + $0x58] sm:%s89]
        %125 = vst [vmem:[%s97 + $0x34] sm:%s89] %v124
        %v126 = vld [vmem:[%s96 + $0x1c] sm:%s89]
        %127 = vst [vmem:[%s97 + $0x38] sm:%s89] %v126
        %v128 = vld [vmem:[%s96 + $0x5c] sm:%s89]
        %129 = vst [vmem:[%s97 + $0x3c] sm:%s89] %v128
        %v130 = vld [vmem:[%s96 + $0x20] sm:%s89]
        %131 = vst [vmem:[%s97 + $0x40] sm:%s89] %v130
        %v132 = vld [vmem:[%s96 + $0x60] sm:%s89]
        %133 = vst [vmem:[%s97 + $0x44] sm:%s89] %v132
        %v134 = vld [vmem:[%s96 + $0x24] sm:%s89]
        %135 = vst [vmem:[%s97 + $0x48] sm:%s89] %v134
        %v136 = vld [vmem:[%s96 + $0x64] sm:%s89]
        %137 = vst [vmem:[%s97 + $0x4c] sm:%s89] %v136
        %v138 = vld [vmem:[%s96 + $0x28] sm:%s89]
        %139 = vst [vmem:[%s97 + $0x50] sm:%s89] %v138
        %v140 = vld [vmem:[%s96 + $0x68] sm:%s89]
        %141 = vst [vmem:[%s97 + $0x54] sm:%s89] %v140
        %v142 = vld [vmem:[%s96 + $0x2c] sm:%s89]
        %143 = vst [vmem:[%s97 + $0x58] sm:%s89] %v142
        %v144 = vld [vmem:[%s96 + $0x6c] sm:%s89]
        %145 = vst [vmem:[%s97 + $0x5c] sm:%s89] %v144
        %v146 = vld [vmem:[%s96 + $0x30] sm:%s89]
        %147 = vst [vmem:[%s97 + $0x60] sm:%s89] %v146
        %v148 = vld [vmem:[%s96 + $0x70] sm:%s89]
        %149 = vst [vmem:[%s97 + $0x64] sm:%s89] %v148
        %v150 = vld [vmem:[%s96 + $0x34] sm:%s89]
        %151 = vst [vmem:[%s97 + $0x68] sm:%s89] %v150
        %v152 = vld [vmem:[%s96 + $0x74] sm:%s89]
        %153 = vst [vmem:[%s97 + $0x6c] sm:%s89] %v152
        %v154 = vld [vmem:[%s96 + $0x38] sm:%s89]
        %155 = vst [vmem:[%s97 + $0x70] sm:%s89] %v154
        %v156 = vld [vmem:[%s96 + $0x78] sm:%s89]
        %157 = vst [vmem:[%s97 + $0x74] sm:%s89] %v156
        %v158 = vld [vmem:[%s96 + $0x3c] sm:%s89]
        %159 = vst [vmem:[%s97 + $0x78] sm:%s89] %v158
        %v160 = vld [vmem:[%s96 + $0x7c] sm:%s89]
        %161 = vst [vmem:[%s97 + $0x7c] sm:%s89] %v160
        %v162 = vld [vmem:[%s96 + $0x80] sm:%s89]
        %163 = vst [vmem:[%s97 + $0x80] sm:%s89] %v162
        %v164 = vld [vmem:[%s96 + $0xc0] sm:%s89]
        %165 = vst [vmem:[%s97 + $0x84] sm:%s89] %v164
        %v166 = vld [vmem:[%s96 + $0x84] sm:%s89]
        %167 = vst [vmem:[%s97 + $0x88] sm:%s89] %v166
        %v168 = vld [vmem:[%s96 + $0xc4] sm:%s89]
        %169 = vst [vmem:[%s97 + $0x8c] sm:%s89] %v168
        %v170 = vld [vmem:[%s96 + $0x88] sm:%s89]
        %171 = vst [vmem:[%s97 + $0x90] sm:%s89] %v170
        %v172 = vld [vmem:[%s96 + $0xc8] sm:%s89]
        %173 = vst [vmem:[%s97 + $0x94] sm:%s89] %v172
        %v174 = vld [vmem:[%s96 + $0x8c] sm:%s89]
        %175 = vst [vmem:[%s97 + $0x98] sm:%s89] %v174
        %v176 = vld [vmem:[%s96 + $0xcc] sm:%s89]
        %177 = vst [vmem:[%s97 + $0x9c] sm:%s89] %v176
        %v178 = vld [vmem:[%s96 + $0x90] sm:%s89]
        %179 = vst [vmem:[%s97 + $0xa0] sm:%s89] %v178
        %v180 = vld [vmem:[%s96 + $0xd0] sm:%s89]
        %181 = vst [vmem:[%s97 + $0xa4] sm:%s89] %v180
        %v182 = vld [vmem:[%s96 + $0x94] sm:%s89]
        %183 = vst [vmem:[%s97 + $0xa8] sm:%s89] %v182
        %v184 = vld [vmem:[%s96 + $0xd4] sm:%s89]
        %185 = vst [vmem:[%s97 + $0xac] sm:%s89] %v184
        %v186 = vld [vmem:[%s96 + $0x98] sm:%s89]
        %187 = vst [vmem:[%s97 + $0xb0] sm:%s89] %v186
        %v188 = vld [vmem:[%s96 + $0xd8] sm:%s89]
        %189 = vst [vmem:[%s97 + $0xb4] sm:%s89] %v188
        %v190 = vld [vmem:[%s96 + $0x9c] sm:%s89]
        %191 = vst [vmem:[%s97 + $0xb8] sm:%s89] %v190
        %v192 = vld [vmem:[%s96 + $0xdc] sm:%s89]
        %193 = vst [vmem:[%s97 + $0xbc] sm:%s89] %v192
        %v194 = vld [vmem:[%s96 + $0xa0] sm:%s89]
        %195 = vst [vmem:[%s97 + $0xc0] sm:%s89] %v194
        %v196 = vld [vmem:[%s96 + $0xe0] sm:%s89]
        %197 = vst [vmem:[%s97 + $0xc4] sm:%s89] %v196
        %v198 = vld [vmem:[%s96 + $0xa4] sm:%s89]
        %199 = vst [vmem:[%s97 + $0xc8] sm:%s89] %v198
        %v200 = vld [vmem:[%s96 + $0xe4] sm:%s89]
        %201 = vst [vmem:[%s97 + $0xcc] sm:%s89] %v200
        %v202 = vld [vmem:[%s96 + $0xa8] sm:%s89]
        %203 = vst [vmem:[%s97 + $0xd0] sm:%s89] %v202
        %v204 = vld [vmem:[%s96 + $0xe8] sm:%s89]
        %205 = vst [vmem:[%s97 + $0xd4] sm:%s89] %v204
        %v206 = vld [vmem:[%s96 + $0xac] sm:%s89]
        %207 = vst [vmem:[%s97 + $0xd8] sm:%s89] %v206
        %v208 = vld [vmem:[%s96 + $0xec] sm:%s89]
        %209 = vst [vmem:[%s97 + $0xdc] sm:%s89] %v208
        %v210 = vld [vmem:[%s96 + $0xb0] sm:%s89]
        %211 = vst [vmem:[%s97 + $0xe0] sm:%s89] %v210
        %v212 = vld [vmem:[%s96 + $0xf0] sm:%s89]
        %213 = vst [vmem:[%s97 + $0xe4] sm:%s89] %v212
        %v214 = vld [vmem:[%s96 + $0xb4] sm:%s89]
        %215 = vst [vmem:[%s97 + $0xe8] sm:%s89] %v214
        %v216 = vld [vmem:[%s96 + $0xf4] sm:%s89]
        %217 = vst [vmem:[%s97 + $0xec] sm:%s89] %v216
        %v218 = vld [vmem:[%s96 + $0xb8] sm:%s89]
        %219 = vst [vmem:[%s97 + $0xf0] sm:%s89] %v218
        %v220 = vld [vmem:[%s96 + $0xf8] sm:%s89]
        %221 = vst [vmem:[%s97 + $0xf4] sm:%s89] %v220
        %v222 = vld [vmem:[%s96 + $0xbc] sm:%s89]
        %223 = vst [vmem:[%s97 + $0xf8] sm:%s89] %v222
        %v224 = vld [vmem:[%s96 + $0xfc] sm:%s89]
        %225 = vst [vmem:[%s97 + $0xfc] sm:%s89] %v224
      $region106: #{tpu_custom_call.1} parent=100 // loop_footer
        %s95 = sadd.s32 1, %s91
      $region107: #{tpu_custom_call.1} parent=100 // loop_footer_branch
        %90 = sbr.rel target = $region103
      $region108: #{tpu_custom_call.1} parent=100 // loop_exit
        _
    $region101: #{tpu_custom_call.1} parent=1 // pred_fallthru
      _
    // Predicated region
    $region127: #{tpu_custom_call.1} parent=1 // pred_check
      _
    $region128: #{tpu_custom_call.1} parent=1 // pred_check_branch
      %383 = sbr.rel (0) target = $region130
    $region129: #{tpu_custom_call.1} parent=1 // pred_region
      %384 = vsyncadd [#allocation4], 4096
    $region130: #{tpu_custom_call.1} parent=1 // pred_fallthru
      _
    %s385 = scalar_lea.sflag [#allocation4], 1
    %p387 = scmp.lt.u32.totalorder 1024, 8
    %p388 = pneg %p387
    // Predicated region
    $region131: #{tpu_custom_call.1} parent=1 // pred_check
      _
    $region132: #{tpu_custom_call.1} parent=1 // pred_check_branch
      %390 = sbr.rel (%p387) target = $region134
    $region133: #{tpu_custom_call.1} parent=1 // pred_region
      %s405 = sand.u32 1024, 7
      %p406 = scmp.eq.s32.totalorder %s405, 0
      // Predicated region
      $region146: #{tpu_custom_call.1} parent=133 // pred_check
        %p407 = pneg %p406
      $region147: #{tpu_custom_call.1} parent=133 // pred_check_branch
        %409 = sbr.rel (%p407) target = $region149
      $region148: #{tpu_custom_call.1} parent=133 // pred_region
        loop: start=0, step=1, limit=1
        $region150: #{tpu_custom_call.1} parent=148 // loop_pre_header
          _
        $region151: #{tpu_custom_call.1} parent=148 // loop_header
          %s411 = sphi 0, %s415
          %p412 = scmp.ge.s32.totalorder %s411, 1
          %s416 = sphi %s16, %s16
          %s417 = sphi [#allocation3], [#allocation3]
        $region152: #{tpu_custom_call.1} parent=148 // loop_header_branch
          %414 = sbr.rel (%p412) target = $region156
        $region153: #{tpu_custom_call.1} parent=148 // loop_body
          %v418 = vld [vmem:[%s416] sm:$0xff]
          %419 = vst [vmem:[%s417] sm:$0xff] %v418
          %v420 = vld [vmem:[%s416 + $0x8] sm:$0xff]
          %421 = vst [vmem:[%s417 + $0x8] sm:$0xff] %v420
          %v422 = vld [vmem:[%s416 + $0x10] sm:$0xff]
          %423 = vst [vmem:[%s417 + $0x10] sm:$0xff] %v422
          %v424 = vld [vmem:[%s416 + $0x18] sm:$0xff]
          %425 = vst [vmem:[%s417 + $0x18] sm:$0xff] %v424
          %v426 = vld [vmem:[%s416 + $0x20] sm:$0xff]
          %427 = vst [vmem:[%s417 + $0x20] sm:$0xff] %v426
          %v428 = vld [vmem:[%s416 + $0x28] sm:$0xff]
          %429 = vst [vmem:[%s417 + $0x28] sm:$0xff] %v428
          %v430 = vld [vmem:[%s416 + $0x30] sm:$0xff]
          %431 = vst [vmem:[%s417 + $0x30] sm:$0xff] %v430
          %v432 = vld [vmem:[%s416 + $0x38] sm:$0xff]
          %433 = vst [vmem:[%s417 + $0x38] sm:$0xff] %v432
          %v434 = vld [vmem:[%s416 + $0x40] sm:$0xff]
          %435 = vst [vmem:[%s417 + $0x40] sm:$0xff] %v434
          %v436 = vld [vmem:[%s416 + $0x48] sm:$0xff]
          %437 = vst [vmem:[%s417 + $0x48] sm:$0xff] %v436
          %v438 = vld [vmem:[%s416 + $0x50] sm:$0xff]
          %439 = vst [vmem:[%s417 + $0x50] sm:$0xff] %v438
          %v440 = vld [vmem:[%s416 + $0x58] sm:$0xff]
          %441 = vst [vmem:[%s417 + $0x58] sm:$0xff] %v440
          %v442 = vld [vmem:[%s416 + $0x60] sm:$0xff]
          %443 = vst [vmem:[%s417 + $0x60] sm:$0xff] %v442
          %v444 = vld [vmem:[%s416 + $0x68] sm:$0xff]
          %445 = vst [vmem:[%s417 + $0x68] sm:$0xff] %v444
          %v446 = vld [vmem:[%s416 + $0x70] sm:$0xff]
          %447 = vst [vmem:[%s417 + $0x70] sm:$0xff] %v446
          %v448 = vld [vmem:[%s416 + $0x78] sm:$0xff]
          %449 = vst [vmem:[%s417 + $0x78] sm:$0xff] %v448
          %v450 = vld [vmem:[%s416 + $0x80] sm:$0xff]
          %451 = vst [vmem:[%s417 + $0x80] sm:$0xff] %v450
          %v452 = vld [vmem:[%s416 + $0x88] sm:$0xff]
          %453 = vst [vmem:[%s417 + $0x88] sm:$0xff] %v452
          %v454 = vld [vmem:[%s416 + $0x90] sm:$0xff]
          %455 = vst [vmem:[%s417 + $0x90] sm:$0xff] %v454
          %v456 = vld [vmem:[%s416 + $0x98] sm:$0xff]
          %457 = vst [vmem:[%s417 + $0x98] sm:$0xff] %v456
          %v458 = vld [vmem:[%s416 + $0xa0] sm:$0xff]
          %459 = vst [vmem:[%s417 + $0xa0] sm:$0xff] %v458
          %v460 = vld [vmem:[%s416 + $0xa8] sm:$0xff]
          %461 = vst [vmem:[%s417 + $0xa8] sm:$0xff] %v460
          %v462 = vld [vmem:[%s416 + $0xb0] sm:$0xff]
          %463 = vst [vmem:[%s417 + $0xb0] sm:$0xff] %v462
          %v464 = vld [vmem:[%s416 + $0xb8] sm:$0xff]
          %465 = vst [vmem:[%s417 + $0xb8] sm:$0xff] %v464
          %v466 = vld [vmem:[%s416 + $0xc0] sm:$0xff]
          %467 = vst [vmem:[%s417 + $0xc0] sm:$0xff] %v466
          %v468 = vld [vmem:[%s416 + $0xc8] sm:$0xff]
          %469 = vst [vmem:[%s417 + $0xc8] sm:$0xff] %v468
          %v470 = vld [vmem:[%s416 + $0xd0] sm:$0xff]
          %471 = vst [vmem:[%s417 + $0xd0] sm:$0xff] %v470
          %v472 = vld [vmem:[%s416 + $0xd8] sm:$0xff]
          %473 = vst [vmem:[%s417 + $0xd8] sm:$0xff] %v472
          %v474 = vld [vmem:[%s416 + $0xe0] sm:$0xff]
          %475 = vst [vmem:[%s417 + $0xe0] sm:$0xff] %v474
          %v476 = vld [vmem:[%s416 + $0xe8] sm:$0xff]
          %477 = vst [vmem:[%s417 + $0xe8] sm:$0xff] %v476
          %v478 = vld [vmem:[%s416 + $0xf0] sm:$0xff]
          %479 = vst [vmem:[%s417 + $0xf0] sm:$0xff] %v478
          %v480 = vld [vmem:[%s416 + $0xf8] sm:$0xff]
          %481 = vst [vmem:[%s417 + $0xf8] sm:$0xff] %v480
          %v482 = vld [vmem:[%s416 + $0x100] sm:$0xff]
          %483 = vst [vmem:[%s417 + $0x100] sm:$0xff] %v482
          %v484 = vld [vmem:[%s416 + $0x108] sm:$0xff]
          %485 = vst [vmem:[%s417 + $0x108] sm:$0xff] %v484
          %v486 = vld [vmem:[%s416 + $0x110] sm:$0xff]
          %487 = vst [vmem:[%s417 + $0x110] sm:$0xff] %v486
          %v488 = vld [vmem:[%s416 + $0x118] sm:$0xff]
          %489 = vst [vmem:[%s417 + $0x118] sm:$0xff] %v488
          %v490 = vld [vmem:[%s416 + $0x120] sm:$0xff]
          %491 = vst [vmem:[%s417 + $0x120] sm:$0xff] %v490
          %v492 = vld [vmem:[%s416 + $0x128] sm:$0xff]
          %493 = vst [vmem:[%s417 + $0x128] sm:$0xff] %v492
          %v494 = vld [vmem:[%s416 + $0x130] sm:$0xff]
          %495 = vst [vmem:[%s417 + $0x130] sm:$0xff] %v494
          %v496 = vld [vmem:[%s416 + $0x138] sm:$0xff]
          %497 = vst [vmem:[%s417 + $0x138] sm:$0xff] %v496
          %v498 = vld [vmem:[%s416 + $0x140] sm:$0xff]
          %499 = vst [vmem:[%s417 + $0x140] sm:$0xff] %v498
          %v500 = vld [vmem:[%s416 + $0x148] sm:$0xff]
          %501 = vst [vmem:[%s417 + $0x148] sm:$0xff] %v500
          %v502 = vld [vmem:[%s416 + $0x150] sm:$0xff]
          %503 = vst [vmem:[%s417 + $0x150] sm:$0xff] %v502
          %v504 = vld [vmem:[%s416 + $0x158] sm:$0xff]
          %505 = vst [vmem:[%s417 + $0x158] sm:$0xff] %v504
          %v506 = vld [vmem:[%s416 + $0x160] sm:$0xff]
          %507 = vst [vmem:[%s417 + $0x160] sm:$0xff] %v506
          %v508 = vld [vmem:[%s416 + $0x168] sm:$0xff]
          %509 = vst [vmem:[%s417 + $0x168] sm:$0xff] %v508
          %v510 = vld [vmem:[%s416 + $0x170] sm:$0xff]
          %511 = vst [vmem:[%s417 + $0x170] sm:$0xff] %v510
          %v512 = vld [vmem:[%s416 + $0x178] sm:$0xff]
          %513 = vst [vmem:[%s417 + $0x178] sm:$0xff] %v512
          %v514 = vld [vmem:[%s416 + $0x180] sm:$0xff]
          %515 = vst [vmem:[%s417 + $0x180] sm:$0xff] %v514
          %v516 = vld [vmem:[%s416 + $0x188] sm:$0xff]
          %517 = vst [vmem:[%s417 + $0x188] sm:$0xff] %v516
          %v518 = vld [vmem:[%s416 + $0x190] sm:$0xff]
          %519 = vst [vmem:[%s417 + $0x190] sm:$0xff] %v518
          %v520 = vld [vmem:[%s416 + $0x198] sm:$0xff]
          %521 = vst [vmem:[%s417 + $0x198] sm:$0xff] %v520
          %v522 = vld [vmem:[%s416 + $0x1a0] sm:$0xff]
          %523 = vst [vmem:[%s417 + $0x1a0] sm:$0xff] %v522
          %v524 = vld [vmem:[%s416 + $0x1a8] sm:$0xff]
          %525 = vst [vmem:[%s417 + $0x1a8] sm:$0xff] %v524
          %v526 = vld [vmem:[%s416 + $0x1b0] sm:$0xff]
          %527 = vst [vmem:[%s417 + $0x1b0] sm:$0xff] %v526
          %v528 = vld [vmem:[%s416 + $0x1b8] sm:$0xff]
          %529 = vst [vmem:[%s417 + $0x1b8] sm:$0xff] %v528
          %v530 = vld [vmem:[%s416 + $0x1c0] sm:$0xff]
          %531 = vst [vmem:[%s417 + $0x1c0] sm:$0xff] %v530
          %v532 = vld [vmem:[%s416 + $0x1c8] sm:$0xff]
          %533 = vst [vmem:[%s417 + $0x1c8] sm:$0xff] %v532
          %v534 = vld [vmem:[%s416 + $0x1d0] sm:$0xff]
          %535 = vst [vmem:[%s417 + $0x1d0] sm:$0xff] %v534
          %v536 = vld [vmem:[%s416 + $0x1d8] sm:$0xff]
          %537 = vst [vmem:[%s417 + $0x1d8] sm:$0xff] %v536
          %v538 = vld [vmem:[%s416 + $0x1e0] sm:$0xff]
          %539 = vst [vmem:[%s417 + $0x1e0] sm:$0xff] %v538
          %v540 = vld [vmem:[%s416 + $0x1e8] sm:$0xff]
          %541 = vst [vmem:[%s417 + $0x1e8] sm:$0xff] %v540
          %v542 = vld [vmem:[%s416 + $0x1f0] sm:$0xff]
          %543 = vst [vmem:[%s417 + $0x1f0] sm:$0xff] %v542
          %v544 = vld [vmem:[%s416 + $0x1f8] sm:$0xff]
          %545 = vst [vmem:[%s417 + $0x1f8] sm:$0xff] %v544
          %v546 = vld [vmem:[%s416 + $0x200] sm:$0xff]
          %547 = vst [vmem:[%s417 + $0x200] sm:$0xff] %v546
          %v548 = vld [vmem:[%s416 + $0x208] sm:$0xff]
          %549 = vst [vmem:[%s417 + $0x208] sm:$0xff] %v548
          %v550 = vld [vmem:[%s416 + $0x210] sm:$0xff]
          %551 = vst [vmem:[%s417 + $0x210] sm:$0xff] %v550
          %v552 = vld [vmem:[%s416 + $0x218] sm:$0xff]
          %553 = vst [vmem:[%s417 + $0x218] sm:$0xff] %v552
          %v554 = vld [vmem:[%s416 + $0x220] sm:$0xff]
          %555 = vst [vmem:[%s417 + $0x220] sm:$0xff] %v554
          %v556 = vld [vmem:[%s416 + $0x228] sm:$0xff]
          %557 = vst [vmem:[%s417 + $0x228] sm:$0xff] %v556
          %v558 = vld [vmem:[%s416 + $0x230] sm:$0xff]
          %559 = vst [vmem:[%s417 + $0x230] sm:$0xff] %v558
          %v560 = vld [vmem:[%s416 + $0x238] sm:$0xff]
          %561 = vst [vmem:[%s417 + $0x238] sm:$0xff] %v560
          %v562 = vld [vmem:[%s416 + $0x240] sm:$0xff]
          %563 = vst [vmem:[%s417 + $0x240] sm:$0xff] %v562
          %v564 = vld [vmem:[%s416 + $0x248] sm:$0xff]
          %565 = vst [vmem:[%s417 + $0x248] sm:$0xff] %v564
          %v566 = vld [vmem:[%s416 + $0x250] sm:$0xff]
          %567 = vst [vmem:[%s417 + $0x250] sm:$0xff] %v566
          %v568 = vld [vmem:[%s416 + $0x258] sm:$0xff]
          %569 = vst [vmem:[%s417 + $0x258] sm:$0xff] %v568
          %v570 = vld [vmem:[%s416 + $0x260] sm:$0xff]
          %571 = vst [vmem:[%s417 + $0x260] sm:$0xff] %v570
          %v572 = vld [vmem:[%s416 + $0x268] sm:$0xff]
          %573 = vst [vmem:[%s417 + $0x268] sm:$0xff] %v572
          %v574 = vld [vmem:[%s416 + $0x270] sm:$0xff]
          %575 = vst [vmem:[%s417 + $0x270] sm:$0xff] %v574
          %v576 = vld [vmem:[%s416 + $0x278] sm:$0xff]
          %577 = vst [vmem:[%s417 + $0x278] sm:$0xff] %v576
          %v578 = vld [vmem:[%s416 + $0x280] sm:$0xff]
          %579 = vst [vmem:[%s417 + $0x280] sm:$0xff] %v578
          %v580 = vld [vmem:[%s416 + $0x288] sm:$0xff]
          %581 = vst [vmem:[%s417 + $0x288] sm:$0xff] %v580
          %v582 = vld [vmem:[%s416 + $0x290] sm:$0xff]
          %583 = vst [vmem:[%s417 + $0x290] sm:$0xff] %v582
          %v584 = vld [vmem:[%s416 + $0x298] sm:$0xff]
          %585 = vst [vmem:[%s417 + $0x298] sm:$0xff] %v584
          %v586 = vld [vmem:[%s416 + $0x2a0] sm:$0xff]
          %587 = vst [vmem:[%s417 + $0x2a0] sm:$0xff] %v586
          %v588 = vld [vmem:[%s416 + $0x2a8] sm:$0xff]
          %589 = vst [vmem:[%s417 + $0x2a8] sm:$0xff] %v588
          %v590 = vld [vmem:[%s416 + $0x2b0] sm:$0xff]
          %591 = vst [vmem:[%s417 + $0x2b0] sm:$0xff] %v590
          %v592 = vld [vmem:[%s416 + $0x2b8] sm:$0xff]
          %593 = vst [vmem:[%s417 + $0x2b8] sm:$0xff] %v592
          %v594 = vld [vmem:[%s416 + $0x2c0] sm:$0xff]
          %595 = vst [vmem:[%s417 + $0x2c0] sm:$0xff] %v594
          %v596 = vld [vmem:[%s416 + $0x2c8] sm:$0xff]
          %597 = vst [vmem:[%s417 + $0x2c8] sm:$0xff] %v596
          %v598 = vld [vmem:[%s416 + $0x2d0] sm:$0xff]
          %599 = vst [vmem:[%s417 + $0x2d0] sm:$0xff] %v598
          %v600 = vld [vmem:[%s416 + $0x2d8] sm:$0xff]
          %601 = vst [vmem:[%s417 + $0x2d8] sm:$0xff] %v600
          %v602 = vld [vmem:[%s416 + $0x2e0] sm:$0xff]
          %603 = vst [vmem:[%s417 + $0x2e0] sm:$0xff] %v602
          %v604 = vld [vmem:[%s416 + $0x2e8] sm:$0xff]
          %605 = vst [vmem:[%s417 + $0x2e8] sm:$0xff] %v604
          %v606 = vld [vmem:[%s416 + $0x2f0] sm:$0xff]
          %607 = vst [vmem:[%s417 + $0x2f0] sm:$0xff] %v606
          %v608 = vld [vmem:[%s416 + $0x2f8] sm:$0xff]
          %609 = vst [vmem:[%s417 + $0x2f8] sm:$0xff] %v608
          %v610 = vld [vmem:[%s416 + $0x300] sm:$0xff]
          %611 = vst [vmem:[%s417 + $0x300] sm:$0xff] %v610
          %v612 = vld [vmem:[%s416 + $0x308] sm:$0xff]
          %613 = vst [vmem:[%s417 + $0x308] sm:$0xff] %v612
          %v614 = vld [vmem:[%s416 + $0x310] sm:$0xff]
          %615 = vst [vmem:[%s417 + $0x310] sm:$0xff] %v614
          %v616 = vld [vmem:[%s416 + $0x318] sm:$0xff]
          %617 = vst [vmem:[%s417 + $0x318] sm:$0xff] %v616
          %v618 = vld [vmem:[%s416 + $0x320] sm:$0xff]
          %619 = vst [vmem:[%s417 + $0x320] sm:$0xff] %v618
          %v620 = vld [vmem:[%s416 + $0x328] sm:$0xff]
          %621 = vst [vmem:[%s417 + $0x328] sm:$0xff] %v620
          %v622 = vld [vmem:[%s416 + $0x330] sm:$0xff]
          %623 = vst [vmem:[%s417 + $0x330] sm:$0xff] %v622
          %v624 = vld [vmem:[%s416 + $0x338] sm:$0xff]
          %625 = vst [vmem:[%s417 + $0x338] sm:$0xff] %v624
          %v626 = vld [vmem:[%s416 + $0x340] sm:$0xff]
          %627 = vst [vmem:[%s417 + $0x340] sm:$0xff] %v626
          %v628 = vld [vmem:[%s416 + $0x348] sm:$0xff]
          %629 = vst [vmem:[%s417 + $0x348] sm:$0xff] %v628
          %v630 = vld [vmem:[%s416 + $0x350] sm:$0xff]
          %631 = vst [vmem:[%s417 + $0x350] sm:$0xff] %v630
          %v632 = vld [vmem:[%s416 + $0x358] sm:$0xff]
          %633 = vst [vmem:[%s417 + $0x358] sm:$0xff] %v632
          %v634 = vld [vmem:[%s416 + $0x360] sm:$0xff]
          %635 = vst [vmem:[%s417 + $0x360] sm:$0xff] %v634
          %v636 = vld [vmem:[%s416 + $0x368] sm:$0xff]
          %637 = vst [vmem:[%s417 + $0x368] sm:$0xff] %v636
          %v638 = vld [vmem:[%s416 + $0x370] sm:$0xff]
          %639 = vst [vmem:[%s417 + $0x370] sm:$0xff] %v638
          %v640 = vld [vmem:[%s416 + $0x378] sm:$0xff]
          %641 = vst [vmem:[%s417 + $0x378] sm:$0xff] %v640
          %v642 = vld [vmem:[%s416 + $0x380] sm:$0xff]
          %643 = vst [vmem:[%s417 + $0x380] sm:$0xff] %v642
          %v644 = vld [vmem:[%s416 + $0x388] sm:$0xff]
          %645 = vst [vmem:[%s417 + $0x388] sm:$0xff] %v644
          %v646 = vld [vmem:[%s416 + $0x390] sm:$0xff]
          %647 = vst [vmem:[%s417 + $0x390] sm:$0xff] %v646
          %v648 = vld [vmem:[%s416 + $0x398] sm:$0xff]
          %649 = vst [vmem:[%s417 + $0x398] sm:$0xff] %v648
          %v650 = vld [vmem:[%s416 + $0x3a0] sm:$0xff]
          %651 = vst [vmem:[%s417 + $0x3a0] sm:$0xff] %v650
          %v652 = vld [vmem:[%s416 + $0x3a8] sm:$0xff]
          %653 = vst [vmem:[%s417 + $0x3a8] sm:$0xff] %v652
          %v654 = vld [vmem:[%s416 + $0x3b0] sm:$0xff]
          %655 = vst [vmem:[%s417 + $0x3b0] sm:$0xff] %v654
          %v656 = vld [vmem:[%s416 + $0x3b8] sm:$0xff]
          %657 = vst [vmem:[%s417 + $0x3b8] sm:$0xff] %v656
          %v658 = vld [vmem:[%s416 + $0x3c0] sm:$0xff]
          %659 = vst [vmem:[%s417 + $0x3c0] sm:$0xff] %v658
          %v660 = vld [vmem:[%s416 + $0x3c8] sm:$0xff]
          %661 = vst [vmem:[%s417 + $0x3c8] sm:$0xff] %v660
          %v662 = vld [vmem:[%s416 + $0x3d0] sm:$0xff]
          %663 = vst [vmem:[%s417 + $0x3d0] sm:$0xff] %v662
          %v664 = vld [vmem:[%s416 + $0x3d8] sm:$0xff]
          %665 = vst [vmem:[%s417 + $0x3d8] sm:$0xff] %v664
          %v666 = vld [vmem:[%s416 + $0x3e0] sm:$0xff]
          %667 = vst [vmem:[%s417 + $0x3e0] sm:$0xff] %v666
          %v668 = vld [vmem:[%s416 + $0x3e8] sm:$0xff]
          %669 = vst [vmem:[%s417 + $0x3e8] sm:$0xff] %v668
          %v670 = vld [vmem:[%s416 + $0x3f0] sm:$0xff]
          %671 = vst [vmem:[%s417 + $0x3f0] sm:$0xff] %v670
          %v672 = vld [vmem:[%s416 + $0x3f8] sm:$0xff]
          %673 = vst [vmem:[%s417 + $0x3f8] sm:$0xff] %v672
        $region154: #{tpu_custom_call.1} parent=148 // loop_footer
          %s415 = sadd.s32 1, %s411
        $region155: #{tpu_custom_call.1} parent=148 // loop_footer_branch
          %410 = sbr.rel target = $region151
        $region156: #{tpu_custom_call.1} parent=148 // loop_exit
          _
      $region149: #{tpu_custom_call.1} parent=133 // pred_fallthru
        _
      %p674 = pneg %p406
      // Predicated region
      $region157: #{tpu_custom_call.1} parent=133 // pred_check
        _
      $region158: #{tpu_custom_call.1} parent=133 // pred_check_branch
        %676 = sbr.rel (%p406) target = $region160
      $region159: #{tpu_custom_call.1} parent=133 // pred_region
        %s677 = sand.u32 1024, 7
      $region160: #{tpu_custom_call.1} parent=133 // pred_fallthru
        _
    $region134: #{tpu_custom_call.1} parent=1 // pred_fallthru
      _
    // Predicated region
    $region135: #{tpu_custom_call.1} parent=1 // pred_check
      %p391 = pneg %p387
    $region136: #{tpu_custom_call.1} parent=1 // pred_check_branch
      %393 = sbr.rel (%p391) target = $region138
    $region137: #{tpu_custom_call.1} parent=1 // pred_region
      %s394 = sshllo.u32 0, 1024
      loop: start=0, step=1, limit=1
      $region139: #{tpu_custom_call.1} parent=137 // loop_pre_header
        _
      $region140: #{tpu_custom_call.1} parent=137 // loop_header
        %s396 = sphi 0, %s400
        %p397 = scmp.ge.s32.totalorder %s396, 1
        %s401 = sphi %s16, %s16
        %s402 = sphi [#allocation3], [#allocation3]
      $region141: #{tpu_custom_call.1} parent=137 // loop_header_branch
        %399 = sbr.rel (%p397) target = $region145
      $region142: #{tpu_custom_call.1} parent=137 // loop_body
        %v403 = vld [vmem:[%s401] sm:%s394]
        %404 = vst [vmem:[%s402] sm:%s394] %v403
      $region143: #{tpu_custom_call.1} parent=137 // loop_footer
        %s400 = sadd.s32 1, %s396
      $region144: #{tpu_custom_call.1} parent=137 // loop_footer_branch
        %395 = sbr.rel target = $region140
      $region145: #{tpu_custom_call.1} parent=137 // loop_exit
        _
    $region138: #{tpu_custom_call.1} parent=1 // pred_fallthru
      _
    // Predicated region
    $region161: #{tpu_custom_call.1} parent=1 // pred_check
      _
    $region162: #{tpu_custom_call.1} parent=1 // pred_check_branch
      %680 = sbr.rel (0) target = $region164
    $region163: #{tpu_custom_call.1} parent=1 // pred_region
      %681 = vsyncadd %s385, 16384
    $region164: #{tpu_custom_call.1} parent=1 // pred_fallthru
      _
    %v682 = vld [vmem:[%s0] sm:$0xf]
    %v683 = vld [vmem:[%s0 + $0x4] sm:$0xf]
    %v684 = vld [vmem:[%s1] sm:$0xf]
    %v685 = vld [vmem:[%s1 + $0x4] sm:$0xf]
    %v686 = vlaneseq
    %v687 = vand.u32 %v686, 127
    %v688 = vlaneseq
    %v689 = vshrl.u32 %v688, 7
    %v690 = vsub.s32 0, %v689
    %v691 = vrot.slane %v682, %v690
    %693 = vbcast.lane.b32.xlu0 %v691, 256
    %v694 = vpop.permute.xlu0 %693
    %v695 = vlaneseq
    %v696 = vshrl.u32 %v695, 7
    %v697 = vsub.s32 1, %v696
    %v698 = vrot.slane %v682, %v697
    %700 = vbcast.lane.b32.xlu0 %v698, 256
    %v701 = vpop.permute.xlu0 %700
    %v702 = vlaneseq
    %v703 = vshrl.u32 %v702, 7
    %v704 = vsub.s32 2, %v703
    %v705 = vrot.slane %v682, %v704
    %707 = vbcast.lane.b32.xlu0 %v705, 256
    %v708 = vpop.permute.xlu0 %707
    %v709 = vlaneseq
    %v710 = vshrl.u32 %v709, 7
    %v711 = vsub.s32 3, %v710
    %v712 = vrot.slane %v682, %v711
    %714 = vbcast.lane.b32.xlu0 %v712, 256
    %v715 = vpop.permute.xlu0 %714
    %v716 = vlaneseq
    %v717 = vshrl.u32 %v716, 7
    %v718 = vsub.s32 0, %v717
    %v719 = vrot.slane %v683, %v718
    %721 = vbcast.lane.b32.xlu0 %v719, 256
    %v722 = vpop.permute.xlu0 %721
    %v723 = vlaneseq
    %v724 = vshrl.u32 %v723, 7
    %v725 = vsub.s32 1, %v724
    %v726 = vrot.slane %v683, %v725
    %728 = vbcast.lane.b32.xlu0 %v726, 256
    %v729 = vpop.permute.xlu0 %728
    %v730 = vlaneseq
    %v731 = vshrl.u32 %v730, 7
    %v732 = vsub.s32 2, %v731
    %v733 = vrot.slane %v683, %v732
    %735 = vbcast.lane.b32.xlu0 %v733, 256
    %v736 = vpop.permute.xlu0 %735
    %v737 = vlaneseq
    %v738 = vshrl.u32 %v737, 7
    %v739 = vsub.s32 3, %v738
    %v740 = vrot.slane %v683, %v739
    %742 = vbcast.lane.b32.xlu0 %v740, 256
    %v743 = vpop.permute.xlu0 %742
    %vm744 = vcmp.eq.s32.totalorder %v694, %v687
    %vm745 = vcmp.eq.s32.totalorder %v701, %v687
    %vm746 = vcmp.eq.s32.totalorder %v708, %v687
    %vm747 = vcmp.eq.s32.totalorder %v715, %v687
    %vm748 = vcmp.eq.s32.totalorder %v722, %v687
    %vm749 = vcmp.eq.s32.totalorder %v729, %v687
    %vm750 = vcmp.eq.s32.totalorder %v736, %v687
    %vm751 = vcmp.eq.s32.totalorder %v743, %v687
    %v752 = vsel %vm744, 1, 0
    %v753 = vsel %vm745, 1, 0
    %v754 = vsel %vm746, 1, 0
    %v755 = vsel %vm747, 1, 0
    %v756 = vsel %vm748, 1, 0
    %v757 = vsel %vm749, 1, 0
    %v758 = vsel %vm750, 1, 0
    %v759 = vsel %vm751, 1, 0
    %v760 = vcvt.s32.f32 %v752
    %v761 = vcvt.s32.f32 %v753
    %v762 = vcvt.s32.f32 %v754
    %v763 = vcvt.s32.f32 %v755
    %v764 = vcvt.s32.f32 %v756
    %v765 = vcvt.s32.f32 %v757
    %v766 = vcvt.s32.f32 %v758
    %v767 = vcvt.s32.f32 %v759
    %v768 = vlaneseq
    %v769 = vshrl.u32 %v768, 7
    %v770 = vsub.s32 0, %v769
    %v771 = vrot.slane %v684, %v770
    %773 = vbcast.lane.b32.xlu0 %v771, 256
    %v774 = vpop.permute.xlu0 %773
    %v775 = vlaneseq
    %v776 = vshrl.u32 %v775, 7
    %v777 = vsub.s32 1, %v776
    %v778 = vrot.slane %v684, %v777
    %780 = vbcast.lane.b32.xlu0 %v778, 256
    %v781 = vpop.permute.xlu0 %780
    %v782 = vlaneseq
    %v783 = vshrl.u32 %v782, 7
    %v784 = vsub.s32 2, %v783
    %v785 = vrot.slane %v684, %v784
    %787 = vbcast.lane.b32.xlu0 %v785, 256
    %v788 = vpop.permute.xlu0 %787
    %v789 = vlaneseq
    %v790 = vshrl.u32 %v789, 7
    %v791 = vsub.s32 3, %v790
    %v792 = vrot.slane %v684, %v791
    %794 = vbcast.lane.b32.xlu0 %v792, 256
    %v795 = vpop.permute.xlu0 %794
    %v796 = vlaneseq
    %v797 = vshrl.u32 %v796, 7
    %v798 = vsub.s32 0, %v797
    %v799 = vrot.slane %v685, %v798
    %801 = vbcast.lane.b32.xlu0 %v799, 256
    %v802 = vpop.permute.xlu0 %801
    %v803 = vlaneseq
    %v804 = vshrl.u32 %v803, 7
    %v805 = vsub.s32 1, %v804
    %v806 = vrot.slane %v685, %v805
    %808 = vbcast.lane.b32.xlu0 %v806, 256
    %v809 = vpop.permute.xlu0 %808
    %v810 = vlaneseq
    %v811 = vshrl.u32 %v810, 7
    %v812 = vsub.s32 2, %v811
    %v813 = vrot.slane %v685, %v812
    %815 = vbcast.lane.b32.xlu0 %v813, 256
    %v816 = vpop.permute.xlu0 %815
    %v817 = vlaneseq
    %v818 = vshrl.u32 %v817, 7
    %v819 = vsub.s32 3, %v818
    %v820 = vrot.slane %v685, %v819
    %822 = vbcast.lane.b32.xlu0 %v820, 256
    %v823 = vpop.permute.xlu0 %822
    %v824 = vmul.f32 %v760, %v774
    %v825 = vmul.f32 %v761, %v781
    %v826 = vmul.f32 %v762, %v788
    %v827 = vmul.f32 %v763, %v795
    %v828 = vmul.f32 %v764, %v802
    %v829 = vmul.f32 %v765, %v809
    %v830 = vmul.f32 %v766, %v816
    %v831 = vmul.f32 %v767, %v823
    %v832 = vrot.slane %v824, 4
    %v833 = vadd.f32 %v824, %v832
    %v834 = vrot.slane %v833, 2
    %v835 = vadd.f32 %v833, %v834
    %v836 = vrot.slane %v835, 1
    %v837 = vadd.f32 %v835, %v836
    %v838 = vrot.slane %v825, 4
    %v839 = vadd.f32 %v825, %v838
    %v840 = vrot.slane %v839, 2
    %v841 = vadd.f32 %v839, %v840
    %v842 = vrot.slane %v841, 1
    %v843 = vadd.f32 %v841, %v842
    %v844 = vrot.slane %v826, 4
    %v845 = vadd.f32 %v826, %v844
    %v846 = vrot.slane %v845, 2
    %v847 = vadd.f32 %v845, %v846
    %v848 = vrot.slane %v847, 1
    %v849 = vadd.f32 %v847, %v848
    %v850 = vrot.slane %v827, 4
    %v851 = vadd.f32 %v827, %v850
    %v852 = vrot.slane %v851, 2
    %v853 = vadd.f32 %v851, %v852
    %v854 = vrot.slane %v853, 1
    %v855 = vadd.f32 %v853, %v854
    %v856 = vrot.slane %v828, 4
    %v857 = vadd.f32 %v828, %v856
    %v858 = vrot.slane %v857, 2
    %v859 = vadd.f32 %v857, %v858
    %v860 = vrot.slane %v859, 1
    %v861 = vadd.f32 %v859, %v860
    %v862 = vrot.slane %v829, 4
    %v863 = vadd.f32 %v829, %v862
    %v864 = vrot.slane %v863, 2
    %v865 = vadd.f32 %v863, %v864
    %v866 = vrot.slane %v865, 1
    %v867 = vadd.f32 %v865, %v866
    %v868 = vrot.slane %v830, 4
    %v869 = vadd.f32 %v830, %v868
    %v870 = vrot.slane %v869, 2
    %v871 = vadd.f32 %v869, %v870
    %v872 = vrot.slane %v871, 1
    %v873 = vadd.f32 %v871, %v872
    %v874 = vrot.slane %v831, 4
    %v875 = vadd.f32 %v831, %v874
    %v876 = vrot.slane %v875, 2
    %v877 = vadd.f32 %v875, %v876
    %v878 = vrot.slane %v877, 1
    %v879 = vadd.f32 %v877, %v878
    %vm888 = vcmask 1041409
    %v889 = vsel %vm888, %v843, %v837
    %vm890 = vcmask 1042434
    %v891 = vsel %vm890, %v849, %v889
    %vm892 = vcmask 1043459
    %v893 = vsel %vm892, %v855, %v891
    %vm894 = vcmask 1044484
    %v895 = vsel %vm894, %v861, %v893
    %vm896 = vcmask 1045509
    %v897 = vsel %vm896, %v867, %v895
    %vm898 = vcmask 1046534
    %v899 = vsel %vm898, %v873, %v897
    %vm900 = vcmask 1047559
    %v901 = vsel %vm900, %v879, %v899
    %903 = vadd.xlane.f32.xlu0 %v901
    %v904 = vpop.xlane.xlu0 %903
    %v905 = vmax.f32 %v904, 1.0
    %v906 = vpack.c.bf16 %v837, %v837
    %v907 = vpack.c.bf16 %v843, %v843
    %v908 = vpack.c.bf16 %v849, %v849
    %v909 = vpack.c.bf16 %v855, %v855
    %v910 = vpack.c.bf16 %v861, %v861
    %v911 = vpack.c.bf16 %v867, %v867
    %v912 = vpack.c.bf16 %v873, %v873
    %v913 = vpack.c.bf16 %v879, %v879
    %v914 = vld [vmem:[%s3] sm:$0xf]
    %v915 = vld [vmem:[%s3 + $0x4] sm:$0xf]
    %v916 = vld [vmem:[%s3 + $0x8] sm:$0xf]
    %v917 = vld [vmem:[%s3 + $0xc] sm:$0xf]
    %v918 = vld [vmem:[%s3 + $0x10] sm:$0xf]
    %v919 = vld [vmem:[%s3 + $0x14] sm:$0xf]
    %v920 = vld [vmem:[%s3 + $0x18] sm:$0xf]
    %v921 = vld [vmem:[%s3 + $0x1c] sm:$0xf]
    %v922 = vld [vmem:[%s3 + $0x20] sm:$0xf]
    %v923 = vld [vmem:[%s3 + $0x24] sm:$0xf]
    %v924 = vld [vmem:[%s3 + $0x28] sm:$0xf]
    %v925 = vld [vmem:[%s3 + $0x2c] sm:$0xf]
    %v926 = vld [vmem:[%s3 + $0x30] sm:$0xf]
    %v927 = vld [vmem:[%s3 + $0x34] sm:$0xf]
    %v928 = vld [vmem:[%s3 + $0x38] sm:$0xf]
    %v929 = vld [vmem:[%s3 + $0x3c] sm:$0xf]
    %v938 = vunpack.c.l.b16 %v906
    %v939 = vunpack.c.l.b16 %v907
    %v940 = vunpack.c.l.b16 %v908
    %v941 = vunpack.c.l.b16 %v909
    %v942 = vunpack.c.l.b16 %v910
    %v943 = vunpack.c.l.b16 %v911
    %v944 = vunpack.c.l.b16 %v912
    %v945 = vunpack.c.l.b16 %v913
    %v946 = vsel %vm888, %v939, %v938
    %v947 = vsel %vm890, %v940, %v946
    %v948 = vsel %vm892, %v941, %v947
    %v949 = vsel %vm894, %v942, %v948
    %v950 = vsel %vm896, %v943, %v949
    %v951 = vsel %vm898, %v944, %v950
    %v952 = vsel %vm900, %v945, %v951
    %v953 = vpack.c.b16 %v952, %v952
    %v971 = vunpack.c.l.b16 %v914
    %v972 = vunpack.c.l.b16 %v915
    %v973 = vunpack.c.l.b16 %v916
    %v974 = vunpack.c.l.b16 %v917
    %v975 = vunpack.c.l.b16 %v918
    %v976 = vunpack.c.l.b16 %v919
    %v977 = vunpack.c.l.b16 %v920
    %v978 = vunpack.c.l.b16 %v921
    %v979 = vunpack.c.l.b16 %v922
    %v980 = vunpack.c.l.b16 %v923
    %v981 = vunpack.c.l.b16 %v924
    %v982 = vunpack.c.l.b16 %v925
    %v983 = vunpack.c.l.b16 %v926
    %v984 = vunpack.c.l.b16 %v927
    %v985 = vunpack.c.l.b16 %v928
    %v986 = vunpack.c.l.b16 %v929
    %v987 = vpack.c.b16 %v972, %v971
    %v988 = vpack.c.b16 %v974, %v973
    %v989 = vpack.c.b16 %v976, %v975
    %v990 = vpack.c.b16 %v978, %v977
    %v991 = vpack.c.b16 %v980, %v979
    %v992 = vpack.c.b16 %v982, %v981
    %v993 = vpack.c.b16 %v984, %v983
    %v994 = vpack.c.b16 %v986, %v985
    %1003 = vmatprep.subr.bf16.mxu0 0
    %1004 = vmatpush1.bf16.msra.mxu0 %v987
    %1005 = vmatprep.subr.bf16.mxu0 0
    %1006 = vmatpush1.bf16.msra.mxu0 %v988
    %1007 = vmatprep.subr.bf16.mxu0 0
    %1008 = vmatpush1.bf16.msra.mxu0 %v989
    %1009 = vmatprep.subr.bf16.mxu0 0
    %1010 = vmatpush1.bf16.msra.mxu0 %v990
    %1011 = vmatprep.subr.bf16.mxu0 0
    %1012 = vmatpush1.bf16.msra.mxu0 %v991
    %1013 = vmatprep.subr.bf16.mxu0 0
    %1014 = vmatpush1.bf16.msra.mxu0 %v992
    %1015 = vmatprep.subr.bf16.mxu0 0
    %1016 = vmatpush1.bf16.msra.mxu0 %v993
    %1017 = vmatprep.subr.bf16.mxu0 0
    %1018 = vmatpush1.bf16.msra.mxu0 %v994
    %1019 = vmatprep.subr.bf16.mxu0 0
    %1020 = vmatpush1.bf16.msra.mxu0 0
    %1021 = vmatprep.subr.bf16.mxu0 0
    %1022 = vmatpush1.bf16.msra.mxu0 0
    %1023 = vmatprep.subr.bf16.mxu0 0
    %1024 = vmatpush1.bf16.msra.mxu0 0
    %1025 = vmatprep.subr.bf16.mxu0 0
    %1026 = vmatpush1.bf16.msra.mxu0 0
    %1027 = vmatprep.subr.bf16.mxu0 0
    %1028 = vmatpush1.bf16.msra.mxu0 0
    %1029 = vmatprep.subr.bf16.mxu0 0
    %1030 = vmatpush1.bf16.msra.mxu0 0
    %1031 = vmatprep.subr.bf16.mxu0 0
    %1032 = vmatpush1.bf16.msra.mxu0 0
    %1033 = vmatprep.subr.bf16.mxu0 0
    %1034 = vmatpush1.bf16.msra.mxu0 0
    %1035 = vmatprep.mubr.bf16.mxu0 0
    %1036 = vmatmul.mubr.bf16.gmra.mrb[0].mxu0 %v953
    %v1037 = vpop.f32.mrb[0].mxu0
    %v1038 = vadd.f32 0.0, %v1037
    %v1039 = vpop.f32.mrb[0].mxu0
    %v1040 = vpop.f32.mrb[0].mxu0
    %v1041 = vpop.f32.mrb[0].mxu0
    %1042 = vdwg.mxu0
    %v1043 = vrcp.pop %v905
    %v1044 = vmul.f32 %v1038, %v1043
    %v1045 = vpack.c.bf16 %v1044, %v1044
    %v1046 = vld [vmem:[%s4] sm:$0xf]
    %v1047 = vld [vmem:[%s4 + $0x4] sm:$0xf]
    %v1048 = vld [vmem:[%s4 + $0x8] sm:$0xf]
    %v1049 = vld [vmem:[%s4 + $0xc] sm:$0xf]
    %v1050 = vld [vmem:[%s5] sm:$0x1]
    %v1052 = vlaneseq
    %v1053 = vshrl.u32 %v1052, 7
    %v1054 = vsub.s32 0, %v1053
    %v1055 = vrot.slane %v1050, %v1054
    %v1061 = vunpack.c.l.b16 %v1046
    %v1062 = vunpack.c.l.b16 %v1047
    %v1063 = vunpack.c.l.b16 %v1048
    %v1064 = vunpack.c.l.b16 %v1049
    %v1065 = vpack.c.b16 %v1062, %v1061
    %v1066 = vpack.c.b16 %v1064, %v1063
    %vm1069 = vcmask 261120
    %v1071 = vsel %vm1069, %v1045, 0
    %1073 = vmatprep.subr.bf16.mxu0 0
    %1074 = vmatpush1.bf16.msra.mxu0 %v1065
    %1075 = vmatprep.subr.bf16.mxu0 0
    %1076 = vmatpush1.bf16.msra.mxu0 %v1066
    %1077 = vmatprep.subr.bf16.mxu0 0
    %1078 = vmatpush1.bf16.msra.mxu0 0
    %1079 = vmatprep.subr.bf16.mxu0 0
    %1080 = vmatpush1.bf16.msra.mxu0 0
    %1081 = vmatprep.subr.bf16.mxu0 0
    %1082 = vmatpush1.bf16.msra.mxu0 0
    %1083 = vmatprep.subr.bf16.mxu0 0
    %1084 = vmatpush1.bf16.msra.mxu0 0
    %1085 = vmatprep.subr.bf16.mxu0 0
    %1086 = vmatpush1.bf16.msra.mxu0 0
    %1087 = vmatprep.subr.bf16.mxu0 0
    %1088 = vmatpush1.bf16.msra.mxu0 0
    %1089 = vmatprep.subr.bf16.mxu0 0
    %1090 = vmatpush1.bf16.msra.mxu0 0
    %1091 = vmatprep.subr.bf16.mxu0 0
    %1092 = vmatpush1.bf16.msra.mxu0 0
    %1093 = vmatprep.subr.bf16.mxu0 0
    %1094 = vmatpush1.bf16.msra.mxu0 0
    %1095 = vmatprep.subr.bf16.mxu0 0
    %1096 = vmatpush1.bf16.msra.mxu0 0
    %1097 = vmatprep.subr.bf16.mxu0 0
    %1098 = vmatpush1.bf16.msra.mxu0 0
    %1099 = vmatprep.subr.bf16.mxu0 0
    %1100 = vmatpush1.bf16.msra.mxu0 0
    %1101 = vmatprep.subr.bf16.mxu0 0
    %1102 = vmatpush1.bf16.msra.mxu0 0
    %1103 = vmatprep.subr.bf16.mxu0 0
    %1104 = vmatpush1.bf16.msra.mxu0 0
    %1105 = vmatprep.mubr.bf16.mxu0 0
    %1106 = vmatmul.mubr.bf16.gmra.mrb[0].mxu0 %v1071
    %v1107 = vpop.f32.mrb[0].mxu0
    %v1108 = vadd.f32 %v1055, %v1107
    %v1109 = vpop.f32.mrb[0].mxu0
    %v1110 = vpop.f32.mrb[0].mxu0
    %v1111 = vpop.f32.mrb[0].mxu0
    %1112 = vdwg.mxu0
    %v1113 = vtanh.pop %v1108
    %v1114 = vld [vmem:[%s2] sm:$0x1]
    %v1115 = vlaneseq
    %v1116 = vshrl.u32 %v1115, 7
    %v1117 = vsub.s32 0, %v1116
    %v1118 = vrot.slane %v1114, %v1117
    %vm1119 = vcmp.eq.s32.totalorder %v682, %v1118
    %vm1120 = vcmp.eq.s32.totalorder %v683, %v1118
    %v1121 = vsel %vm1119, 1, 0
    %v1122 = vsel %vm1120, 1, 0
    %v1123 = vcvt.s32.f32 %v1121
    %v1124 = vcvt.s32.f32 %v1122
    %vm1125 = vcmask 60416
    %v1126 = vsel %vm1125, %v1123, inf
    %1127 = vmin.xlane.f32.xlu0 %v1126
    %v1128 = vpop.xlane.xlu0 %1127
    %v1129 = vsel %vm1125, %v1124, inf
    %1130 = vmin.xlane.f32.xlu0 %v1129
    %v1131 = vpop.xlane.xlu0 %1130
    %v1132 = vmul.f32 %v1128, -1e+09
    %v1133 = vmul.f32 %v1131, -1e+09
    %v1134 = vpack.c.bf16 %v1113, %v1113
    %v1135 = vld [vmem:[%s6] sm:$0xf]
    %v1136 = vld [vmem:[%s6 + $0x4] sm:$0xf]
    %v1137 = vld [vmem:[%s6 + $0x8] sm:$0xf]
    %v1138 = vld [vmem:[%s6 + $0xc] sm:$0xf]
    %v1139 = vld [vmem:[%s7] sm:$0x1]
    %v1141 = vlaneseq
    %v1142 = vshrl.u32 %v1141, 7
    %v1143 = vsub.s32 0, %v1142
    %v1144 = vrot.slane %v1139, %v1143
    %v1150 = vunpack.c.l.b16 %v1135
    %v1151 = vunpack.c.l.b16 %v1136
    %v1152 = vunpack.c.l.b16 %v1137
    %v1153 = vunpack.c.l.b16 %v1138
    %v1154 = vpack.c.b16 %v1151, %v1150
    %v1155 = vpack.c.b16 %v1153, %v1152
    %v1159 = vsel %vm1069, %v1134, 0
    %1161 = vmatprep.subr.bf16.mxu0 0
    %1162 = vmatpush1.bf16.msra.mxu0 %v1154
    %1163 = vmatprep.subr.bf16.mxu0 0
    %1164 = vmatpush1.bf16.msra.mxu0 %v1155
    %1165 = vmatprep.subr.bf16.mxu0 0
    %1166 = vmatpush1.bf16.msra.mxu0 0
    %1167 = vmatprep.subr.bf16.mxu0 0
    %1168 = vmatpush1.bf16.msra.mxu0 0
    %1169 = vmatprep.subr.bf16.mxu0 0
    %1170 = vmatpush1.bf16.msra.mxu0 0
    %1171 = vmatprep.subr.bf16.mxu0 0
    %1172 = vmatpush1.bf16.msra.mxu0 0
    %1173 = vmatprep.subr.bf16.mxu0 0
    %1174 = vmatpush1.bf16.msra.mxu0 0
    %1175 = vmatprep.subr.bf16.mxu0 0
    %1176 = vmatpush1.bf16.msra.mxu0 0
    %1177 = vmatprep.subr.bf16.mxu0 0
    %1178 = vmatpush1.bf16.msra.mxu0 0
    %1179 = vmatprep.subr.bf16.mxu0 0
    %1180 = vmatpush1.bf16.msra.mxu0 0
    %1181 = vmatprep.subr.bf16.mxu0 0
    %1182 = vmatpush1.bf16.msra.mxu0 0
    %1183 = vmatprep.subr.bf16.mxu0 0
    %1184 = vmatpush1.bf16.msra.mxu0 0
    %1185 = vmatprep.subr.bf16.mxu0 0
    %1186 = vmatpush1.bf16.msra.mxu0 0
    %1187 = vmatprep.subr.bf16.mxu0 0
    %1188 = vmatpush1.bf16.msra.mxu0 0
    %1189 = vmatprep.subr.bf16.mxu0 0
    %1190 = vmatpush1.bf16.msra.mxu0 0
    %1191 = vmatprep.subr.bf16.mxu0 0
    %1192 = vmatpush1.bf16.msra.mxu0 0
    %1193 = vmatprep.mubr.bf16.mxu0 0
    %1194 = vmatmul.mubr.bf16.gmra.mrb[0].mxu0 %v1159
    %v1195 = vpop.f32.mrb[0].mxu0
    %v1196 = vadd.f32 %v1144, %v1195
    %v1197 = vpop.f32.mrb[0].mxu0
    %v1198 = vpop.f32.mrb[0].mxu0
    %v1199 = vpop.f32.mrb[0].mxu0
    %1200 = vdwg.mxu0
    %v1202 = vcombine.high %v1196, %v1196
    %v1204 = vunpack.c.l.s4 1966171168
    %v1205 = vunpack.c.0.s8 %v1204
    %v1206 = vlaneseq
    %v1207 = vshrl.u32 %v1206, 7
    %v1208 = vsub.s32 %v1205, %v1207
    %v1209 = vrot.slane %v1196, %v1208
    %v1211 = vunpack.c.l.s4 1966171168
    %v1212 = vunpack.c.0.s8 %v1211
    %v1213 = vlaneseq
    %v1214 = vshrl.u32 %v1213, 7
    %v1215 = vsub.s32 %v1212, %v1214
    %v1216 = vrot.slane %v1202, %v1215
    %v1217 = vcombine.high %v1209, %v1209
    %v1218 = vcombine.high %v1216, %v1216
    %v1220 = vunpack.c.l.s4 1966171168
    %v1221 = vunpack.c.0.s8 %v1220
    %v1222 = vlaneseq
    %v1223 = vshrl.u32 %v1222, 7
    %v1224 = vsub.s32 %v1221, %v1223
    %v1225 = vrot.slane %v1209, %v1224
    %v1227 = vunpack.c.l.s4 1966171168
    %v1228 = vunpack.c.0.s8 %v1227
    %v1229 = vlaneseq
    %v1230 = vshrl.u32 %v1229, 7
    %v1231 = vsub.s32 %v1228, %v1230
    %v1232 = vrot.slane %v1216, %v1231
    %v1234 = vunpack.c.l.s4 1966171168
    %v1235 = vunpack.c.0.s8 %v1234
    %v1236 = vlaneseq
    %v1237 = vshrl.u32 %v1236, 7
    %v1238 = vsub.s32 %v1235, %v1237
    %v1239 = vrot.slane %v1217, %v1238
    %v1241 = vunpack.c.l.s4 1966171168
    %v1242 = vunpack.c.0.s8 %v1241
    %v1243 = vlaneseq
    %v1244 = vshrl.u32 %v1243, 7
    %v1245 = vsub.s32 %v1242, %v1244
    %v1246 = vrot.slane %v1218, %v1245
    %v1247 = vcombine.high %v1225, %v1225
    %v1248 = vcombine.high %v1232, %v1232
    %v1249 = vcombine.high %v1239, %v1239
    %v1250 = vcombine.high %v1246, %v1246
    %v1251 = vlaneseq
    %v1252 = vshrl.u32 %v1251, 7
    %v1253 = vsub.s32 0, %v1252
    %v1254 = vrot.slane %v1225, %v1253
    %v1255 = vlaneseq
    %v1256 = vshrl.u32 %v1255, 7
    %v1257 = vsub.s32 0, %v1256
    %v1258 = vrot.slane %v1239, %v1257
    %v1259 = vlaneseq
    %v1260 = vshrl.u32 %v1259, 7
    %v1261 = vsub.s32 0, %v1260
    %v1262 = vrot.slane %v1247, %v1261
    %v1263 = vlaneseq
    %v1264 = vshrl.u32 %v1263, 7
    %v1265 = vsub.s32 0, %v1264
    %v1266 = vrot.slane %v1249, %v1265
    %v1267 = vlaneseq
    %v1268 = vshrl.u32 %v1267, 7
    %v1269 = vsub.s32 0, %v1268
    %v1270 = vrot.slane %v1232, %v1269
    %v1271 = vlaneseq
    %v1272 = vshrl.u32 %v1271, 7
    %v1273 = vsub.s32 0, %v1272
    %v1274 = vrot.slane %v1246, %v1273
    %v1275 = vlaneseq
    %v1276 = vshrl.u32 %v1275, 7
    %v1277 = vsub.s32 0, %v1276
    %v1278 = vrot.slane %v1248, %v1277
    %v1279 = vlaneseq
    %v1280 = vshrl.u32 %v1279, 7
    %v1281 = vsub.s32 0, %v1280
    %v1282 = vrot.slane %v1250, %v1281
    %1291 = vrot.lane.b32.xlu0 %v1196, 96
    %v1292 = vpop.permute.xlu0 %1291
    %1293 = vrot.lane.b32.xlu0 %v1202, 96
    %v1294 = vpop.permute.xlu0 %1293
    %v1297 = vmul.f32 %v1254, %v1292
    %v1298 = vmul.f32 %v1258, %v1292
    %v1299 = vmul.f32 %v1262, %v1292
    %v1300 = vmul.f32 %v1266, %v1292
    %v1301 = vmul.f32 %v1270, %v1294
    %v1302 = vmul.f32 %v1274, %v1294
    %v1303 = vmul.f32 %v1278, %v1294
    %v1304 = vmul.f32 %v1282, %v1294
    %v1313 = vcombine.low %v1297, %v1298
    %v1314 = vcombine.low %v1299, %v1300
    %v1315 = vcombine.low %v1301, %v1302
    %v1316 = vcombine.low %v1303, %v1304
    %v1321 = vpack.c.bf16 %v1314, %v1313
    %v1322 = vpack.c.bf16 %v1316, %v1315
    %v1323 = vld [vmem:[%s8] sm:$0xf]
    %v1324 = vld [vmem:[%s8 + $0x4] sm:$0xf]
    %v1325 = vld [vmem:[%s8 + $0x8] sm:$0xf]
    %v1326 = vld [vmem:[%s8 + $0xc] sm:$0xf]
    %v1331 = vunpack.c.l.b16 %v1323
    %v1332 = vunpack.c.l.b16 %v1324
    %v1333 = vunpack.c.l.b16 %v1325
    %v1334 = vunpack.c.l.b16 %v1326
    %v1335 = vpack.c.b16 %v1332, %v1331
    %v1336 = vpack.c.b16 %v1334, %v1333
    %v1340 = vsel %vm1069, %v1321, 0
    %v1343 = vsel %vm1069, %v1322, 0
    %1345 = vmatprep.subr.bf16.mxu0 0
    %1346 = vmatpush1.bf16.msra.mxu0 %v1335
    %1347 = vmatprep.subr.bf16.mxu0 0
    %1348 = vmatpush1.bf16.msra.mxu0 %v1336
    %1349 = vmatprep.subr.bf16.mxu0 0
    %1350 = vmatpush1.bf16.msra.mxu0 0
    %1351 = vmatprep.subr.bf16.mxu0 0
    %1352 = vmatpush1.bf16.msra.mxu0 0
    %1353 = vmatprep.subr.bf16.mxu0 0
    %1354 = vmatpush1.bf16.msra.mxu0 0
    %1355 = vmatprep.subr.bf16.mxu0 0
    %1356 = vmatpush1.bf16.msra.mxu0 0
    %1357 = vmatprep.subr.bf16.mxu0 0
    %1358 = vmatpush1.bf16.msra.mxu0 0
    %1359 = vmatprep.subr.bf16.mxu0 0
    %1360 = vmatpush1.bf16.msra.mxu0 0
    %1361 = vmatprep.subr.bf16.mxu0 0
    %1362 = vmatpush1.bf16.msra.mxu0 0
    %1363 = vmatprep.subr.bf16.mxu0 0
    %1364 = vmatpush1.bf16.msra.mxu0 0
    %1365 = vmatprep.subr.bf16.mxu0 0
    %1366 = vmatpush1.bf16.msra.mxu0 0
    %1367 = vmatprep.subr.bf16.mxu0 0
    %1368 = vmatpush1.bf16.msra.mxu0 0
    %1369 = vmatprep.subr.bf16.mxu0 0
    %1370 = vmatpush1.bf16.msra.mxu0 0
    %1371 = vmatprep.subr.bf16.mxu0 0
    %1372 = vmatpush1.bf16.msra.mxu0 0
    %1373 = vmatprep.subr.bf16.mxu0 0
    %1374 = vmatpush1.bf16.msra.mxu0 0
    %1375 = vmatprep.subr.bf16.mxu0 0
    %1376 = vmatpush1.bf16.msra.mxu0 0
    %1377 = vmatprep.mubr.bf16.mxu0 0
    %1378 = vmatmul.mubr.bf16.gmra.mrb[0].mxu0 %v1340
    %v1379 = vpop.f32.mrb[0].mxu0
    %v1380 = vadd.f32 0.0, %v1379
    %v1381 = vpop.f32.mrb[0].mxu0
    %v1382 = vpop.f32.mrb[0].mxu0
    %v1383 = vadd.f32 0.0, %v1382
    %v1384 = vpop.f32.mrb[0].mxu0
    %1385 = vmatprep.mubr.bf16.mxu0 0
    %1386 = vmatmul.mubr.bf16.gmra.mrb[0].mxu0 %v1343
    %v1387 = vpop.f32.mrb[0].mxu0
    %v1388 = vadd.f32 0.0, %v1387
    %v1389 = vpop.f32.mrb[0].mxu0
    %v1390 = vpop.f32.mrb[0].mxu0
    %v1391 = vadd.f32 0.0, %v1390
    %v1392 = vpop.f32.mrb[0].mxu0
    %1393 = vdwg.mxu0
    %v1398 = vcombine.high %v1380, %v1380
    %v1399 = vcombine.high %v1383, %v1383
    %v1400 = vcombine.high %v1388, %v1388
    %v1401 = vcombine.high %v1391, %v1391
    %v1406 = vmul.f32 %v1380, 0.35355338
    %v1407 = vmul.f32 %v1398, 0.35355338
    %v1408 = vmul.f32 %v1383, 0.35355338
    %v1409 = vmul.f32 %v1399, 0.35355338
    %v1410 = vmul.f32 %v1388, 0.35355338
    %v1411 = vmul.f32 %v1400, 0.35355338
    %v1412 = vmul.f32 %v1391, 0.35355338
    %v1413 = vmul.f32 %v1401, 0.35355338
    %v1414 = vadd.f32 %v1406, %v1132
    %v1415 = vadd.f32 %v1407, %v1132
    %v1416 = vadd.f32 %v1408, %v1132
    %v1417 = vadd.f32 %v1409, %v1132
    %v1418 = vadd.f32 %v1410, %v1133
    %v1419 = vadd.f32 %v1411, %v1133
    %v1420 = vadd.f32 %v1412, %v1133
    %v1421 = vadd.f32 %v1413, %v1133
    %vm1422 = vcmask 27648
    %v1423 = vsel %vm1422, %v1414, -inf
    %v1424 = vrot.slane %v1423, 4
    %v1425 = vmax.f32 %v1423, %v1424
    %v1426 = vrot.slane %v1425, 2
    %v1427 = vmax.f32 %v1425, %v1426
    %v1428 = vrot.slane %v1427, 1
    %v1429 = vmax.f32 %v1427, %v1428
    %v1430 = vsel %vm1422, %v1415, -inf
    %v1431 = vrot.slane %v1430, 4
    %v1432 = vmax.f32 %v1430, %v1431
    %v1433 = vrot.slane %v1432, 2
    %v1434 = vmax.f32 %v1432, %v1433
    %v1435 = vrot.slane %v1434, 1
    %v1436 = vmax.f32 %v1434, %v1435
    %v1437 = vsel %vm1422, %v1416, -inf
    %v1438 = vrot.slane %v1437, 4
    %v1439 = vmax.f32 %v1437, %v1438
    %v1440 = vrot.slane %v1439, 2
    %v1441 = vmax.f32 %v1439, %v1440
    %v1442 = vrot.slane %v1441, 1
    %v1443 = vmax.f32 %v1441, %v1442
    %v1444 = vsel %vm1422, %v1417, -inf
    %v1445 = vrot.slane %v1444, 4
    %v1446 = vmax.f32 %v1444, %v1445
    %v1447 = vrot.slane %v1446, 2
    %v1448 = vmax.f32 %v1446, %v1447
    %v1449 = vrot.slane %v1448, 1
    %v1450 = vmax.f32 %v1448, %v1449
    %v1451 = vsel %vm1422, %v1418, -inf
    %v1452 = vrot.slane %v1451, 4
    %v1453 = vmax.f32 %v1451, %v1452
    %v1454 = vrot.slane %v1453, 2
    %v1455 = vmax.f32 %v1453, %v1454
    %v1456 = vrot.slane %v1455, 1
    %v1457 = vmax.f32 %v1455, %v1456
    %v1458 = vsel %vm1422, %v1419, -inf
    %v1459 = vrot.slane %v1458, 4
    %v1460 = vmax.f32 %v1458, %v1459
    %v1461 = vrot.slane %v1460, 2
    %v1462 = vmax.f32 %v1460, %v1461
    %v1463 = vrot.slane %v1462, 1
    %v1464 = vmax.f32 %v1462, %v1463
    %v1465 = vsel %vm1422, %v1420, -inf
    %v1466 = vrot.slane %v1465, 4
    %v1467 = vmax.f32 %v1465, %v1466
    %v1468 = vrot.slane %v1467, 2
    %v1469 = vmax.f32 %v1467, %v1468
    %v1470 = vrot.slane %v1469, 1
    %v1471 = vmax.f32 %v1469, %v1470
    %v1472 = vsel %vm1422, %v1421, -inf
    %v1473 = vrot.slane %v1472, 4
    %v1474 = vmax.f32 %v1472, %v1473
    %v1475 = vrot.slane %v1474, 2
    %v1476 = vmax.f32 %v1474, %v1475
    %v1477 = vrot.slane %v1476, 1
    %v1478 = vmax.f32 %v1476, %v1477
    %v1479 = vsub.f32 %v1414, %v1429
    %v1480 = vsub.f32 %v1415, %v1436
    %v1481 = vsub.f32 %v1416, %v1443
    %v1482 = vsub.f32 %v1417, %v1450
    %v1483 = vsub.f32 %v1418, %v1457
    %v1484 = vsub.f32 %v1419, %v1464
    %v1485 = vsub.f32 %v1420, %v1471
    %v1486 = vsub.f32 %v1421, %v1478
    %v1487 = vmul.f32 %v1479, 1.442695
    %v1488 = vpow.pop %v1487
    %v1489 = vmul.f32 %v1480, 1.442695
    %v1490 = vpow.pop %v1489
    %v1491 = vmul.f32 %v1481, 1.442695
    %v1492 = vpow.pop %v1491
    %v1493 = vmul.f32 %v1482, 1.442695
    %v1494 = vpow.pop %v1493
    %v1495 = vmul.f32 %v1483, 1.442695
    %v1496 = vpow.pop %v1495
    %v1497 = vmul.f32 %v1484, 1.442695
    %v1498 = vpow.pop %v1497
    %v1499 = vmul.f32 %v1485, 1.442695
    %v1500 = vpow.pop %v1499
    %v1501 = vmul.f32 %v1486, 1.442695
    %v1502 = vpow.pop %v1501
    %v1503 = vsel %vm1422, %v1488, 0.0
    %v1504 = vrot.slane %v1503, 4
    %v1505 = vadd.f32 %v1503, %v1504
    %v1506 = vrot.slane %v1505, 2
    %v1507 = vadd.f32 %v1505, %v1506
    %v1508 = vrot.slane %v1507, 1
    %v1509 = vadd.f32 %v1507, %v1508
    %v1510 = vsel %vm1422, %v1490, 0.0
    %v1511 = vrot.slane %v1510, 4
    %v1512 = vadd.f32 %v1510, %v1511
    %v1513 = vrot.slane %v1512, 2
    %v1514 = vadd.f32 %v1512, %v1513
    %v1515 = vrot.slane %v1514, 1
    %v1516 = vadd.f32 %v1514, %v1515
    %v1517 = vsel %vm1422, %v1492, 0.0
    %v1518 = vrot.slane %v1517, 4
    %v1519 = vadd.f32 %v1517, %v1518
    %v1520 = vrot.slane %v1519, 2
    %v1521 = vadd.f32 %v1519, %v1520
    %v1522 = vrot.slane %v1521, 1
    %v1523 = vadd.f32 %v1521, %v1522
    %v1524 = vsel %vm1422, %v1494, 0.0
    %v1525 = vrot.slane %v1524, 4
    %v1526 = vadd.f32 %v1524, %v1525
    %v1527 = vrot.slane %v1526, 2
    %v1528 = vadd.f32 %v1526, %v1527
    %v1529 = vrot.slane %v1528, 1
    %v1530 = vadd.f32 %v1528, %v1529
    %v1531 = vsel %vm1422, %v1496, 0.0
    %v1532 = vrot.slane %v1531, 4
    %v1533 = vadd.f32 %v1531, %v1532
    %v1534 = vrot.slane %v1533, 2
    %v1535 = vadd.f32 %v1533, %v1534
    %v1536 = vrot.slane %v1535, 1
    %v1537 = vadd.f32 %v1535, %v1536
    %v1538 = vsel %vm1422, %v1498, 0.0
    %v1539 = vrot.slane %v1538, 4
    %v1540 = vadd.f32 %v1538, %v1539
    %v1541 = vrot.slane %v1540, 2
    %v1542 = vadd.f32 %v1540, %v1541
    %v1543 = vrot.slane %v1542, 1
    %v1544 = vadd.f32 %v1542, %v1543
    %v1545 = vsel %vm1422, %v1500, 0.0
    %v1546 = vrot.slane %v1545, 4
    %v1547 = vadd.f32 %v1545, %v1546
    %v1548 = vrot.slane %v1547, 2
    %v1549 = vadd.f32 %v1547, %v1548
    %v1550 = vrot.slane %v1549, 1
    %v1551 = vadd.f32 %v1549, %v1550
    %v1552 = vsel %vm1422, %v1502, 0.0
    %v1553 = vrot.slane %v1552, 4
    %v1554 = vadd.f32 %v1552, %v1553
    %v1555 = vrot.slane %v1554, 2
    %v1556 = vadd.f32 %v1554, %v1555
    %v1557 = vrot.slane %v1556, 1
    %v1558 = vadd.f32 %v1556, %v1557
    %v1559 = vrcp.pop %v1509
    %v1560 = vrcp.pop %v1516
    %v1561 = vrcp.pop %v1523
    %v1562 = vrcp.pop %v1530
    %v1563 = vrcp.pop %v1537
    %v1564 = vrcp.pop %v1544
    %v1565 = vrcp.pop %v1551
    %v1566 = vrcp.pop %v1558
    %v1567 = vmul.f32 %v1488, %v1559
    %v1568 = vmul.f32 %v1490, %v1560
    %v1569 = vmul.f32 %v1492, %v1561
    %v1570 = vmul.f32 %v1494, %v1562
    %v1571 = vmul.f32 %v1496, %v1563
    %v1572 = vmul.f32 %v1498, %v1564
    %v1573 = vmul.f32 %v1500, %v1565
    %v1574 = vmul.f32 %v1502, %v1566
    %v1583 = vcombine.low %v1567, %v1568
    %v1584 = vcombine.low %v1569, %v1570
    %v1585 = vcombine.low %v1571, %v1572
    %v1586 = vcombine.low %v1573, %v1574
    %v1591 = vpack.c.bf16 %v1584, %v1583
    %v1592 = vpack.c.bf16 %v1586, %v1585
    %v1593 = vld [vmem:[%s9] sm:$0x3]
    %vm1594 = vcmask 31744
    %v1596 = vsel %vm1594, %v1591, 0
    %v1599 = vsel %vm1594, %v1592, 0
    %vm1601 = vcmask 1041408
    %v1603 = vsel %vm1601, %v1593, 0
    %1605 = vmatprep.subr.bf16.mxu0 0
    %1606 = vmatpush1.bf16.msra.mxu0 %v1603
    %1607 = vmatprep.subr.bf16.mxu0 0
    %1608 = vmatpush1.bf16.msra.mxu0 0
    %1609 = vmatprep.subr.bf16.mxu0 0
    %1610 = vmatpush1.bf16.msra.mxu0 0
    %1611 = vmatprep.subr.bf16.mxu0 0
    %1612 = vmatpush1.bf16.msra.mxu0 0
    %1613 = vmatprep.subr.bf16.mxu0 0
    %1614 = vmatpush1.bf16.msra.mxu0 0
    %1615 = vmatprep.subr.bf16.mxu0 0
    %1616 = vmatpush1.bf16.msra.mxu0 0
    %1617 = vmatprep.subr.bf16.mxu0 0
    %1618 = vmatpush1.bf16.msra.mxu0 0
    %1619 = vmatprep.subr.bf16.mxu0 0
    %1620 = vmatpush1.bf16.msra.mxu0 0
    %1621 = vmatprep.subr.bf16.mxu0 0
    %1622 = vmatpush1.bf16.msra.mxu0 0
    %1623 = vmatprep.subr.bf16.mxu0 0
    %1624 = vmatpush1.bf16.msra.mxu0 0
    %1625 = vmatprep.subr.bf16.mxu0 0
    %1626 = vmatpush1.bf16.msra.mxu0 0
    %1627 = vmatprep.subr.bf16.mxu0 0
    %1628 = vmatpush1.bf16.msra.mxu0 0
    %1629 = vmatprep.subr.bf16.mxu0 0
    %1630 = vmatpush1.bf16.msra.mxu0 0
    %1631 = vmatprep.subr.bf16.mxu0 0
    %1632 = vmatpush1.bf16.msra.mxu0 0
    %1633 = vmatprep.subr.bf16.mxu0 0
    %1634 = vmatpush1.bf16.msra.mxu0 0
    %1635 = vmatprep.subr.bf16.mxu0 0
    %1636 = vmatpush1.bf16.msra.mxu0 0
    %1637 = vmatprep.mubr.bf16.mxu0 0
    %1638 = vmatmul.mubr.bf16.gmra.mrb[0].mxu0 %v1596
    %v1639 = vpop.f32.mrb[0].mxu0
    %v1640 = vadd.f32 0.0, %v1639
    %v1641 = vpop.f32.mrb[0].mxu0
    %v1642 = vpop.f32.mrb[0].mxu0
    %v1643 = vadd.f32 0.0, %v1642
    %v1644 = vpop.f32.mrb[0].mxu0
    %1645 = vmatprep.mubr.bf16.mxu0 0
    %1646 = vmatmul.mubr.bf16.gmra.mrb[0].mxu0 %v1599
    %v1647 = vpop.f32.mrb[0].mxu0
    %v1648 = vadd.f32 0.0, %v1647
    %v1649 = vpop.f32.mrb[0].mxu0
    %v1650 = vpop.f32.mrb[0].mxu0
    %v1651 = vadd.f32 0.0, %v1650
    %v1652 = vpop.f32.mrb[0].mxu0
    %1653 = vdwg.mxu0
    %v1658 = vcombine.high %v1640, %v1640
    %v1659 = vcombine.high %v1643, %v1643
    %v1660 = vcombine.high %v1648, %v1648
    %v1661 = vcombine.high %v1651, %v1651
    %1666 = vrot.lane.b32.xlu0 %v1196, 64
    %v1667 = vpop.permute.xlu0 %1666
    %1668 = vrot.lane.b32.xlu0 %v1202, 64
    %v1669 = vpop.permute.xlu0 %1668
    %v1672 = vmul.f32 %v1640, %v1667
    %v1673 = vmul.f32 %v1658, %v1667
    %v1674 = vmul.f32 %v1643, %v1667
    %v1675 = vmul.f32 %v1659, %v1667
    %v1676 = vmul.f32 %v1648, %v1669
    %v1677 = vmul.f32 %v1660, %v1669
    %v1678 = vmul.f32 %v1651, %v1669
    %v1679 = vmul.f32 %v1661, %v1669
    %vm1680 = vcmask 257024
    %v1681 = vsel %vm1680, %v1672, 0.0
    %v1682 = vrot.slane %v1681, 4
    %v1683 = vadd.f32 %v1681, %v1682
    %v1684 = vrot.slane %v1683, 2
    %v1685 = vadd.f32 %v1683, %v1684
    %v1686 = vrot.slane %v1685, 1
    %v1687 = vadd.f32 %v1685, %v1686
    %v1688 = vsel %vm1680, %v1673, 0.0
    %v1689 = vrot.slane %v1688, 4
    %v1690 = vadd.f32 %v1688, %v1689
    %v1691 = vrot.slane %v1690, 2
    %v1692 = vadd.f32 %v1690, %v1691
    %v1693 = vrot.slane %v1692, 1
    %v1694 = vadd.f32 %v1692, %v1693
    %v1695 = vsel %vm1680, %v1674, 0.0
    %v1696 = vrot.slane %v1695, 4
    %v1697 = vadd.f32 %v1695, %v1696
    %v1698 = vrot.slane %v1697, 2
    %v1699 = vadd.f32 %v1697, %v1698
    %v1700 = vrot.slane %v1699, 1
    %v1701 = vadd.f32 %v1699, %v1700
    %v1702 = vsel %vm1680, %v1675, 0.0
    %v1703 = vrot.slane %v1702, 4
    %v1704 = vadd.f32 %v1702, %v1703
    %v1705 = vrot.slane %v1704, 2
    %v1706 = vadd.f32 %v1704, %v1705
    %v1707 = vrot.slane %v1706, 1
    %v1708 = vadd.f32 %v1706, %v1707
    %v1709 = vsel %vm1680, %v1676, 0.0
    %v1710 = vrot.slane %v1709, 4
    %v1711 = vadd.f32 %v1709, %v1710
    %v1712 = vrot.slane %v1711, 2
    %v1713 = vadd.f32 %v1711, %v1712
    %v1714 = vrot.slane %v1713, 1
    %v1715 = vadd.f32 %v1713, %v1714
    %v1716 = vsel %vm1680, %v1677, 0.0
    %v1717 = vrot.slane %v1716, 4
    %v1718 = vadd.f32 %v1716, %v1717
    %v1719 = vrot.slane %v1718, 2
    %v1720 = vadd.f32 %v1718, %v1719
    %v1721 = vrot.slane %v1720, 1
    %v1722 = vadd.f32 %v1720, %v1721
    %v1723 = vsel %vm1680, %v1678, 0.0
    %v1724 = vrot.slane %v1723, 4
    %v1725 = vadd.f32 %v1723, %v1724
    %v1726 = vrot.slane %v1725, 2
    %v1727 = vadd.f32 %v1725, %v1726
    %v1728 = vrot.slane %v1727, 1
    %v1729 = vadd.f32 %v1727, %v1728
    %v1730 = vsel %vm1680, %v1679, 0.0
    %v1731 = vrot.slane %v1730, 4
    %v1732 = vadd.f32 %v1730, %v1731
    %v1733 = vrot.slane %v1732, 2
    %v1734 = vadd.f32 %v1732, %v1733
    %v1735 = vrot.slane %v1734, 1
    %v1736 = vadd.f32 %v1734, %v1735
    %v1737 = vpack.c.bf16 %v1687, %v1687
    %v1738 = vpack.c.bf16 %v1694, %v1694
    %v1739 = vpack.c.bf16 %v1701, %v1701
    %v1740 = vpack.c.bf16 %v1708, %v1708
    %v1741 = vpack.c.bf16 %v1715, %v1715
    %v1742 = vpack.c.bf16 %v1722, %v1722
    %v1743 = vpack.c.bf16 %v1729, %v1729
    %v1744 = vpack.c.bf16 %v1736, %v1736
    %v1745 = vld [vmem:[%s10] sm:$0xf]
    %v1746 = vld [vmem:[%s10 + $0x4] sm:$0xf]
    %v1747 = vld [vmem:[%s10 + $0x8] sm:$0xf]
    %v1748 = vld [vmem:[%s10 + $0xc] sm:$0xf]
    %v1749 = vld [vmem:[%s11] sm:$0x1]
    %v1751 = vlaneseq
    %v1752 = vshrl.u32 %v1751, 7
    %v1753 = vsub.s32 0, %v1752
    %v1754 = vrot.slane %v1749, %v1753
    %v1764 = vunpack.c.l.b16 %v1737
    %v1765 = vunpack.c.l.b16 %v1738
    %v1766 = vunpack.c.l.b16 %v1739
    %v1767 = vunpack.c.l.b16 %v1740
    %v1768 = vunpack.c.l.b16 %v1741
    %v1769 = vunpack.c.l.b16 %v1742
    %v1770 = vunpack.c.l.b16 %v1743
    %v1771 = vunpack.c.l.b16 %v1744
    %v1772 = vsel %vm888, %v1765, %v1764
    %v1773 = vsel %vm890, %v1766, %v1772
    %v1774 = vsel %vm892, %v1767, %v1773
    %v1775 = vsel %vm894, %v1768, %v1774
    %v1776 = vsel %vm896, %v1769, %v1775
    %v1777 = vsel %vm898, %v1770, %v1776
    %v1778 = vsel %vm900, %v1771, %v1777
    %v1779 = vpack.c.b16 %v1778, %v1778
    %v1784 = vunpack.c.l.b16 %v1745
    %v1785 = vunpack.c.l.b16 %v1746
    %v1786 = vunpack.c.l.b16 %v1747
    %v1787 = vunpack.c.l.b16 %v1748
    %v1788 = vpack.c.b16 %v1785, %v1784
    %v1789 = vpack.c.b16 %v1787, %v1786
    %v1793 = vsel %vm1069, %v1779, 0
    %1795 = vmatprep.subr.bf16.mxu0 0
    %1796 = vmatpush1.bf16.msra.mxu0 %v1788
    %1797 = vmatprep.subr.bf16.mxu0 0
    %1798 = vmatpush1.bf16.msra.mxu0 %v1789
    %1799 = vmatprep.subr.bf16.mxu0 0
    %1800 = vmatpush1.bf16.msra.mxu0 0
    %1801 = vmatprep.subr.bf16.mxu0 0
    %1802 = vmatpush1.bf16.msra.mxu0 0
    %1803 = vmatprep.subr.bf16.mxu0 0
    %1804 = vmatpush1.bf16.msra.mxu0 0
    %1805 = vmatprep.subr.bf16.mxu0 0
    %1806 = vmatpush1.bf16.msra.mxu0 0
    %1807 = vmatprep.subr.bf16.mxu0 0
    %1808 = vmatpush1.bf16.msra.mxu0 0
    %1809 = vmatprep.subr.bf16.mxu0 0
    %1810 = vmatpush1.bf16.msra.mxu0 0
    %1811 = vmatprep.subr.bf16.mxu0 0
    %1812 = vmatpush1.bf16.msra.mxu0 0
    %1813 = vmatprep.subr.bf16.mxu0 0
    %1814 = vmatpush1.bf16.msra.mxu0 0
    %1815 = vmatprep.subr.bf16.mxu0 0
    %1816 = vmatpush1.bf16.msra.mxu0 0
    %1817 = vmatprep.subr.bf16.mxu0 0
    %1818 = vmatpush1.bf16.msra.mxu0 0
    %1819 = vmatprep.subr.bf16.mxu0 0
    %1820 = vmatpush1.bf16.msra.mxu0 0
    %1821 = vmatprep.subr.bf16.mxu0 0
    %1822 = vmatpush1.bf16.msra.mxu0 0
    %1823 = vmatprep.subr.bf16.mxu0 0
    %1824 = vmatpush1.bf16.msra.mxu0 0
    %1825 = vmatprep.subr.bf16.mxu0 0
    %1826 = vmatpush1.bf16.msra.mxu0 0
    %1827 = vmatprep.mubr.bf16.mxu0 0
    %1828 = vmatmul.mubr.bf16.gmra.mrb[0].mxu0 %v1793
    %v1829 = vpop.f32.mrb[0].mxu0
    %v1830 = vadd.f32 %v1754, %v1829
    %v1831 = vpop.f32.mrb[0].mxu0
    %v1832 = vpop.f32.mrb[0].mxu0
    %v1833 = vpop.f32.mrb[0].mxu0
    %1834 = vdwg.mxu0
    %v1835 = vadd.f32 %v1113, %v1830
    %v1836 = vsel %vm1069, %v1835, 0.0
    %1837 = vadd.xlane.f32.xlu0 %v1836
    %v1838 = vpop.xlane.xlu0 %1837
    %v1839 = vrcp.pop 32.0
    %v1840 = vmul.f32 %v1838, %v1839
    %v1841 = vsub.f32 %v1835, %v1840
    %v1842 = vmul.f32 %v1841, %v1841
    %v1843 = vsel %vm1069, %v1842, 0.0
    %1844 = vadd.xlane.f32.xlu0 %v1843
    %v1845 = vpop.xlane.xlu0 %1844
    %v1846 = vmul.f32 %v1845, %v1839
    %v1847 = vadd.f32 %v1846, 1e-05
    %v1848 = vrsqrt.pop %v1847
    %v1849 = vmul.f32 %v1841, %v1848
    %v1850 = vld [vmem:[%s12] sm:$0x1]
    %v1852 = vlaneseq
    %v1853 = vshrl.u32 %v1852, 7
    %v1854 = vsub.s32 0, %v1853
    %v1855 = vrot.slane %v1850, %v1854
    %v1857 = vmul.f32 %v1849, %v1855
    %v1858 = vld [vmem:[%s13] sm:$0x1]
    %v1860 = vlaneseq
    %v1861 = vshrl.u32 %v1860, 7
    %v1862 = vsub.s32 0, %v1861
    %v1863 = vrot.slane %v1858, %v1862
    %v1865 = vadd.f32 %v1857, %v1863
    %s1866 = smul.u32 4, 4
    %s1867 = smul.u32 %s1866, 16
    %s1868 = sshll.u32 %s1867, 4
    %1869 = dma.done [#allocation4], %s1868
    %v1870 = vpack.c.bf16 %v1865, %v1865
    %v1871 = vld [vmem:[#allocation2] sm:$0xff]
    %v1872 = vld [vmem:[#allocation2 + $0x8] sm:$0xff]
    %v1873 = vld [vmem:[#allocation2 + $0x10] sm:$0xff]
    %v1874 = vld [vmem:[#allocation2 + $0x18] sm:$0xff]
    %v1875 = vld [vmem:[#allocation2 + $0x20] sm:$0xff]
    %v1876 = vld [vmem:[#allocation2 + $0x28] sm:$0xff]
    %v1877 = vld [vmem:[#allocation2 + $0x30] sm:$0xff]
    %v1878 = vld [vmem:[#allocation2 + $0x38] sm:$0xff]
    %v1879 = vld [vmem:[#allocation2 + $0x40] sm:$0xff]
    %v1880 = vld [vmem:[#allocation2 + $0x48] sm:$0xff]
    %v1881 = vld [vmem:[#allocation2 + $0x50] sm:$0xff]
    %v1882 = vld [vmem:[#allocation2 + $0x58] sm:$0xff]
    %v1883 = vld [vmem:[#allocation2 + $0x60] sm:$0xff]
    %v1884 = vld [vmem:[#allocation2 + $0x68] sm:$0xff]
    %v1885 = vld [vmem:[#allocation2 + $0x70] sm:$0xff]
    %v1886 = vld [vmem:[#allocation2 + $0x78] sm:$0xff]
    %v1887 = vld [vmem:[#allocation2 + $0x80] sm:$0xff]
    %v1888 = vld [vmem:[#allocation2 + $0x88] sm:$0xff]
    %v1889 = vld [vmem:[#allocation2 + $0x90] sm:$0xff]
    %v1890 = vld [vmem:[#allocation2 + $0x98] sm:$0xff]
    %v1891 = vld [vmem:[#allocation2 + $0xa0] sm:$0xff]
    %v1892 = vld [vmem:[#allocation2 + $0xa8] sm:$0xff]
    %v1893 = vld [vmem:[#allocation2 + $0xb0] sm:$0xff]
    %v1894 = vld [vmem:[#allocation2 + $0xb8] sm:$0xff]
    %v1895 = vld [vmem:[#allocation2 + $0xc0] sm:$0xff]
    %v1896 = vld [vmem:[#allocation2 + $0xc8] sm:$0xff]
    %v1897 = vld [vmem:[#allocation2 + $0xd0] sm:$0xff]
    %v1898 = vld [vmem:[#allocation2 + $0xd8] sm:$0xff]
    %v1899 = vld [vmem:[#allocation2 + $0xe0] sm:$0xff]
    %v1900 = vld [vmem:[#allocation2 + $0xe8] sm:$0xff]
    %v1901 = vld [vmem:[#allocation2 + $0xf0] sm:$0xff]
    %v1902 = vld [vmem:[#allocation2 + $0xf8] sm:$0xff]
    %v1903 = vld [vmem:[%s15] sm:$0xff]
    %v1904 = vld [vmem:[%s15 + $0x8] sm:$0xff]
    %v1907 = vlaneseq
    %v1908 = vshrl.u32 %v1907, 7
    %v1909 = vsub.s32 0, %v1908
    %v1910 = vrot.slane %v1903, %v1909
    %v1911 = vlaneseq
    %v1912 = vshrl.u32 %v1911, 7
    %v1913 = vsub.s32 1, %v1912
    %v1914 = vrot.slane %v1903, %v1913
    %v1915 = vlaneseq
    %v1916 = vshrl.u32 %v1915, 7
    %v1917 = vsub.s32 2, %v1916
    %v1918 = vrot.slane %v1903, %v1917
    %v1919 = vlaneseq
    %v1920 = vshrl.u32 %v1919, 7
    %v1921 = vsub.s32 3, %v1920
    %v1922 = vrot.slane %v1903, %v1921
    %v1923 = vlaneseq
    %v1924 = vshrl.u32 %v1923, 7
    %v1925 = vsub.s32 4, %v1924
    %v1926 = vrot.slane %v1903, %v1925
    %v1927 = vlaneseq
    %v1928 = vshrl.u32 %v1927, 7
    %v1929 = vsub.s32 5, %v1928
    %v1930 = vrot.slane %v1903, %v1929
    %v1931 = vlaneseq
    %v1932 = vshrl.u32 %v1931, 7
    %v1933 = vsub.s32 6, %v1932
    %v1934 = vrot.slane %v1903, %v1933
    %v1935 = vlaneseq
    %v1936 = vshrl.u32 %v1935, 7
    %v1937 = vsub.s32 7, %v1936
    %v1938 = vrot.slane %v1903, %v1937
    %v1939 = vlaneseq
    %v1940 = vshrl.u32 %v1939, 7
    %v1941 = vsub.s32 0, %v1940
    %v1942 = vrot.slane %v1904, %v1941
    %v1943 = vlaneseq
    %v1944 = vshrl.u32 %v1943, 7
    %v1945 = vsub.s32 1, %v1944
    %v1946 = vrot.slane %v1904, %v1945
    %v1947 = vlaneseq
    %v1948 = vshrl.u32 %v1947, 7
    %v1949 = vsub.s32 2, %v1948
    %v1950 = vrot.slane %v1904, %v1949
    %v1951 = vlaneseq
    %v1952 = vshrl.u32 %v1951, 7
    %v1953 = vsub.s32 3, %v1952
    %v1954 = vrot.slane %v1904, %v1953
    %v1955 = vlaneseq
    %v1956 = vshrl.u32 %v1955, 7
    %v1957 = vsub.s32 4, %v1956
    %v1958 = vrot.slane %v1904, %v1957
    %v1959 = vlaneseq
    %v1960 = vshrl.u32 %v1959, 7
    %v1961 = vsub.s32 5, %v1960
    %v1962 = vrot.slane %v1904, %v1961
    %v1963 = vlaneseq
    %v1964 = vshrl.u32 %v1963, 7
    %v1965 = vsub.s32 6, %v1964
    %v1966 = vrot.slane %v1904, %v1965
    %v1967 = vlaneseq
    %v1968 = vshrl.u32 %v1967, 7
    %v1969 = vsub.s32 7, %v1968
    %v1970 = vrot.slane %v1904, %v1969
    %v1988 = vsel %vm1069, %v1870, 0
    %1990 = vmatprep.subr.bf16.mxu0 %v1872
    %1991 = vmatpush1.bf16.msra.mxu0 %v1871
    %1992 = vmatprep.subr.bf16.mxu0 %v1888
    %1993 = vmatpush1.bf16.msra.mxu0 %v1887
    %1994 = vmatprep.subr.bf16.mxu0 0
    %1995 = vmatpush1.bf16.msra.mxu0 0
    %1996 = vmatprep.subr.bf16.mxu0 0
    %1997 = vmatpush1.bf16.msra.mxu0 0
    %1998 = vmatprep.subr.bf16.mxu0 0
    %1999 = vmatpush1.bf16.msra.mxu0 0
    %2000 = vmatprep.subr.bf16.mxu0 0
    %2001 = vmatpush1.bf16.msra.mxu0 0
    %2002 = vmatprep.subr.bf16.mxu0 0
    %2003 = vmatpush1.bf16.msra.mxu0 0
    %2004 = vmatprep.subr.bf16.mxu0 0
    %2005 = vmatpush1.bf16.msra.mxu0 0
    %2006 = vmatprep.subr.bf16.mxu0 0
    %2007 = vmatpush1.bf16.msra.mxu0 0
    %2008 = vmatprep.subr.bf16.mxu0 0
    %2009 = vmatpush1.bf16.msra.mxu0 0
    %2010 = vmatprep.subr.bf16.mxu0 0
    %2011 = vmatpush1.bf16.msra.mxu0 0
    %2012 = vmatprep.subr.bf16.mxu0 0
    %2013 = vmatpush1.bf16.msra.mxu0 0
    %2014 = vmatprep.subr.bf16.mxu0 0
    %2015 = vmatpush1.bf16.msra.mxu0 0
    %2016 = vmatprep.subr.bf16.mxu0 0
    %2017 = vmatpush1.bf16.msra.mxu0 0
    %2018 = vmatprep.subr.bf16.mxu0 0
    %2019 = vmatpush1.bf16.msra.mxu0 0
    %2020 = vmatprep.subr.bf16.mxu0 0
    %2021 = vmatpush1.bf16.msra.mxu0 0
    %2022 = vmatprep.mubr.bf16.mxu0 0
    %2023 = vmatmul.mubr.bf16.gmra.mrb[0].mxu0 %v1988
    %v2024 = vpop.f32.mrb[0].mxu0
    %v2025 = vadd.f32 %v1910, %v2024
    %v2026 = vpop.f32.mrb[0].mxu0
    %v2027 = vadd.f32 %v1914, %v2026
    %v2028 = vpop.f32.mrb[0].mxu0
    %v2029 = vpop.f32.mrb[0].mxu0
    %2030 = vdwg.mxu0
    %2031 = vmatprep.subr.bf16.mxu0 %v1874
    %2032 = vmatpush1.bf16.msra.mxu0 %v1873
    %2033 = vmatprep.subr.bf16.mxu0 %v1890
    %2034 = vmatpush1.bf16.msra.mxu0 %v1889
    %2035 = vmatprep.subr.bf16.mxu0 0
    %2036 = vmatpush1.bf16.msra.mxu0 0
    %2037 = vmatprep.subr.bf16.mxu0 0
    %2038 = vmatpush1.bf16.msra.mxu0 0
    %2039 = vmatprep.subr.bf16.mxu0 0
    %2040 = vmatpush1.bf16.msra.mxu0 0
    %2041 = vmatprep.subr.bf16.mxu0 0
    %2042 = vmatpush1.bf16.msra.mxu0 0
    %2043 = vmatprep.subr.bf16.mxu0 0
    %2044 = vmatpush1.bf16.msra.mxu0 0
    %2045 = vmatprep.subr.bf16.mxu0 0
    %2046 = vmatpush1.bf16.msra.mxu0 0
    %2047 = vmatprep.subr.bf16.mxu0 0
    %2048 = vmatpush1.bf16.msra.mxu0 0
    %2049 = vmatprep.subr.bf16.mxu0 0
    %2050 = vmatpush1.bf16.msra.mxu0 0
    %2051 = vmatprep.subr.bf16.mxu0 0
    %2052 = vmatpush1.bf16.msra.mxu0 0
    %2053 = vmatprep.subr.bf16.mxu0 0
    %2054 = vmatpush1.bf16.msra.mxu0 0
    %2055 = vmatprep.subr.bf16.mxu0 0
    %2056 = vmatpush1.bf16.msra.mxu0 0
    %2057 = vmatprep.subr.bf16.mxu0 0
    %2058 = vmatpush1.bf16.msra.mxu0 0
    %2059 = vmatprep.subr.bf16.mxu0 0
    %2060 = vmatpush1.bf16.msra.mxu0 0
    %2061 = vmatprep.subr.bf16.mxu0 0
    %2062 = vmatpush1.bf16.msra.mxu0 0
    %2063 = vmatprep.mubr.bf16.mxu0 0
    %2064 = vmatmul.mubr.bf16.gmra.mrb[0].mxu0 %v1988
    %v2065 = vpop.f32.mrb[0].mxu0
    %v2066 = vadd.f32 %v1918, %v2065
    %v2067 = vpop.f32.mrb[0].mxu0
    %v2068 = vadd.f32 %v1922, %v2067
    %v2069 = vpop.f32.mrb[0].mxu0
    %v2070 = vpop.f32.mrb[0].mxu0
    %2071 = vdwg.mxu0
    %2072 = vmatprep.subr.bf16.mxu0 %v1876
    %2073 = vmatpush1.bf16.msra.mxu0 %v1875
    %2074 = vmatprep.subr.bf16.mxu0 %v1892
    %2075 = vmatpush1.bf16.msra.mxu0 %v1891
    %2076 = vmatprep.subr.bf16.mxu0 0
    %2077 = vmatpush1.bf16.msra.mxu0 0
    %2078 = vmatprep.subr.bf16.mxu0 0
    %2079 = vmatpush1.bf16.msra.mxu0 0
    %2080 = vmatprep.subr.bf16.mxu0 0
    %2081 = vmatpush1.bf16.msra.mxu0 0
    %2082 = vmatprep.subr.bf16.mxu0 0
    %2083 = vmatpush1.bf16.msra.mxu0 0
    %2084 = vmatprep.subr.bf16.mxu0 0
    %2085 = vmatpush1.bf16.msra.mxu0 0
    %2086 = vmatprep.subr.bf16.mxu0 0
    %2087 = vmatpush1.bf16.msra.mxu0 0
    %2088 = vmatprep.subr.bf16.mxu0 0
    %2089 = vmatpush1.bf16.msra.mxu0 0
    %2090 = vmatprep.subr.bf16.mxu0 0
    %2091 = vmatpush1.bf16.msra.mxu0 0
    %2092 = vmatprep.subr.bf16.mxu0 0
    %2093 = vmatpush1.bf16.msra.mxu0 0
    %2094 = vmatprep.subr.bf16.mxu0 0
    %2095 = vmatpush1.bf16.msra.mxu0 0
    %2096 = vmatprep.subr.bf16.mxu0 0
    %2097 = vmatpush1.bf16.msra.mxu0 0
    %2098 = vmatprep.subr.bf16.mxu0 0
    %2099 = vmatpush1.bf16.msra.mxu0 0
    %2100 = vmatprep.subr.bf16.mxu0 0
    %2101 = vmatpush1.bf16.msra.mxu0 0
    %2102 = vmatprep.subr.bf16.mxu0 0
    %2103 = vmatpush1.bf16.msra.mxu0 0
    %2104 = vmatprep.mubr.bf16.mxu0 0
    %2105 = vmatmul.mubr.bf16.gmra.mrb[0].mxu0 %v1988
    %v2106 = vpop.f32.mrb[0].mxu0
    %v2107 = vadd.f32 %v1926, %v2106
    %v2108 = vpop.f32.mrb[0].mxu0
    %v2109 = vadd.f32 %v1930, %v2108
    %v2110 = vpop.f32.mrb[0].mxu0
    %v2111 = vpop.f32.mrb[0].mxu0
    %2112 = vdwg.mxu0
    %2113 = vmatprep.subr.bf16.mxu0 %v1878
    %2114 = vmatpush1.bf16.msra.mxu0 %v1877
    %2115 = vmatprep.subr.bf16.mxu0 %v1894
    %2116 = vmatpush1.bf16.msra.mxu0 %v1893
    %2117 = vmatprep.subr.bf16.mxu0 0
    %2118 = vmatpush1.bf16.msra.mxu0 0
    %2119 = vmatprep.subr.bf16.mxu0 0
    %2120 = vmatpush1.bf16.msra.mxu0 0
    %2121 = vmatprep.subr.bf16.mxu0 0
    %2122 = vmatpush1.bf16.msra.mxu0 0
    %2123 = vmatprep.subr.bf16.mxu0 0
    %2124 = vmatpush1.bf16.msra.mxu0 0
    %2125 = vmatprep.subr.bf16.mxu0 0
    %2126 = vmatpush1.bf16.msra.mxu0 0
    %2127 = vmatprep.subr.bf16.mxu0 0
    %2128 = vmatpush1.bf16.msra.mxu0 0
    %2129 = vmatprep.subr.bf16.mxu0 0
    %2130 = vmatpush1.bf16.msra.mxu0 0
    %2131 = vmatprep.subr.bf16.mxu0 0
    %2132 = vmatpush1.bf16.msra.mxu0 0
    %2133 = vmatprep.subr.bf16.mxu0 0
    %2134 = vmatpush1.bf16.msra.mxu0 0
    %2135 = vmatprep.subr.bf16.mxu0 0
    %2136 = vmatpush1.bf16.msra.mxu0 0
    %2137 = vmatprep.subr.bf16.mxu0 0
    %2138 = vmatpush1.bf16.msra.mxu0 0
    %2139 = vmatprep.subr.bf16.mxu0 0
    %2140 = vmatpush1.bf16.msra.mxu0 0
    %2141 = vmatprep.subr.bf16.mxu0 0
    %2142 = vmatpush1.bf16.msra.mxu0 0
    %2143 = vmatprep.subr.bf16.mxu0 0
    %2144 = vmatpush1.bf16.msra.mxu0 0
    %2145 = vmatprep.mubr.bf16.mxu0 0
    %2146 = vmatmul.mubr.bf16.gmra.mrb[0].mxu0 %v1988
    %v2147 = vpop.f32.mrb[0].mxu0
    %v2148 = vadd.f32 %v1934, %v2147
    %v2149 = vpop.f32.mrb[0].mxu0
    %v2150 = vadd.f32 %v1938, %v2149
    %v2151 = vpop.f32.mrb[0].mxu0
    %v2152 = vpop.f32.mrb[0].mxu0
    %2153 = vdwg.mxu0
    %2154 = vmatprep.subr.bf16.mxu0 %v1880
    %2155 = vmatpush1.bf16.msra.mxu0 %v1879
    %2156 = vmatprep.subr.bf16.mxu0 %v1896
    %2157 = vmatpush1.bf16.msra.mxu0 %v1895
    %2158 = vmatprep.subr.bf16.mxu0 0
    %2159 = vmatpush1.bf16.msra.mxu0 0
    %2160 = vmatprep.subr.bf16.mxu0 0
    %2161 = vmatpush1.bf16.msra.mxu0 0
    %2162 = vmatprep.subr.bf16.mxu0 0
    %2163 = vmatpush1.bf16.msra.mxu0 0
    %2164 = vmatprep.subr.bf16.mxu0 0
    %2165 = vmatpush1.bf16.msra.mxu0 0
    %2166 = vmatprep.subr.bf16.mxu0 0
    %2167 = vmatpush1.bf16.msra.mxu0 0
    %2168 = vmatprep.subr.bf16.mxu0 0
    %2169 = vmatpush1.bf16.msra.mxu0 0
    %2170 = vmatprep.subr.bf16.mxu0 0
    %2171 = vmatpush1.bf16.msra.mxu0 0
    %2172 = vmatprep.subr.bf16.mxu0 0
    %2173 = vmatpush1.bf16.msra.mxu0 0
    %2174 = vmatprep.subr.bf16.mxu0 0
    %2175 = vmatpush1.bf16.msra.mxu0 0
    %2176 = vmatprep.subr.bf16.mxu0 0
    %2177 = vmatpush1.bf16.msra.mxu0 0
    %2178 = vmatprep.subr.bf16.mxu0 0
    %2179 = vmatpush1.bf16.msra.mxu0 0
    %2180 = vmatprep.subr.bf16.mxu0 0
    %2181 = vmatpush1.bf16.msra.mxu0 0
    %2182 = vmatprep.subr.bf16.mxu0 0
    %2183 = vmatpush1.bf16.msra.mxu0 0
    %2184 = vmatprep.subr.bf16.mxu0 0
    %2185 = vmatpush1.bf16.msra.mxu0 0
    %2186 = vmatprep.mubr.bf16.mxu0 0
    %2187 = vmatmul.mubr.bf16.gmra.mrb[0].mxu0 %v1988
    %v2188 = vpop.f32.mrb[0].mxu0
    %v2189 = vadd.f32 %v1942, %v2188
    %v2190 = vpop.f32.mrb[0].mxu0
    %v2191 = vadd.f32 %v1946, %v2190
    %v2192 = vpop.f32.mrb[0].mxu0
    %v2193 = vpop.f32.mrb[0].mxu0
    %2194 = vdwg.mxu0
    %2195 = vmatprep.subr.bf16.mxu0 %v1882
    %2196 = vmatpush1.bf16.msra.mxu0 %v1881
    %2197 = vmatprep.subr.bf16.mxu0 %v1898
    %2198 = vmatpush1.bf16.msra.mxu0 %v1897
    %2199 = vmatprep.subr.bf16.mxu0 0
    %2200 = vmatpush1.bf16.msra.mxu0 0
    %2201 = vmatprep.subr.bf16.mxu0 0
    %2202 = vmatpush1.bf16.msra.mxu0 0
    %2203 = vmatprep.subr.bf16.mxu0 0
    %2204 = vmatpush1.bf16.msra.mxu0 0
    %2205 = vmatprep.subr.bf16.mxu0 0
    %2206 = vmatpush1.bf16.msra.mxu0 0
    %2207 = vmatprep.subr.bf16.mxu0 0
    %2208 = vmatpush1.bf16.msra.mxu0 0
    %2209 = vmatprep.subr.bf16.mxu0 0
    %2210 = vmatpush1.bf16.msra.mxu0 0
    %2211 = vmatprep.subr.bf16.mxu0 0
    %2212 = vmatpush1.bf16.msra.mxu0 0
    %2213 = vmatprep.subr.bf16.mxu0 0
    %2214 = vmatpush1.bf16.msra.mxu0 0
    %2215 = vmatprep.subr.bf16.mxu0 0
    %2216 = vmatpush1.bf16.msra.mxu0 0
    %2217 = vmatprep.subr.bf16.mxu0 0
    %2218 = vmatpush1.bf16.msra.mxu0 0
    %2219 = vmatprep.subr.bf16.mxu0 0
    %2220 = vmatpush1.bf16.msra.mxu0 0
    %2221 = vmatprep.subr.bf16.mxu0 0
    %2222 = vmatpush1.bf16.msra.mxu0 0
    %2223 = vmatprep.subr.bf16.mxu0 0
    %2224 = vmatpush1.bf16.msra.mxu0 0
    %2225 = vmatprep.subr.bf16.mxu0 0
    %2226 = vmatpush1.bf16.msra.mxu0 0
    %2227 = vmatprep.mubr.bf16.mxu0 0
    %2228 = vmatmul.mubr.bf16.gmra.mrb[0].mxu0 %v1988
    %v2229 = vpop.f32.mrb[0].mxu0
    %v2230 = vadd.f32 %v1950, %v2229
    %v2231 = vpop.f32.mrb[0].mxu0
    %v2232 = vadd.f32 %v1954, %v2231
    %v2233 = vpop.f32.mrb[0].mxu0
    %v2234 = vpop.f32.mrb[0].mxu0
    %2235 = vdwg.mxu0
    %2236 = vmatprep.subr.bf16.mxu0 %v1884
    %2237 = vmatpush1.bf16.msra.mxu0 %v1883
    %2238 = vmatprep.subr.bf16.mxu0 %v1900
    %2239 = vmatpush1.bf16.msra.mxu0 %v1899
    %2240 = vmatprep.subr.bf16.mxu0 0
    %2241 = vmatpush1.bf16.msra.mxu0 0
    %2242 = vmatprep.subr.bf16.mxu0 0
    %2243 = vmatpush1.bf16.msra.mxu0 0
    %2244 = vmatprep.subr.bf16.mxu0 0
    %2245 = vmatpush1.bf16.msra.mxu0 0
    %2246 = vmatprep.subr.bf16.mxu0 0
    %2247 = vmatpush1.bf16.msra.mxu0 0
    %2248 = vmatprep.subr.bf16.mxu0 0
    %2249 = vmatpush1.bf16.msra.mxu0 0
    %2250 = vmatprep.subr.bf16.mxu0 0
    %2251 = vmatpush1.bf16.msra.mxu0 0
    %2252 = vmatprep.subr.bf16.mxu0 0
    %2253 = vmatpush1.bf16.msra.mxu0 0
    %2254 = vmatprep.subr.bf16.mxu0 0
    %2255 = vmatpush1.bf16.msra.mxu0 0
    %2256 = vmatprep.subr.bf16.mxu0 0
    %2257 = vmatpush1.bf16.msra.mxu0 0
    %2258 = vmatprep.subr.bf16.mxu0 0
    %2259 = vmatpush1.bf16.msra.mxu0 0
    %2260 = vmatprep.subr.bf16.mxu0 0
    %2261 = vmatpush1.bf16.msra.mxu0 0
    %2262 = vmatprep.subr.bf16.mxu0 0
    %2263 = vmatpush1.bf16.msra.mxu0 0
    %2264 = vmatprep.subr.bf16.mxu0 0
    %2265 = vmatpush1.bf16.msra.mxu0 0
    %2266 = vmatprep.subr.bf16.mxu0 0
    %2267 = vmatpush1.bf16.msra.mxu0 0
    %2268 = vmatprep.mubr.bf16.mxu0 0
    %2269 = vmatmul.mubr.bf16.gmra.mrb[0].mxu0 %v1988
    %v2270 = vpop.f32.mrb[0].mxu0
    %v2271 = vadd.f32 %v1958, %v2270
    %v2272 = vpop.f32.mrb[0].mxu0
    %v2273 = vadd.f32 %v1962, %v2272
    %v2274 = vpop.f32.mrb[0].mxu0
    %v2275 = vpop.f32.mrb[0].mxu0
    %2276 = vdwg.mxu0
    %2277 = vmatprep.subr.bf16.mxu0 %v1886
    %2278 = vmatpush1.bf16.msra.mxu0 %v1885
    %2279 = vmatprep.subr.bf16.mxu0 %v1902
    %2280 = vmatpush1.bf16.msra.mxu0 %v1901
    %2281 = vmatprep.subr.bf16.mxu0 0
    %2282 = vmatpush1.bf16.msra.mxu0 0
    %2283 = vmatprep.subr.bf16.mxu0 0
    %2284 = vmatpush1.bf16.msra.mxu0 0
    %2285 = vmatprep.subr.bf16.mxu0 0
    %2286 = vmatpush1.bf16.msra.mxu0 0
    %2287 = vmatprep.subr.bf16.mxu0 0
    %2288 = vmatpush1.bf16.msra.mxu0 0
    %2289 = vmatprep.subr.bf16.mxu0 0
    %2290 = vmatpush1.bf16.msra.mxu0 0
    %2291 = vmatprep.subr.bf16.mxu0 0
    %2292 = vmatpush1.bf16.msra.mxu0 0
    %2293 = vmatprep.subr.bf16.mxu0 0
    %2294 = vmatpush1.bf16.msra.mxu0 0
    %2295 = vmatprep.subr.bf16.mxu0 0
    %2296 = vmatpush1.bf16.msra.mxu0 0
    %2297 = vmatprep.subr.bf16.mxu0 0
    %2298 = vmatpush1.bf16.msra.mxu0 0
    %2299 = vmatprep.subr.bf16.mxu0 0
    %2300 = vmatpush1.bf16.msra.mxu0 0
    %2301 = vmatprep.subr.bf16.mxu0 0
    %2302 = vmatpush1.bf16.msra.mxu0 0
    %2303 = vmatprep.subr.bf16.mxu0 0
    %2304 = vmatpush1.bf16.msra.mxu0 0
    %2305 = vmatprep.subr.bf16.mxu0 0
    %2306 = vmatpush1.bf16.msra.mxu0 0
    %2307 = vmatprep.subr.bf16.mxu0 0
    %2308 = vmatpush1.bf16.msra.mxu0 0
    %2309 = vmatprep.mubr.bf16.mxu0 0
    %2310 = vmatmul.mubr.bf16.gmra.mrb[0].mxu0 %v1988
    %v2311 = vpop.f32.mrb[0].mxu0
    %v2312 = vadd.f32 %v1966, %v2311
    %v2313 = vpop.f32.mrb[0].mxu0
    %v2314 = vadd.f32 %v1970, %v2313
    %v2315 = vpop.f32.mrb[0].mxu0
    %v2316 = vpop.f32.mrb[0].mxu0
    %2317 = vdwg.mxu0
    %v2318 = vmax.f32 %v2025, 0.0
    %v2319 = vmax.f32 %v2027, 0.0
    %v2320 = vmax.f32 %v2066, 0.0
    %v2321 = vmax.f32 %v2068, 0.0
    %v2322 = vmax.f32 %v2107, 0.0
    %v2323 = vmax.f32 %v2109, 0.0
    %v2324 = vmax.f32 %v2148, 0.0
    %v2325 = vmax.f32 %v2150, 0.0
    %v2326 = vmax.f32 %v2189, 0.0
    %v2327 = vmax.f32 %v2191, 0.0
    %v2328 = vmax.f32 %v2230, 0.0
    %v2329 = vmax.f32 %v2232, 0.0
    %v2330 = vmax.f32 %v2271, 0.0
    %v2331 = vmax.f32 %v2273, 0.0
    %v2332 = vmax.f32 %v2312, 0.0
    %v2333 = vmax.f32 %v2314, 0.0
    %s2334 = smul.u32 4, 256
    %s2335 = smul.u32 %s2334, 1
    %s2336 = sshll.u32 %s2335, 4
    %2337 = dma.done %s385, %s2336
    %v2338 = vpack.c.bf16 %v2318, %v2318
    %v2339 = vpack.c.bf16 %v2319, %v2319
    %v2340 = vpack.c.bf16 %v2320, %v2320
    %v2341 = vpack.c.bf16 %v2321, %v2321
    %v2342 = vpack.c.bf16 %v2322, %v2322
    %v2343 = vpack.c.bf16 %v2323, %v2323
    %v2344 = vpack.c.bf16 %v2324, %v2324
    %v2345 = vpack.c.bf16 %v2325, %v2325
    %v2346 = vpack.c.bf16 %v2326, %v2326
    %v2347 = vpack.c.bf16 %v2327, %v2327
    %v2348 = vpack.c.bf16 %v2328, %v2328
    %v2349 = vpack.c.bf16 %v2329, %v2329
    %v2350 = vpack.c.bf16 %v2330, %v2330
    %v2351 = vpack.c.bf16 %v2331, %v2331
    %v2352 = vpack.c.bf16 %v2332, %v2332
    %v2353 = vpack.c.bf16 %v2333, %v2333
    %v2354 = vld [vmem:[#allocation3] sm:$0xff]
    %v2355 = vld [vmem:[#allocation3 + $0x8] sm:$0xff]
    %v2356 = vld [vmem:[#allocation3 + $0x10] sm:$0xff]
    %v2357 = vld [vmem:[#allocation3 + $0x18] sm:$0xff]
    %v2358 = vld [vmem:[#allocation3 + $0x20] sm:$0xff]
    %v2359 = vld [vmem:[#allocation3 + $0x28] sm:$0xff]
    %v2360 = vld [vmem:[#allocation3 + $0x30] sm:$0xff]
    %v2361 = vld [vmem:[#allocation3 + $0x38] sm:$0xff]
    %v2362 = vld [vmem:[#allocation3 + $0x40] sm:$0xff]
    %v2363 = vld [vmem:[#allocation3 + $0x48] sm:$0xff]
    %v2364 = vld [vmem:[#allocation3 + $0x50] sm:$0xff]
    %v2365 = vld [vmem:[#allocation3 + $0x58] sm:$0xff]
    %v2366 = vld [vmem:[#allocation3 + $0x60] sm:$0xff]
    %v2367 = vld [vmem:[#allocation3 + $0x68] sm:$0xff]
    %v2368 = vld [vmem:[#allocation3 + $0x70] sm:$0xff]
    %v2369 = vld [vmem:[#allocation3 + $0x78] sm:$0xff]
    %v2370 = vld [vmem:[#allocation3 + $0x80] sm:$0xff]
    %v2371 = vld [vmem:[#allocation3 + $0x88] sm:$0xff]
    %v2372 = vld [vmem:[#allocation3 + $0x90] sm:$0xff]
    %v2373 = vld [vmem:[#allocation3 + $0x98] sm:$0xff]
    %v2374 = vld [vmem:[#allocation3 + $0xa0] sm:$0xff]
    %v2375 = vld [vmem:[#allocation3 + $0xa8] sm:$0xff]
    %v2376 = vld [vmem:[#allocation3 + $0xb0] sm:$0xff]
    %v2377 = vld [vmem:[#allocation3 + $0xb8] sm:$0xff]
    %v2378 = vld [vmem:[#allocation3 + $0xc0] sm:$0xff]
    %v2379 = vld [vmem:[#allocation3 + $0xc8] sm:$0xff]
    %v2380 = vld [vmem:[#allocation3 + $0xd0] sm:$0xff]
    %v2381 = vld [vmem:[#allocation3 + $0xd8] sm:$0xff]
    %v2382 = vld [vmem:[#allocation3 + $0xe0] sm:$0xff]
    %v2383 = vld [vmem:[#allocation3 + $0xe8] sm:$0xff]
    %v2384 = vld [vmem:[#allocation3 + $0xf0] sm:$0xff]
    %v2385 = vld [vmem:[#allocation3 + $0xf8] sm:$0xff]
    %v2386 = vld [vmem:[#allocation3 + $0x100] sm:$0xff]
    %v2387 = vld [vmem:[#allocation3 + $0x108] sm:$0xff]
    %v2388 = vld [vmem:[#allocation3 + $0x110] sm:$0xff]
    %v2389 = vld [vmem:[#allocation3 + $0x118] sm:$0xff]
    %v2390 = vld [vmem:[#allocation3 + $0x120] sm:$0xff]
    %v2391 = vld [vmem:[#allocation3 + $0x128] sm:$0xff]
    %v2392 = vld [vmem:[#allocation3 + $0x130] sm:$0xff]
    %v2393 = vld [vmem:[#allocation3 + $0x138] sm:$0xff]
    %v2394 = vld [vmem:[#allocation3 + $0x140] sm:$0xff]
    %v2395 = vld [vmem:[#allocation3 + $0x148] sm:$0xff]
    %v2396 = vld [vmem:[#allocation3 + $0x150] sm:$0xff]
    %v2397 = vld [vmem:[#allocation3 + $0x158] sm:$0xff]
    %v2398 = vld [vmem:[#allocation3 + $0x160] sm:$0xff]
    %v2399 = vld [vmem:[#allocation3 + $0x168] sm:$0xff]
    %v2400 = vld [vmem:[#allocation3 + $0x170] sm:$0xff]
    %v2401 = vld [vmem:[#allocation3 + $0x178] sm:$0xff]
    %v2402 = vld [vmem:[#allocation3 + $0x180] sm:$0xff]
    %v2403 = vld [vmem:[#allocation3 + $0x188] sm:$0xff]
    %v2404 = vld [vmem:[#allocation3 + $0x190] sm:$0xff]
    %v2405 = vld [vmem:[#allocation3 + $0x198] sm:$0xff]
    %v2406 = vld [vmem:[#allocation3 + $0x1a0] sm:$0xff]
    %v2407 = vld [vmem:[#allocation3 + $0x1a8] sm:$0xff]
    %v2408 = vld [vmem:[#allocation3 + $0x1b0] sm:$0xff]
    %v2409 = vld [vmem:[#allocation3 + $0x1b8] sm:$0xff]
    %v2410 = vld [vmem:[#allocation3 + $0x1c0] sm:$0xff]
    %v2411 = vld [vmem:[#allocation3 + $0x1c8] sm:$0xff]
    %v2412 = vld [vmem:[#allocation3 + $0x1d0] sm:$0xff]
    %v2413 = vld [vmem:[#allocation3 + $0x1d8] sm:$0xff]
    %v2414 = vld [vmem:[#allocation3 + $0x1e0] sm:$0xff]
    %v2415 = vld [vmem:[#allocation3 + $0x1e8] sm:$0xff]
    %v2416 = vld [vmem:[#allocation3 + $0x1f0] sm:$0xff]
    %v2417 = vld [vmem:[#allocation3 + $0x1f8] sm:$0xff]
    %v2418 = vld [vmem:[#allocation3 + $0x200] sm:$0xff]
    %v2419 = vld [vmem:[#allocation3 + $0x208] sm:$0xff]
    %v2420 = vld [vmem:[#allocation3 + $0x210] sm:$0xff]
    %v2421 = vld [vmem:[#allocation3 + $0x218] sm:$0xff]
    %v2422 = vld [vmem:[#allocation3 + $0x220] sm:$0xff]
    %v2423 = vld [vmem:[#allocation3 + $0x228] sm:$0xff]
    %v2424 = vld [vmem:[#allocation3 + $0x230] sm:$0xff]
    %v2425 = vld [vmem:[#allocation3 + $0x238] sm:$0xff]
    %v2426 = vld [vmem:[#allocation3 + $0x240] sm:$0xff]
    %v2427 = vld [vmem:[#allocation3 + $0x248] sm:$0xff]
    %v2428 = vld [vmem:[#allocation3 + $0x250] sm:$0xff]
    %v2429 = vld [vmem:[#allocation3 + $0x258] sm:$0xff]
    %v2430 = vld [vmem:[#allocation3 + $0x260] sm:$0xff]
    %v2431 = vld [vmem:[#allocation3 + $0x268] sm:$0xff]
    %v2432 = vld [vmem:[#allocation3 + $0x270] sm:$0xff]
    %v2433 = vld [vmem:[#allocation3 + $0x278] sm:$0xff]
    %v2434 = vld [vmem:[#allocation3 + $0x280] sm:$0xff]
    %v2435 = vld [vmem:[#allocation3 + $0x288] sm:$0xff]
    %v2436 = vld [vmem:[#allocation3 + $0x290] sm:$0xff]
    %v2437 = vld [vmem:[#allocation3 + $0x298] sm:$0xff]
    %v2438 = vld [vmem:[#allocation3 + $0x2a0] sm:$0xff]
    %v2439 = vld [vmem:[#allocation3 + $0x2a8] sm:$0xff]
    %v2440 = vld [vmem:[#allocation3 + $0x2b0] sm:$0xff]
    %v2441 = vld [vmem:[#allocation3 + $0x2b8] sm:$0xff]
    %v2442 = vld [vmem:[#allocation3 + $0x2c0] sm:$0xff]
    %v2443 = vld [vmem:[#allocation3 + $0x2c8] sm:$0xff]
    %v2444 = vld [vmem:[#allocation3 + $0x2d0] sm:$0xff]
    %v2445 = vld [vmem:[#allocation3 + $0x2d8] sm:$0xff]
    %v2446 = vld [vmem:[#allocation3 + $0x2e0] sm:$0xff]
    %v2447 = vld [vmem:[#allocation3 + $0x2e8] sm:$0xff]
    %v2448 = vld [vmem:[#allocation3 + $0x2f0] sm:$0xff]
    %v2449 = vld [vmem:[#allocation3 + $0x2f8] sm:$0xff]
    %v2450 = vld [vmem:[#allocation3 + $0x300] sm:$0xff]
    %v2451 = vld [vmem:[#allocation3 + $0x308] sm:$0xff]
    %v2452 = vld [vmem:[#allocation3 + $0x310] sm:$0xff]
    %v2453 = vld [vmem:[#allocation3 + $0x318] sm:$0xff]
    %v2454 = vld [vmem:[#allocation3 + $0x320] sm:$0xff]
    %v2455 = vld [vmem:[#allocation3 + $0x328] sm:$0xff]
    %v2456 = vld [vmem:[#allocation3 + $0x330] sm:$0xff]
    %v2457 = vld [vmem:[#allocation3 + $0x338] sm:$0xff]
    %v2458 = vld [vmem:[#allocation3 + $0x340] sm:$0xff]
    %v2459 = vld [vmem:[#allocation3 + $0x348] sm:$0xff]
    %v2460 = vld [vmem:[#allocation3 + $0x350] sm:$0xff]
    %v2461 = vld [vmem:[#allocation3 + $0x358] sm:$0xff]
    %v2462 = vld [vmem:[#allocation3 + $0x360] sm:$0xff]
    %v2463 = vld [vmem:[#allocation3 + $0x368] sm:$0xff]
    %v2464 = vld [vmem:[#allocation3 + $0x370] sm:$0xff]
    %v2465 = vld [vmem:[#allocation3 + $0x378] sm:$0xff]
    %v2466 = vld [vmem:[#allocation3 + $0x380] sm:$0xff]
    %v2467 = vld [vmem:[#allocation3 + $0x388] sm:$0xff]
    %v2468 = vld [vmem:[#allocation3 + $0x390] sm:$0xff]
    %v2469 = vld [vmem:[#allocation3 + $0x398] sm:$0xff]
    %v2470 = vld [vmem:[#allocation3 + $0x3a0] sm:$0xff]
    %v2471 = vld [vmem:[#allocation3 + $0x3a8] sm:$0xff]
    %v2472 = vld [vmem:[#allocation3 + $0x3b0] sm:$0xff]
    %v2473 = vld [vmem:[#allocation3 + $0x3b8] sm:$0xff]
    %v2474 = vld [vmem:[#allocation3 + $0x3c0] sm:$0xff]
    %v2475 = vld [vmem:[#allocation3 + $0x3c8] sm:$0xff]
    %v2476 = vld [vmem:[#allocation3 + $0x3d0] sm:$0xff]
    %v2477 = vld [vmem:[#allocation3 + $0x3d8] sm:$0xff]
    %v2478 = vld [vmem:[#allocation3 + $0x3e0] sm:$0xff]
    %v2479 = vld [vmem:[#allocation3 + $0x3e8] sm:$0xff]
    %v2480 = vld [vmem:[#allocation3 + $0x3f0] sm:$0xff]
    %v2481 = vld [vmem:[#allocation3 + $0x3f8] sm:$0xff]
    %v2482 = vld [vmem:[%s17] sm:$0x1]
    %v2484 = vlaneseq
    %v2485 = vshrl.u32 %v2484, 7
    %v2486 = vsub.s32 0, %v2485
    %v2487 = vrot.slane %v2482, %v2486
    %2489 = vmatprep.subr.bf16.mxu0 0
    %2490 = vmatpush1.bf16.msra.mxu0 %v2354
    %2491 = vmatprep.subr.bf16.mxu0 0
    %2492 = vmatpush1.bf16.msra.mxu0 %v2355
    %2493 = vmatprep.subr.bf16.mxu0 0
    %2494 = vmatpush1.bf16.msra.mxu0 %v2356
    %2495 = vmatprep.subr.bf16.mxu0 0
    %2496 = vmatpush1.bf16.msra.mxu0 %v2357
    %2497 = vmatprep.subr.bf16.mxu0 0
    %2498 = vmatpush1.bf16.msra.mxu0 %v2358
    %2499 = vmatprep.subr.bf16.mxu0 0
    %2500 = vmatpush1.bf16.msra.mxu0 %v2359
    %2501 = vmatprep.subr.bf16.mxu0 0
    %2502 = vmatpush1.bf16.msra.mxu0 %v2360
    %2503 = vmatprep.subr.bf16.mxu0 0
    %2504 = vmatpush1.bf16.msra.mxu0 %v2361
    %2505 = vmatprep.subr.bf16.mxu0 0
    %2506 = vmatpush1.bf16.msra.mxu0 %v2362
    %2507 = vmatprep.subr.bf16.mxu0 0
    %2508 = vmatpush1.bf16.msra.mxu0 %v2363
    %2509 = vmatprep.subr.bf16.mxu0 0
    %2510 = vmatpush1.bf16.msra.mxu0 %v2364
    %2511 = vmatprep.subr.bf16.mxu0 0
    %2512 = vmatpush1.bf16.msra.mxu0 %v2365
    %2513 = vmatprep.subr.bf16.mxu0 0
    %2514 = vmatpush1.bf16.msra.mxu0 %v2366
    %2515 = vmatprep.subr.bf16.mxu0 0
    %2516 = vmatpush1.bf16.msra.mxu0 %v2367
    %2517 = vmatprep.subr.bf16.mxu0 0
    %2518 = vmatpush1.bf16.msra.mxu0 %v2368
    %2519 = vmatprep.subr.bf16.mxu0 0
    %2520 = vmatpush1.bf16.msra.mxu0 %v2369
    %2521 = vmatprep.mubr.bf16.mxu0 %v2339
    %2522 = vmatmul.mubr.bf16.gmra.mrb[0].mxu0 %v2338
    %v2523 = vpop.f32.mrb[0].mxu0
    %v2524 = vadd.f32 %v2487, %v2523
    %v2525 = vpop.f32.mrb[0].mxu0
    %v2526 = vpop.f32.mrb[0].mxu0
    %v2527 = vpop.f32.mrb[0].mxu0
    %2528 = vdwg.mxu0
    %2529 = vmatprep.subr.bf16.mxu0 0
    %2530 = vmatpush1.bf16.msra.mxu0 %v2370
    %2531 = vmatprep.subr.bf16.mxu0 0
    %2532 = vmatpush1.bf16.msra.mxu0 %v2371
    %2533 = vmatprep.subr.bf16.mxu0 0
    %2534 = vmatpush1.bf16.msra.mxu0 %v2372
    %2535 = vmatprep.subr.bf16.mxu0 0
    %2536 = vmatpush1.bf16.msra.mxu0 %v2373
    %2537 = vmatprep.subr.bf16.mxu0 0
    %2538 = vmatpush1.bf16.msra.mxu0 %v2374
    %2539 = vmatprep.subr.bf16.mxu0 0
    %2540 = vmatpush1.bf16.msra.mxu0 %v2375
    %2541 = vmatprep.subr.bf16.mxu0 0
    %2542 = vmatpush1.bf16.msra.mxu0 %v2376
    %2543 = vmatprep.subr.bf16.mxu0 0
    %2544 = vmatpush1.bf16.msra.mxu0 %v2377
    %2545 = vmatprep.subr.bf16.mxu0 0
    %2546 = vmatpush1.bf16.msra.mxu0 %v2378
    %2547 = vmatprep.subr.bf16.mxu0 0
    %2548 = vmatpush1.bf16.msra.mxu0 %v2379
    %2549 = vmatprep.subr.bf16.mxu0 0
    %2550 = vmatpush1.bf16.msra.mxu0 %v2380
    %2551 = vmatprep.subr.bf16.mxu0 0
    %2552 = vmatpush1.bf16.msra.mxu0 %v2381
    %2553 = vmatprep.subr.bf16.mxu0 0
    %2554 = vmatpush1.bf16.msra.mxu0 %v2382
    %2555 = vmatprep.subr.bf16.mxu0 0
    %2556 = vmatpush1.bf16.msra.mxu0 %v2383
    %2557 = vmatprep.subr.bf16.mxu0 0
    %2558 = vmatpush1.bf16.msra.mxu0 %v2384
    %2559 = vmatprep.subr.bf16.mxu0 0
    %2560 = vmatpush1.bf16.msra.mxu0 %v2385
    %2561 = vmatprep.mubr.bf16.mxu0 %v2341
    %2562 = vmatmul.mubr.bf16.gmra.mrb[0].mxu0 %v2340
    %v2563 = vpop.f32.mrb[0].mxu0
    %v2564 = vadd.f32 %v2524, %v2563
    %v2565 = vpop.f32.mrb[0].mxu0
    %v2566 = vpop.f32.mrb[0].mxu0
    %v2567 = vpop.f32.mrb[0].mxu0
    %2568 = vdwg.mxu0
    %2569 = vmatprep.subr.bf16.mxu0 0
    %2570 = vmatpush1.bf16.msra.mxu0 %v2386
    %2571 = vmatprep.subr.bf16.mxu0 0
    %2572 = vmatpush1.bf16.msra.mxu0 %v2387
    %2573 = vmatprep.subr.bf16.mxu0 0
    %2574 = vmatpush1.bf16.msra.mxu0 %v2388
    %2575 = vmatprep.subr.bf16.mxu0 0
    %2576 = vmatpush1.bf16.msra.mxu0 %v2389
    %2577 = vmatprep.subr.bf16.mxu0 0
    %2578 = vmatpush1.bf16.msra.mxu0 %v2390
    %2579 = vmatprep.subr.bf16.mxu0 0
    %2580 = vmatpush1.bf16.msra.mxu0 %v2391
    %2581 = vmatprep.subr.bf16.mxu0 0
    %2582 = vmatpush1.bf16.msra.mxu0 %v2392
    %2583 = vmatprep.subr.bf16.mxu0 0
    %2584 = vmatpush1.bf16.msra.mxu0 %v2393
    %2585 = vmatprep.subr.bf16.mxu0 0
    %2586 = vmatpush1.bf16.msra.mxu0 %v2394
    %2587 = vmatprep.subr.bf16.mxu0 0
    %2588 = vmatpush1.bf16.msra.mxu0 %v2395
    %2589 = vmatprep.subr.bf16.mxu0 0
    %2590 = vmatpush1.bf16.msra.mxu0 %v2396
    %2591 = vmatprep.subr.bf16.mxu0 0
    %2592 = vmatpush1.bf16.msra.mxu0 %v2397
    %2593 = vmatprep.subr.bf16.mxu0 0
    %2594 = vmatpush1.bf16.msra.mxu0 %v2398
    %2595 = vmatprep.subr.bf16.mxu0 0
    %2596 = vmatpush1.bf16.msra.mxu0 %v2399
    %2597 = vmatprep.subr.bf16.mxu0 0
    %2598 = vmatpush1.bf16.msra.mxu0 %v2400
    %2599 = vmatprep.subr.bf16.mxu0 0
    %2600 = vmatpush1.bf16.msra.mxu0 %v2401
    %2601 = vmatprep.mubr.bf16.mxu0 %v2343
    %2602 = vmatmul.mubr.bf16.gmra.mrb[0].mxu0 %v2342
    %v2603 = vpop.f32.mrb[0].mxu0
    %v2604 = vadd.f32 %v2564, %v2603
    %v2605 = vpop.f32.mrb[0].mxu0
    %v2606 = vpop.f32.mrb[0].mxu0
    %v2607 = vpop.f32.mrb[0].mxu0
    %2608 = vdwg.mxu0
    %2609 = vmatprep.subr.bf16.mxu0 0
    %2610 = vmatpush1.bf16.msra.mxu0 %v2402
    %2611 = vmatprep.subr.bf16.mxu0 0
    %2612 = vmatpush1.bf16.msra.mxu0 %v2403
    %2613 = vmatprep.subr.bf16.mxu0 0
    %2614 = vmatpush1.bf16.msra.mxu0 %v2404
    %2615 = vmatprep.subr.bf16.mxu0 0
    %2616 = vmatpush1.bf16.msra.mxu0 %v2405
    %2617 = vmatprep.subr.bf16.mxu0 0
    %2618 = vmatpush1.bf16.msra.mxu0 %v2406
    %2619 = vmatprep.subr.bf16.mxu0 0
    %2620 = vmatpush1.bf16.msra.mxu0 %v2407
    %2621 = vmatprep.subr.bf16.mxu0 0
    %2622 = vmatpush1.bf16.msra.mxu0 %v2408
    %2623 = vmatprep.subr.bf16.mxu0 0
    %2624 = vmatpush1.bf16.msra.mxu0 %v2409
    %2625 = vmatprep.subr.bf16.mxu0 0
    %2626 = vmatpush1.bf16.msra.mxu0 %v2410
    %2627 = vmatprep.subr.bf16.mxu0 0
    %2628 = vmatpush1.bf16.msra.mxu0 %v2411
    %2629 = vmatprep.subr.bf16.mxu0 0
    %2630 = vmatpush1.bf16.msra.mxu0 %v2412
    %2631 = vmatprep.subr.bf16.mxu0 0
    %2632 = vmatpush1.bf16.msra.mxu0 %v2413
    %2633 = vmatprep.subr.bf16.mxu0 0
    %2634 = vmatpush1.bf16.msra.mxu0 %v2414
    %2635 = vmatprep.subr.bf16.mxu0 0
    %2636 = vmatpush1.bf16.msra.mxu0 %v2415
    %2637 = vmatprep.subr.bf16.mxu0 0
    %2638 = vmatpush1.bf16.msra.mxu0 %v2416
    %2639 = vmatprep.subr.bf16.mxu0 0
    %2640 = vmatpush1.bf16.msra.mxu0 %v2417
    %2641 = vmatprep.mubr.bf16.mxu0 %v2345
    %2642 = vmatmul.mubr.bf16.gmra.mrb[0].mxu0 %v2344
    %v2643 = vpop.f32.mrb[0].mxu0
    %v2644 = vadd.f32 %v2604, %v2643
    %v2645 = vpop.f32.mrb[0].mxu0
    %v2646 = vpop.f32.mrb[0].mxu0
    %v2647 = vpop.f32.mrb[0].mxu0
    %2648 = vdwg.mxu0
    %2649 = vmatprep.subr.bf16.mxu0 0
    %2650 = vmatpush1.bf16.msra.mxu0 %v2418
    %2651 = vmatprep.subr.bf16.mxu0 0
    %2652 = vmatpush1.bf16.msra.mxu0 %v2419
    %2653 = vmatprep.subr.bf16.mxu0 0
    %2654 = vmatpush1.bf16.msra.mxu0 %v2420
    %2655 = vmatprep.subr.bf16.mxu0 0
    %2656 = vmatpush1.bf16.msra.mxu0 %v2421
    %2657 = vmatprep.subr.bf16.mxu0 0
    %2658 = vmatpush1.bf16.msra.mxu0 %v2422
    %2659 = vmatprep.subr.bf16.mxu0 0
    %2660 = vmatpush1.bf16.msra.mxu0 %v2423
    %2661 = vmatprep.subr.bf16.mxu0 0
    %2662 = vmatpush1.bf16.msra.mxu0 %v2424
    %2663 = vmatprep.subr.bf16.mxu0 0
    %2664 = vmatpush1.bf16.msra.mxu0 %v2425
    %2665 = vmatprep.subr.bf16.mxu0 0
    %2666 = vmatpush1.bf16.msra.mxu0 %v2426
    %2667 = vmatprep.subr.bf16.mxu0 0
    %2668 = vmatpush1.bf16.msra.mxu0 %v2427
    %2669 = vmatprep.subr.bf16.mxu0 0
    %2670 = vmatpush1.bf16.msra.mxu0 %v2428
    %2671 = vmatprep.subr.bf16.mxu0 0
    %2672 = vmatpush1.bf16.msra.mxu0 %v2429
    %2673 = vmatprep.subr.bf16.mxu0 0
    %2674 = vmatpush1.bf16.msra.mxu0 %v2430
    %2675 = vmatprep.subr.bf16.mxu0 0
    %2676 = vmatpush1.bf16.msra.mxu0 %v2431
    %2677 = vmatprep.subr.bf16.mxu0 0
    %2678 = vmatpush1.bf16.msra.mxu0 %v2432
    %2679 = vmatprep.subr.bf16.mxu0 0
    %2680 = vmatpush1.bf16.msra.mxu0 %v2433
    %2681 = vmatprep.mubr.bf16.mxu0 %v2347
    %2682 = vmatmul.mubr.bf16.gmra.mrb[0].mxu0 %v2346
    %v2683 = vpop.f32.mrb[0].mxu0
    %v2684 = vadd.f32 %v2644, %v2683
    %v2685 = vpop.f32.mrb[0].mxu0
    %v2686 = vpop.f32.mrb[0].mxu0
    %v2687 = vpop.f32.mrb[0].mxu0
    %2688 = vdwg.mxu0
    %2689 = vmatprep.subr.bf16.mxu0 0
    %2690 = vmatpush1.bf16.msra.mxu0 %v2434
    %2691 = vmatprep.subr.bf16.mxu0 0
    %2692 = vmatpush1.bf16.msra.mxu0 %v2435
    %2693 = vmatprep.subr.bf16.mxu0 0
    %2694 = vmatpush1.bf16.msra.mxu0 %v2436
    %2695 = vmatprep.subr.bf16.mxu0 0
    %2696 = vmatpush1.bf16.msra.mxu0 %v2437
    %2697 = vmatprep.subr.bf16.mxu0 0
    %2698 = vmatpush1.bf16.msra.mxu0 %v2438
    %2699 = vmatprep.subr.bf16.mxu0 0
    %2700 = vmatpush1.bf16.msra.mxu0 %v2439
    %2701 = vmatprep.subr.bf16.mxu0 0
    %2702 = vmatpush1.bf16.msra.mxu0 %v2440
    %2703 = vmatprep.subr.bf16.mxu0 0
    %2704 = vmatpush1.bf16.msra.mxu0 %v2441
    %2705 = vmatprep.subr.bf16.mxu0 0
    %2706 = vmatpush1.bf16.msra.mxu0 %v2442
    %2707 = vmatprep.subr.bf16.mxu0 0
    %2708 = vmatpush1.bf16.msra.mxu0 %v2443
    %2709 = vmatprep.subr.bf16.mxu0 0
    %2710 = vmatpush1.bf16.msra.mxu0 %v2444
    %2711 = vmatprep.subr.bf16.mxu0 0
    %2712 = vmatpush1.bf16.msra.mxu0 %v2445
    %2713 = vmatprep.subr.bf16.mxu0 0
    %2714 = vmatpush1.bf16.msra.mxu0 %v2446
    %2715 = vmatprep.subr.bf16.mxu0 0
    %2716 = vmatpush1.bf16.msra.mxu0 %v2447
    %2717 = vmatprep.subr.bf16.mxu0 0
    %2718 = vmatpush1.bf16.msra.mxu0 %v2448
    %2719 = vmatprep.subr.bf16.mxu0 0
    %2720 = vmatpush1.bf16.msra.mxu0 %v2449
    %2721 = vmatprep.mubr.bf16.mxu0 %v2349
    %2722 = vmatmul.mubr.bf16.gmra.mrb[0].mxu0 %v2348
    %v2723 = vpop.f32.mrb[0].mxu0
    %v2724 = vadd.f32 %v2684, %v2723
    %v2725 = vpop.f32.mrb[0].mxu0
    %v2726 = vpop.f32.mrb[0].mxu0
    %v2727 = vpop.f32.mrb[0].mxu0
    %2728 = vdwg.mxu0
    %2729 = vmatprep.subr.bf16.mxu0 0
    %2730 = vmatpush1.bf16.msra.mxu0 %v2450
    %2731 = vmatprep.subr.bf16.mxu0 0
    %2732 = vmatpush1.bf16.msra.mxu0 %v2451
    %2733 = vmatprep.subr.bf16.mxu0 0
    %2734 = vmatpush1.bf16.msra.mxu0 %v2452
    %2735 = vmatprep.subr.bf16.mxu0 0
    %2736 = vmatpush1.bf16.msra.mxu0 %v2453
    %2737 = vmatprep.subr.bf16.mxu0 0
    %2738 = vmatpush1.bf16.msra.mxu0 %v2454
    %2739 = vmatprep.subr.bf16.mxu0 0
    %2740 = vmatpush1.bf16.msra.mxu0 %v2455
    %2741 = vmatprep.subr.bf16.mxu0 0
    %2742 = vmatpush1.bf16.msra.mxu0 %v2456
    %2743 = vmatprep.subr.bf16.mxu0 0
    %2744 = vmatpush1.bf16.msra.mxu0 %v2457
    %2745 = vmatprep.subr.bf16.mxu0 0
    %2746 = vmatpush1.bf16.msra.mxu0 %v2458
    %2747 = vmatprep.subr.bf16.mxu0 0
    %2748 = vmatpush1.bf16.msra.mxu0 %v2459
    %2749 = vmatprep.subr.bf16.mxu0 0
    %2750 = vmatpush1.bf16.msra.mxu0 %v2460
    %2751 = vmatprep.subr.bf16.mxu0 0
    %2752 = vmatpush1.bf16.msra.mxu0 %v2461
    %2753 = vmatprep.subr.bf16.mxu0 0
    %2754 = vmatpush1.bf16.msra.mxu0 %v2462
    %2755 = vmatprep.subr.bf16.mxu0 0
    %2756 = vmatpush1.bf16.msra.mxu0 %v2463
    %2757 = vmatprep.subr.bf16.mxu0 0
    %2758 = vmatpush1.bf16.msra.mxu0 %v2464
    %2759 = vmatprep.subr.bf16.mxu0 0
    %2760 = vmatpush1.bf16.msra.mxu0 %v2465
    %2761 = vmatprep.mubr.bf16.mxu0 %v2351
    %2762 = vmatmul.mubr.bf16.gmra.mrb[0].mxu0 %v2350
    %v2763 = vpop.f32.mrb[0].mxu0
    %v2764 = vadd.f32 %v2724, %v2763
    %v2765 = vpop.f32.mrb[0].mxu0
    %v2766 = vpop.f32.mrb[0].mxu0
    %v2767 = vpop.f32.mrb[0].mxu0
    %2768 = vdwg.mxu0
    %2769 = vmatprep.subr.bf16.mxu0 0
    %2770 = vmatpush1.bf16.msra.mxu0 %v2466
    %2771 = vmatprep.subr.bf16.mxu0 0
    %2772 = vmatpush1.bf16.msra.mxu0 %v2467
    %2773 = vmatprep.subr.bf16.mxu0 0
    %2774 = vmatpush1.bf16.msra.mxu0 %v2468
    %2775 = vmatprep.subr.bf16.mxu0 0
    %2776 = vmatpush1.bf16.msra.mxu0 %v2469
    %2777 = vmatprep.subr.bf16.mxu0 0
    %2778 = vmatpush1.bf16.msra.mxu0 %v2470
    %2779 = vmatprep.subr.bf16.mxu0 0
    %2780 = vmatpush1.bf16.msra.mxu0 %v2471
    %2781 = vmatprep.subr.bf16.mxu0 0
    %2782 = vmatpush1.bf16.msra.mxu0 %v2472
    %2783 = vmatprep.subr.bf16.mxu0 0
    %2784 = vmatpush1.bf16.msra.mxu0 %v2473
    %2785 = vmatprep.subr.bf16.mxu0 0
    %2786 = vmatpush1.bf16.msra.mxu0 %v2474
    %2787 = vmatprep.subr.bf16.mxu0 0
    %2788 = vmatpush1.bf16.msra.mxu0 %v2475
    %2789 = vmatprep.subr.bf16.mxu0 0
    %2790 = vmatpush1.bf16.msra.mxu0 %v2476
    %2791 = vmatprep.subr.bf16.mxu0 0
    %2792 = vmatpush1.bf16.msra.mxu0 %v2477
    %2793 = vmatprep.subr.bf16.mxu0 0
    %2794 = vmatpush1.bf16.msra.mxu0 %v2478
    %2795 = vmatprep.subr.bf16.mxu0 0
    %2796 = vmatpush1.bf16.msra.mxu0 %v2479
    %2797 = vmatprep.subr.bf16.mxu0 0
    %2798 = vmatpush1.bf16.msra.mxu0 %v2480
    %2799 = vmatprep.subr.bf16.mxu0 0
    %2800 = vmatpush1.bf16.msra.mxu0 %v2481
    %2801 = vmatprep.mubr.bf16.mxu0 %v2353
    %2802 = vmatmul.mubr.bf16.gmra.mrb[0].mxu0 %v2352
    %v2803 = vpop.f32.mrb[0].mxu0
    %v2804 = vadd.f32 %v2764, %v2803
    %v2805 = vpop.f32.mrb[0].mxu0
    %v2806 = vpop.f32.mrb[0].mxu0
    %v2807 = vpop.f32.mrb[0].mxu0
    %2808 = vdwg.mxu0
    %v2809 = vadd.f32 %v1865, %v2804
    %v2810 = vsel %vm1069, %v2809, 0.0
    %2811 = vadd.xlane.f32.xlu0 %v2810
    %v2812 = vpop.xlane.xlu0 %2811
    %v2813 = vmul.f32 %v2812, %v1839
    %v2814 = vsub.f32 %v2809, %v2813
    %v2815 = vmul.f32 %v2814, %v2814
    %v2816 = vsel %vm1069, %v2815, 0.0
    %2817 = vadd.xlane.f32.xlu0 %v2816
    %v2818 = vpop.xlane.xlu0 %2817
    %v2819 = vmul.f32 %v2818, %v1839
    %v2820 = vadd.f32 %v2819, 1e-05
    %v2821 = vrsqrt.pop %v2820
    %v2822 = vmul.f32 %v2814, %v2821
    %v2823 = vld [vmem:[%s18] sm:$0x1]
    %v2825 = vlaneseq
    %v2826 = vshrl.u32 %v2825, 7
    %v2827 = vsub.s32 0, %v2826
    %v2828 = vrot.slane %v2823, %v2827
    %v2830 = vmul.f32 %v2822, %v2828
    %v2831 = vld [vmem:[%s19] sm:$0x1]
    %v2833 = vlaneseq
    %v2834 = vshrl.u32 %v2833, 7
    %v2835 = vsub.s32 0, %v2834
    %v2836 = vrot.slane %v2831, %v2835
    %v2838 = vadd.f32 %v2830, %v2836
    %v2839 = vpack.c.bf16 %v2838, %v2838
    %v2840 = vld [vmem:[%s21] sm:$0xf]
    %v2841 = vld [vmem:[%s21 + $0x4] sm:$0xf]
    %v2842 = vld [vmem:[%s21 + $0x8] sm:$0xf]
    %v2843 = vld [vmem:[%s21 + $0xc] sm:$0xf]
    %v2844 = vld [vmem:[%s22] sm:$0x1]
    %v2846 = vlaneseq
    %v2847 = vshrl.u32 %v2846, 7
    %v2848 = vsub.s32 0, %v2847
    %v2849 = vrot.slane %v2844, %v2848
    %v2855 = vunpack.c.l.b16 %v2840
    %v2856 = vunpack.c.l.b16 %v2841
    %v2857 = vunpack.c.l.b16 %v2842
    %v2858 = vunpack.c.l.b16 %v2843
    %v2859 = vpack.c.b16 %v2856, %v2855
    %v2860 = vpack.c.b16 %v2858, %v2857
    %v2864 = vsel %vm1069, %v2839, 0
    %2866 = vmatprep.subr.bf16.mxu0 0
    %2867 = vmatpush1.bf16.msra.mxu0 %v2859
    %2868 = vmatprep.subr.bf16.mxu0 0
    %2869 = vmatpush1.bf16.msra.mxu0 %v2860
    %2870 = vmatprep.subr.bf16.mxu0 0
    %2871 = vmatpush1.bf16.msra.mxu0 0
    %2872 = vmatprep.subr.bf16.mxu0 0
    %2873 = vmatpush1.bf16.msra.mxu0 0
    %2874 = vmatprep.subr.bf16.mxu0 0
    %2875 = vmatpush1.bf16.msra.mxu0 0
    %2876 = vmatprep.subr.bf16.mxu0 0
    %2877 = vmatpush1.bf16.msra.mxu0 0
    %2878 = vmatprep.subr.bf16.mxu0 0
    %2879 = vmatpush1.bf16.msra.mxu0 0
    %2880 = vmatprep.subr.bf16.mxu0 0
    %2881 = vmatpush1.bf16.msra.mxu0 0
    %2882 = vmatprep.subr.bf16.mxu0 0
    %2883 = vmatpush1.bf16.msra.mxu0 0
    %2884 = vmatprep.subr.bf16.mxu0 0
    %2885 = vmatpush1.bf16.msra.mxu0 0
    %2886 = vmatprep.subr.bf16.mxu0 0
    %2887 = vmatpush1.bf16.msra.mxu0 0
    %2888 = vmatprep.subr.bf16.mxu0 0
    %2889 = vmatpush1.bf16.msra.mxu0 0
    %2890 = vmatprep.subr.bf16.mxu0 0
    %2891 = vmatpush1.bf16.msra.mxu0 0
    %2892 = vmatprep.subr.bf16.mxu0 0
    %2893 = vmatpush1.bf16.msra.mxu0 0
    %2894 = vmatprep.subr.bf16.mxu0 0
    %2895 = vmatpush1.bf16.msra.mxu0 0
    %2896 = vmatprep.subr.bf16.mxu0 0
    %2897 = vmatpush1.bf16.msra.mxu0 0
    %2898 = vmatprep.mubr.bf16.mxu0 0
    %2899 = vmatmul.mubr.bf16.gmra.mrb[0].mxu0 %v2864
    %v2900 = vpop.f32.mrb[0].mxu0
    %v2901 = vadd.f32 %v2849, %v2900
    %v2902 = vpop.f32.mrb[0].mxu0
    %v2903 = vpop.f32.mrb[0].mxu0
    %v2904 = vpop.f32.mrb[0].mxu0
    %2905 = vdwg.mxu0
    %v2906 = vmax.f32 %v2901, 0.0
    %v2907 = vld [vmem:[%s20] sm:$0xff]
    %2909 = vrot.lane.b32.xlu0 %v2907, 64
    %v2910 = vpop.permute.xlu0 %2909
    %v2912 = vadd.f32 %v2906, %v2910
    %2914 = vrot.lane.b32.xlu0 %v2912, 127
    %v2915 = vpop.permute.xlu0 %2914
    %vm2917 = vcmp.ge.f32.partialorder %v2912, %v2915
    %v2918 = vsel %vm2917, 1.0, 0.0
    %2920 = vset.pattern.permute.xlu0 64
    %2921 = vperm.xlu0 %2920, %v2918
    %v2922 = vpop.permute.xlu0 %2921
    %v2924 = vmul.f32 %v2906, %v2922
    %v2926 = vcombine.high %v2924, %v2924
    %v2928 = vpack.c.bf16 %v2924, %v2924
    %v2929 = vpack.c.bf16 %v2926, %v2926
    %v2930 = vld [vmem:[%s23] sm:$0xf]
    %v2931 = vld [vmem:[%s23 + $0x4] sm:$0xf]
    %v2932 = vld [vmem:[%s23 + $0x8] sm:$0xf]
    %v2933 = vld [vmem:[%s23 + $0xc] sm:$0xf]
    %s2934 = scalar_lea.vmem %s23, 16
    %v2935 = vld [vmem:[%s2934] sm:$0xf]
    %v2936 = vld [vmem:[%s2934 + $0x4] sm:$0xf]
    %v2937 = vld [vmem:[%s2934 + $0x8] sm:$0xf]
    %v2938 = vld [vmem:[%s2934 + $0xc] sm:$0xf]
    %v2941 = vunpack.c.l.b16 %v2928
    %v2942 = vunpack.c.l.b16 %v2929
    %v2943 = vrot.slane %v2941, 1
    %v2944 = vsel %vm888, %v2942, %v2943
    %v2945 = vpack.c.b16 %v2944, %v2944
    %v2950 = vunpack.c.l.b16 %v2935
    %v2951 = vunpack.c.l.b16 %v2936
    %v2952 = vunpack.c.l.b16 %v2937
    %v2953 = vunpack.c.l.b16 %v2938
    %v2954 = vpack.c.b16 %v2951, %v2950
    %v2955 = vpack.c.b16 %v2953, %v2952
    %v2959 = vsel %vm1069, %v2945, 0
    %2961 = vmatprep.subr.bf16.mxu0 0
    %2962 = vmatpush1.bf16.msra.mxu0 %v2954
    %2963 = vmatprep.subr.bf16.mxu0 0
    %2964 = vmatpush1.bf16.msra.mxu0 %v2955
    %2965 = vmatprep.subr.bf16.mxu0 0
    %2966 = vmatpush1.bf16.msra.mxu0 0
    %2967 = vmatprep.subr.bf16.mxu0 0
    %2968 = vmatpush1.bf16.msra.mxu0 0
    %2969 = vmatprep.subr.bf16.mxu0 0
    %2970 = vmatpush1.bf16.msra.mxu0 0
    %2971 = vmatprep.subr.bf16.mxu0 0
    %2972 = vmatpush1.bf16.msra.mxu0 0
    %2973 = vmatprep.subr.bf16.mxu0 0
    %2974 = vmatpush1.bf16.msra.mxu0 0
    %2975 = vmatprep.subr.bf16.mxu0 0
    %2976 = vmatpush1.bf16.msra.mxu0 0
    %2977 = vmatprep.subr.bf16.mxu0 0
    %2978 = vmatpush1.bf16.msra.mxu0 0
    %2979 = vmatprep.subr.bf16.mxu0 0
    %2980 = vmatpush1.bf16.msra.mxu0 0
    %2981 = vmatprep.subr.bf16.mxu0 0
    %2982 = vmatpush1.bf16.msra.mxu0 0
    %2983 = vmatprep.subr.bf16.mxu0 0
    %2984 = vmatpush1.bf16.msra.mxu0 0
    %2985 = vmatprep.subr.bf16.mxu0 0
    %2986 = vmatpush1.bf16.msra.mxu0 0
    %2987 = vmatprep.subr.bf16.mxu0 0
    %2988 = vmatpush1.bf16.msra.mxu0 0
    %2989 = vmatprep.subr.bf16.mxu0 0
    %2990 = vmatpush1.bf16.msra.mxu0 0
    %2991 = vmatprep.subr.bf16.mxu0 0
    %2992 = vmatpush1.bf16.msra.mxu0 0
    %2993 = vmatprep.mubr.bf16.mxu0 0
    %2994 = vmatmul.mubr.bf16.gmra.mrb[0].mxu0 %v2959
    %v2995 = vpop.f32.mrb[0].mxu0
    %v2996 = vadd.f32 0.0, %v2995
    %v2997 = vpop.f32.mrb[0].mxu0
    %v2998 = vpop.f32.mrb[0].mxu0
    %v2999 = vpop.f32.mrb[0].mxu0
    %3000 = vdwg.mxu0
    %v3001 = vrot.slane %v2942, 7
    %v3002 = vsel %vm888, %v3001, %v2941
    %v3003 = vpack.c.b16 %v3002, %v3002
    %v3008 = vunpack.c.l.b16 %v2930
    %v3009 = vunpack.c.l.b16 %v2931
    %v3010 = vunpack.c.l.b16 %v2932
    %v3011 = vunpack.c.l.b16 %v2933
    %v3012 = vpack.c.b16 %v3009, %v3008
    %v3013 = vpack.c.b16 %v3011, %v3010
    %v3017 = vsel %vm1069, %v3003, 0
    %3019 = vmatprep.subr.bf16.mxu0 0
    %3020 = vmatpush1.bf16.msra.mxu0 %v3012
    %3021 = vmatprep.subr.bf16.mxu0 0
    %3022 = vmatpush1.bf16.msra.mxu0 %v3013
    %3023 = vmatprep.subr.bf16.mxu0 0
    %3024 = vmatpush1.bf16.msra.mxu0 0
    %3025 = vmatprep.subr.bf16.mxu0 0
    %3026 = vmatpush1.bf16.msra.mxu0 0
    %3027 = vmatprep.subr.bf16.mxu0 0
    %3028 = vmatpush1.bf16.msra.mxu0 0
    %3029 = vmatprep.subr.bf16.mxu0 0
    %3030 = vmatpush1.bf16.msra.mxu0 0
    %3031 = vmatprep.subr.bf16.mxu0 0
    %3032 = vmatpush1.bf16.msra.mxu0 0
    %3033 = vmatprep.subr.bf16.mxu0 0
    %3034 = vmatpush1.bf16.msra.mxu0 0
    %3035 = vmatprep.subr.bf16.mxu0 0
    %3036 = vmatpush1.bf16.msra.mxu0 0
    %3037 = vmatprep.subr.bf16.mxu0 0
    %3038 = vmatpush1.bf16.msra.mxu0 0
    %3039 = vmatprep.subr.bf16.mxu0 0
    %3040 = vmatpush1.bf16.msra.mxu0 0
    %3041 = vmatprep.subr.bf16.mxu0 0
    %3042 = vmatpush1.bf16.msra.mxu0 0
    %3043 = vmatprep.subr.bf16.mxu0 0
    %3044 = vmatpush1.bf16.msra.mxu0 0
    %3045 = vmatprep.subr.bf16.mxu0 0
    %3046 = vmatpush1.bf16.msra.mxu0 0
    %3047 = vmatprep.subr.bf16.mxu0 0
    %3048 = vmatpush1.bf16.msra.mxu0 0
    %3049 = vmatprep.subr.bf16.mxu0 0
    %3050 = vmatpush1.bf16.msra.mxu0 0
    %3051 = vmatprep.mubr.bf16.mxu0 0
    %3052 = vmatmul.mubr.bf16.gmra.mrb[0].mxu0 %v3017
    %v3053 = vpop.f32.mrb[0].mxu0
    %v3054 = vadd.f32 %v2996, %v3053
    %v3055 = vpop.f32.mrb[0].mxu0
    %v3056 = vpop.f32.mrb[0].mxu0
    %v3057 = vpop.f32.mrb[0].mxu0
    %3058 = vdwg.mxu0
    %s3059 = scalar_lea.vmem %s23, 32
    %v3060 = vld [vmem:[%s3059] sm:$0xf]
    %v3061 = vld [vmem:[%s3059 + $0x4] sm:$0xf]
    %v3062 = vld [vmem:[%s3059 + $0x8] sm:$0xf]
    %v3063 = vld [vmem:[%s3059 + $0xc] sm:$0xf]
    %v3064 = vrot.slane %v2941, 2
    %v3065 = vrot.slane %v2942, 1
    %v3066 = vsel %vm888, %v3065, %v3064
    %v3067 = vpack.c.b16 %v3066, %v3066
    %v3072 = vunpack.c.l.b16 %v3060
    %v3073 = vunpack.c.l.b16 %v3061
    %v3074 = vunpack.c.l.b16 %v3062
    %v3075 = vunpack.c.l.b16 %v3063
    %v3076 = vpack.c.b16 %v3073, %v3072
    %v3077 = vpack.c.b16 %v3075, %v3074
    %v3081 = vsel %vm1069, %v3067, 0
    %3083 = vmatprep.subr.bf16.mxu0 0
    %3084 = vmatpush1.bf16.msra.mxu0 %v3076
    %3085 = vmatprep.subr.bf16.mxu0 0
    %3086 = vmatpush1.bf16.msra.mxu0 %v3077
    %3087 = vmatprep.subr.bf16.mxu0 0
    %3088 = vmatpush1.bf16.msra.mxu0 0
    %3089 = vmatprep.subr.bf16.mxu0 0
    %3090 = vmatpush1.bf16.msra.mxu0 0
    %3091 = vmatprep.subr.bf16.mxu0 0
    %3092 = vmatpush1.bf16.msra.mxu0 0
    %3093 = vmatprep.subr.bf16.mxu0 0
    %3094 = vmatpush1.bf16.msra.mxu0 0
    %3095 = vmatprep.subr.bf16.mxu0 0
    %3096 = vmatpush1.bf16.msra.mxu0 0
    %3097 = vmatprep.subr.bf16.mxu0 0
    %3098 = vmatpush1.bf16.msra.mxu0 0
    %3099 = vmatprep.subr.bf16.mxu0 0
    %3100 = vmatpush1.bf16.msra.mxu0 0
    %3101 = vmatprep.subr.bf16.mxu0 0
    %3102 = vmatpush1.bf16.msra.mxu0 0
    %3103 = vmatprep.subr.bf16.mxu0 0
    %3104 = vmatpush1.bf16.msra.mxu0 0
    %3105 = vmatprep.subr.bf16.mxu0 0
    %3106 = vmatpush1.bf16.msra.mxu0 0
    %3107 = vmatprep.subr.bf16.mxu0 0
    %3108 = vmatpush1.bf16.msra.mxu0 0
    %3109 = vmatprep.subr.bf16.mxu0 0
    %3110 = vmatpush1.bf16.msra.mxu0 0
    %3111 = vmatprep.subr.bf16.mxu0 0
    %3112 = vmatpush1.bf16.msra.mxu0 0
    %3113 = vmatprep.subr.bf16.mxu0 0
    %3114 = vmatpush1.bf16.msra.mxu0 0
    %3115 = vmatprep.mubr.bf16.mxu0 0
    %3116 = vmatmul.mubr.bf16.gmra.mrb[0].mxu0 %v3081
    %v3117 = vpop.f32.mrb[0].mxu0
    %v3118 = vadd.f32 0.0, %v3117
    %v3119 = vpop.f32.mrb[0].mxu0
    %v3120 = vpop.f32.mrb[0].mxu0
    %v3121 = vpop.f32.mrb[0].mxu0
    %3122 = vdwg.mxu0
    %v3123 = vadd.f32 %v3054, %v3118
    %s3124 = scalar_lea.vmem %s23, 48
    %v3125 = vld [vmem:[%s3124] sm:$0xf]
    %v3126 = vld [vmem:[%s3124 + $0x4] sm:$0xf]
    %v3127 = vld [vmem:[%s3124 + $0x8] sm:$0xf]
    %v3128 = vld [vmem:[%s3124 + $0xc] sm:$0xf]
    %v3129 = vrot.slane %v2941, 3
    %v3130 = vrot.slane %v2942, 2
    %v3131 = vsel %vm888, %v3130, %v3129
    %v3132 = vpack.c.b16 %v3131, %v3131
    %v3137 = vunpack.c.l.b16 %v3125
    %v3138 = vunpack.c.l.b16 %v3126
    %v3139 = vunpack.c.l.b16 %v3127
    %v3140 = vunpack.c.l.b16 %v3128
    %v3141 = vpack.c.b16 %v3138, %v3137
    %v3142 = vpack.c.b16 %v3140, %v3139
    %v3146 = vsel %vm1069, %v3132, 0
    %3148 = vmatprep.subr.bf16.mxu0 0
    %3149 = vmatpush1.bf16.msra.mxu0 %v3141
    %3150 = vmatprep.subr.bf16.mxu0 0
    %3151 = vmatpush1.bf16.msra.mxu0 %v3142
    %3152 = vmatprep.subr.bf16.mxu0 0
    %3153 = vmatpush1.bf16.msra.mxu0 0
    %3154 = vmatprep.subr.bf16.mxu0 0
    %3155 = vmatpush1.bf16.msra.mxu0 0
    %3156 = vmatprep.subr.bf16.mxu0 0
    %3157 = vmatpush1.bf16.msra.mxu0 0
    %3158 = vmatprep.subr.bf16.mxu0 0
    %3159 = vmatpush1.bf16.msra.mxu0 0
    %3160 = vmatprep.subr.bf16.mxu0 0
    %3161 = vmatpush1.bf16.msra.mxu0 0
    %3162 = vmatprep.subr.bf16.mxu0 0
    %3163 = vmatpush1.bf16.msra.mxu0 0
    %3164 = vmatprep.subr.bf16.mxu0 0
    %3165 = vmatpush1.bf16.msra.mxu0 0
    %3166 = vmatprep.subr.bf16.mxu0 0
    %3167 = vmatpush1.bf16.msra.mxu0 0
    %3168 = vmatprep.subr.bf16.mxu0 0
    %3169 = vmatpush1.bf16.msra.mxu0 0
    %3170 = vmatprep.subr.bf16.mxu0 0
    %3171 = vmatpush1.bf16.msra.mxu0 0
    %3172 = vmatprep.subr.bf16.mxu0 0
    %3173 = vmatpush1.bf16.msra.mxu0 0
    %3174 = vmatprep.subr.bf16.mxu0 0
    %3175 = vmatpush1.bf16.msra.mxu0 0
    %3176 = vmatprep.subr.bf16.mxu0 0
    %3177 = vmatpush1.bf16.msra.mxu0 0
    %3178 = vmatprep.subr.bf16.mxu0 0
    %3179 = vmatpush1.bf16.msra.mxu0 0
    %3180 = vmatprep.mubr.bf16.mxu0 0
    %3181 = vmatmul.mubr.bf16.gmra.mrb[0].mxu0 %v3146
    %v3182 = vpop.f32.mrb[0].mxu0
    %v3183 = vadd.f32 0.0, %v3182
    %v3184 = vpop.f32.mrb[0].mxu0
    %v3185 = vpop.f32.mrb[0].mxu0
    %v3186 = vpop.f32.mrb[0].mxu0
    %3187 = vdwg.mxu0
    %v3188 = vadd.f32 %v3123, %v3183
    %v3189 = vld [vmem:[%s24] sm:$0x1]
    %v3191 = vlaneseq
    %v3192 = vshrl.u32 %v3191, 7
    %v3193 = vsub.s32 0, %v3192
    %v3194 = vrot.slane %v3189, %v3193
    %v3196 = vadd.f32 %v3188, %v3194
    %v3197 = vxor.u32 %v3196, 2147483648
    %v3198 = vmul.f32 %v3197, 1.442695
    %v3199 = vpow.pop %v3198
    %v3200 = vadd.f32 %v3199, 1.0
    %v3201 = vrcp.pop %v3200
    %v3202 = vmul.f32 1.0, %v3201
    %3203 = vst [vmem:[#allocation5] sm:$0x3] %v3202
    %3204 = vst [vmem:[#allocation7] sm:$0xff] %v2922
    // Predicated region
    $region165: #{tpu_custom_call.1} parent=1 // pred_check
      _
    $region166: #{tpu_custom_call.1} parent=1 // pred_check_branch
      %3206 = sbr.rel (0) target = $region168
    $region167: #{tpu_custom_call.1} parent=1 // pred_region
      %s3208 = ssub.s32 32, 32
      %3209 = vsyncadd [#allocation6], %s3208
      %s3211 = sshll.u32 [#allocation5], 4
      %s3212 = int_to_ptr.vmem [resolvable:$true] %s3211
      %3214 = dma.vmem_to_hbm [thread:$0]  %s3212, 32, %s25, [#allocation6]
    $region168: #{tpu_custom_call.1} parent=1 // pred_fallthru
      _
    // Predicated region
    $region169: #{tpu_custom_call.1} parent=1 // pred_check
      _
    $region170: #{tpu_custom_call.1} parent=1 // pred_check_branch
      %3216 = sbr.rel (0) target = $region172
    $region171: #{tpu_custom_call.1} parent=1 // pred_region
      %s3218 = ssub.s32 128, 128
      %3219 = vsyncadd [#allocation8], %s3218
      %s3221 = sshll.u32 [#allocation7], 4
      %s3222 = int_to_ptr.vmem [resolvable:$true] %s3221
      %3224 = dma.vmem_to_hbm [thread:$0]  %s3222, 128, %s26, [#allocation8]
    $region172: #{tpu_custom_call.1} parent=1 // pred_fallthru
      _
    // Predicated region
    $region173: #{tpu_custom_call.1} parent=1 // pred_check
      _
    $region174: #{tpu_custom_call.1} parent=1 // pred_check_branch
      %3226 = sbr.rel (0) target = $region176
    $region175: #{tpu_custom_call.1} parent=1 // pred_region
      %3227 = dma.done [#allocation6], 32
    $region176: #{tpu_custom_call.1} parent=1 // pred_fallthru
      _
    // Predicated region
    $region177: #{tpu_custom_call.1} parent=1 // pred_check
      _
    $region178: #{tpu_custom_call.1} parent=1 // pred_check_branch
      %3229 = sbr.rel (0) target = $region180
    $region179: #{tpu_custom_call.1} parent=1 // pred_region
      %3230 = dma.done [#allocation8], 128
    $region180: #{tpu_custom_call.1} parent=1 // pred_fallthru
      _
    %3231 = vsyncpa [#allocation6], 1
    %3232 = vsyncpa [#allocation8], 1
  %3233 = vsyncmov [#allocation4]
  %s3234 = vpop.sfrf %3233
  %p3235 = scmp.eq.s32.totalorder %s3234, 0
  %p3236 = pneg %p3235
  %3238 = shalt.err (%p3236)
  %s3239 = scalar_lea.sflag [#allocation4], 1
  %3240 = vsyncmov %s3239
  %s3241 = vpop.sfrf %3240
  %p3242 = scmp.eq.s32.totalorder %s3241, 0
  %p3243 = pneg %p3242
  %3245 = shalt.err (%p3243)

</llo_original>
